<compile_context>
chip_gen: v7x
topology: tpu7x:2x2x1
jax: 0.10.0
libtpu: 0.0.40
codegen_flags: <defaults>
</compile_context>

<pallas_src>
import jax
import jax.numpy as jnp
from jax.experimental import pallas as pl
from jax.experimental.pallas import tpu as pltpu

HIDDEN = 1024


def clulayer_kernel(x_ref, w1_ref, w2_hbm_ref, w3_ref, bn12_ref, bn3_ref,
                    o_ref, w2_vmem, w2_sem):
    eps = jnp.float32(1e-5)

    # Kick off the big w2 fetch immediately; it overlaps layer-1 compute below.
    w2_copy = pltpu.make_async_copy(w2_hbm_ref, w2_vmem, w2_sem)
    w2_copy.start()

    def batch_norm(h, g, be):
        # training-mode BatchNorm1d folded into a single scale/shift FMA
        mean = jnp.mean(h, axis=0, keepdims=True)
        hc = h - mean
        var = jnp.mean(hc * hc, axis=0, keepdims=True)
        scale = g * jax.lax.rsqrt(var + eps)
        shift = be - mean * scale
        return h * scale + shift

    def leaky_relu(h):
        # slope 0.2 > 0  ->  max(h, 0.2*h) == LeakyReLU(0.2)
        return jnp.maximum(h, jnp.float32(0.2) * h)

    bn12 = bn12_ref[...]                       # (4, 1024) f32: [g1; be1; g2; be2]
    g1, be1 = bn12[0:1, :], bn12[1:2, :]
    g2, be2 = bn12[2:3, :], bn12[3:4, :]
    bn3 = bn3_ref[...]                         # (2, out_dim) f32: [g3/t; be3/t]
    g3, be3 = bn3[0:1, :], bn3[1:2, :]

    # Layer 1: Linear(common_dim, 1024) -> BN -> LeakyReLU(0.2)   (bias cancelled by BN)
    h = jnp.dot(x_ref[...], w1_ref[...], preferred_element_type=jnp.float32)
    h = leaky_relu(batch_norm(h, g1, be1))

    # Layer 2: Linear(1024, 1024) -> BN -> LeakyReLU(0.2)
    w2_copy.wait()                             # w2 now resident in VMEM
    h = jnp.dot(h.astype(jnp.bfloat16), w2_vmem[...], preferred_element_type=jnp.float32)
    h = leaky_relu(batch_norm(h, g2, be2))

    # Layer 3: Linear(1024, out_dim) -> BN (1/t pre-folded into g3/be3)
    h = jnp.dot(h.astype(jnp.bfloat16), w3_ref[...], preferred_element_type=jnp.float32)
    h = batch_norm(h, g3, be3)

    # softmax over the feature dim
    h = h - jnp.max(h, axis=1, keepdims=True)
    e = jnp.exp(h)
    o_ref[...] = e * pl.reciprocal(jnp.sum(e, axis=1, keepdims=True), approx=True)


def make_clulayer_params(key, common_dim, out_dim, hidden=HIDDEN):
    """Deterministic init mirroring initialize_weights: Linear weights ~ xavier_normal,
    biases zero (hence omitted); BN gamma=1, beta=0."""
    k1, k2, k3 = jax.random.split(key, 3)

    def xavier(k, fan_in, fan_out):
        std = (2.0 / (fan_in + fan_out)) ** 0.5
        return jax.random.normal(k, (fan_in, fan_out), jnp.float32) * std

    return dict(
        w1=xavier(k1, common_dim, hidden),
        g1=jnp.ones((1, hidden), jnp.float32), be1=jnp.zeros((1, hidden), jnp.float32),
        w2=xavier(k2, hidden, hidden),
        g2=jnp.ones((1, hidden), jnp.float32), be2=jnp.zeros((1, hidden), jnp.float32),
        w3=xavier(k3, hidden, out_dim),
        g3=jnp.ones((1, out_dim), jnp.float32), be3=jnp.zeros((1, out_dim), jnp.float32),
    )


def prepare_clulayer_params(params, t=1.0):
    """One-time weight packing: bf16 casts + BN-vector consolidation + 1/t fold.
    Do this once (outside the hot path) and reuse the result every call."""
    inv_t = jnp.float32(1.0 / t)
    return dict(
        w1=params["w1"].astype(jnp.bfloat16),
        w2=params["w2"].astype(jnp.bfloat16),
        w3=params["w3"].astype(jnp.bfloat16),
        # (4, 1024) f32: [g1; be1; g2; be2]
        bn12=jnp.concatenate(
            [params["g1"], params["be1"], params["g2"], params["be2"]], axis=0),
        # (2, out_dim) f32: [g3/t; be3/t]  -- exact fold of the /t temperature
        bn3=jnp.concatenate([params["g3"] * inv_t, params["be3"] * inv_t], axis=0),
    )


def clulayer_forward(x, prepared):
    B, common_dim = x.shape
    hidden = prepared["w2"].shape[0]
    out_dim = prepared["w3"].shape[1]

    x_bf = x.astype(jnp.bfloat16)

    vmem = pl.BlockSpec(memory_space=pltpu.VMEM)
    hbm = pl.BlockSpec(memory_space=pl.ANY)     # w2 stays in HBM; kernel DMAs it manually

    nbytes = lambda a: a.size * a.dtype.itemsize
    out_bytes = B * out_dim * 4
    cost = pl.CostEstimate(
        flops=2 * B * (common_dim * hidden + hidden * hidden + hidden * out_dim),
        transcendentals=B * out_dim + 2 * hidden + out_dim,   # exp + per-feature rsqrt
        bytes_accessed=(nbytes(x_bf) + nbytes(prepared["w1"]) + nbytes(prepared["w2"])
                        + nbytes(prepared["w3"]) + nbytes(prepared["bn12"])
                        + nbytes(prepared["bn3"]) + out_bytes),
    )

    return pl.pallas_call(
        clulayer_kernel,
        out_shape=jax.ShapeDtypeStruct((B, out_dim), jnp.float32),
        in_specs=[vmem, vmem, hbm, vmem, vmem, vmem],
        out_specs=vmem,
        scratch_shapes=[
            pltpu.VMEM((hidden, hidden), jnp.bfloat16),   # w2 landing buffer
            pltpu.SemaphoreType.DMA(()),
        ],
        compiler_params=pltpu.CompilerParams(vmem_limit_bytes=8 << 20),
        cost_estimate=cost,
    )(x_bf, prepared["w1"], prepared["w2"], prepared["w3"],
      prepared["bn12"], prepared["bn3"])


def clulayer_reference(x, params, t=1.0):
    """Pure-JAX mirror of the kernel math (bf16 weights/activations, f32 BN/softmax)."""
    eps = jnp.float32(1e-5)

    def bn(h, g, be):
        mean = jnp.mean(h, axis=0, keepdims=True)
        var = jnp.mean((h - mean) ** 2, axis=0, keepdims=True)
        return (h - mean) * jax.lax.rsqrt(var + eps) * g + be

    def lrelu(h):
        return jnp.maximum(h, 0.2 * h)

    h = jnp.dot(x.astype(jnp.bfloat16), params["w1"].astype(jnp.bfloat16),
                preferred_element_type=jnp.float32)
    h = lrelu(bn(h, params["g1"], params["be1"]))
    h = jnp.dot(h.astype(jnp.bfloat16), params["w2"].astype(jnp.bfloat16),
                preferred_element_type=jnp.float32)
    h = lrelu(bn(h, params["g2"], params["be2"]))
    h = jnp.dot(h.astype(jnp.bfloat16), params["w3"].astype(jnp.bfloat16),
                preferred_element_type=jnp.float32)
    h = bn(h, params["g3"], params["be3"])
    h = h / t
    return jax.nn.softmax(h, axis=1)


if __name__ == "__main__":
    B = 8            # batch size (BatchNorm needs B > 1 in training mode)
    COMMON_DIM = 32  # input feature dim
    OUT_DIM = 16     # number of clusters / output dim
    T = 1.0

    key = jax.random.PRNGKey(0)
    kx, kp = jax.random.split(key)
    x = jax.random.normal(kx, (B, COMMON_DIM), jnp.float32)
    params = make_clulayer_params(kp, COMMON_DIM, OUT_DIM)

    # one-time param packing (bf16 casts, BN consolidation, 1/t fold) — cached, not per-call
    prepared = jax.tree_util.tree_map(jax.block_until_ready,
                                      prepare_clulayer_params(params, t=T))

    out = clulayer_forward(x, prepared)
    out = jax.block_until_ready(out)

    # sanity: shape, softmax rows sum to ~1 (approx reciprocal in the kernel), matches reference
    assert out.shape == (B, OUT_DIM)
    assert jnp.allclose(jnp.sum(out, axis=1), 1.0, atol=5e-3)
    ref = clulayer_reference(x, params, t=T)
    assert jnp.allclose(out, ref, atol=5e-3)

    print("KERNEL_OK")
</pallas_src>

<mosaic_0001>
module attributes {stable_mosaic.version = 11 : i64} {
  func.func @clulayer_kernel(%arg0: memref<8x32xbf16, #tpu.memory_space<vmem>>, %arg1: memref<32x1024xbf16, #tpu.memory_space<vmem>>, %arg2: memref<1024x1024xbf16, #tpu.memory_space<any>>, %arg3: memref<1024x16xbf16, #tpu.memory_space<vmem>>, %arg4: memref<4x1024xf32, #tpu.memory_space<vmem>>, %arg5: memref<2x16xf32, #tpu.memory_space<vmem>>, %arg6: memref<8x16xf32, #tpu.memory_space<vmem>>, %arg7: memref<1024x1024xbf16, #tpu.memory_space<vmem>>, %arg8: memref<!tpu.dma_semaphore, #tpu.memory_space<semaphore_mem>>) attributes {dimension_semantics = [], scalar_prefetch = 0 : i64, scratch_operands = 2 : i64, tpu.core_type = #tpu.core_type<tc>} {
    tpu.enqueue_dma source(%arg2 : memref<1024x1024xbf16, #tpu.memory_space<any>>) target(%arg7 : memref<1024x1024xbf16, #tpu.memory_space<vmem>>) target_semaphore(%arg8 : memref<!tpu.dma_semaphore, #tpu.memory_space<semaphore_mem>>)
    %c0 = arith.constant 0 : index
    %c0_0 = arith.constant 0 : index
    %0 = vector.load %arg4[%c0, %c0_0] : memref<4x1024xf32, #tpu.memory_space<vmem>>, vector<4x1024xf32>
    %1 = vector.extract_strided_slice %0 {offsets = [0, 0], sizes = [1, 1024], strides = [1, 1]} : vector<4x1024xf32> to vector<1x1024xf32>
    %2 = vector.extract_strided_slice %0 {offsets = [1, 0], sizes = [1, 1024], strides = [1, 1]} : vector<4x1024xf32> to vector<1x1024xf32>
    %3 = vector.extract_strided_slice %0 {offsets = [2, 0], sizes = [1, 1024], strides = [1, 1]} : vector<4x1024xf32> to vector<1x1024xf32>
    %4 = vector.extract_strided_slice %0 {offsets = [3, 0], sizes = [1, 1024], strides = [1, 1]} : vector<4x1024xf32> to vector<1x1024xf32>
    %c0_1 = arith.constant 0 : index
    %c0_2 = arith.constant 0 : index
    %5 = vector.load %arg5[%c0_1, %c0_2] : memref<2x16xf32, #tpu.memory_space<vmem>>, vector<2x16xf32>
    %6 = vector.extract_strided_slice %5 {offsets = [0, 0], sizes = [1, 16], strides = [1, 1]} : vector<2x16xf32> to vector<1x16xf32>
    %7 = vector.extract_strided_slice %5 {offsets = [1, 0], sizes = [1, 16], strides = [1, 1]} : vector<2x16xf32> to vector<1x16xf32>
    %c0_3 = arith.constant 0 : index
    %c0_4 = arith.constant 0 : index
    %8 = vector.load %arg0[%c0_3, %c0_4] : memref<8x32xbf16, #tpu.memory_space<vmem>>, vector<8x32xbf16>
    %c0_5 = arith.constant 0 : index
    %c0_6 = arith.constant 0 : index
    %9 = vector.load %arg1[%c0_5, %c0_6] : memref<32x1024xbf16, #tpu.memory_space<vmem>>, vector<32x1024xbf16>
    %cst = arith.constant dense<0.000000e+00> : vector<8x1024xf32>
    %10 = tpu.matmul %8, %9, %cst {dimension_numbers = #tpu.dot_dimension_numbers<[1], [0], [0], [1], [0, 0, 1, 1], [], []>} : vector<8x32xbf16>, vector<32x1024xbf16>, vector<8x1024xf32> -> vector<8x1024xf32>
    %cst_7 = arith.constant dense<0.000000e+00> : vector<1024xf32>
    %11 = vector.multi_reduction <add>, %10, %cst_7 [0] : vector<8x1024xf32> to vector<1024xf32>
    %12 = vector.shape_cast %11 : vector<1024xf32> to vector<1x1024xf32>
    %cst_8 = arith.constant 8.000000e+00 : f32
    %13 = vector.broadcast %cst_8 : f32 to vector<1x1024xf32>
    %14 = arith.divf %12, %13 : vector<1x1024xf32>
    %15 = vector.broadcast %14 : vector<1x1024xf32> to vector<8x1024xf32>
    %16 = arith.subf %10, %15 : vector<8x1024xf32>
    %17 = arith.mulf %16, %16 : vector<8x1024xf32>
    %cst_9 = arith.constant dense<0.000000e+00> : vector<1024xf32>
    %18 = vector.multi_reduction <add>, %17, %cst_9 [0] : vector<8x1024xf32> to vector<1024xf32>
    %19 = vector.shape_cast %18 : vector<1024xf32> to vector<1x1024xf32>
    %cst_10 = arith.constant 8.000000e+00 : f32
    %20 = vector.broadcast %cst_10 : f32 to vector<1x1024xf32>
    %21 = arith.divf %19, %20 : vector<1x1024xf32>
    %cst_11 = arith.constant 9.99999974E-6 : f32
    %22 = vector.broadcast %cst_11 : f32 to vector<1x1024xf32>
    %23 = arith.addf %21, %22 : vector<1x1024xf32>
    %24 = math.rsqrt %23 : vector<1x1024xf32>
    %25 = arith.mulf %1, %24 : vector<1x1024xf32>
    %26 = arith.mulf %14, %25 : vector<1x1024xf32>
    %27 = arith.subf %2, %26 : vector<1x1024xf32>
    %28 = vector.broadcast %25 : vector<1x1024xf32> to vector<8x1024xf32>
    %29 = arith.mulf %10, %28 : vector<8x1024xf32>
    %30 = vector.broadcast %27 : vector<1x1024xf32> to vector<8x1024xf32>
    %31 = arith.addf %29, %30 : vector<8x1024xf32>
    %cst_12 = arith.constant 2.000000e-01 : f32
    %32 = vector.broadcast %cst_12 : f32 to vector<8x1024xf32>
    %33 = arith.mulf %32, %31 : vector<8x1024xf32>
    %34 = arith.maximumf %31, %33 : vector<8x1024xf32>
    tpu.wait_dma2 semaphore(%arg8 : memref<!tpu.dma_semaphore, #tpu.memory_space<semaphore_mem>>) src(%arg2 : memref<1024x1024xbf16, #tpu.memory_space<any>>) dst(%arg7 : memref<1024x1024xbf16, #tpu.memory_space<vmem>>)
    %35 = arith.truncf %34 : vector<8x1024xf32> to vector<8x1024xbf16>
    %c0_13 = arith.constant 0 : index
    %c0_14 = arith.constant 0 : index
    %36 = vector.load %arg7[%c0_13, %c0_14] : memref<1024x1024xbf16, #tpu.memory_space<vmem>>, vector<1024x1024xbf16>
    %cst_15 = arith.constant dense<0.000000e+00> : vector<8x1024xf32>
    %37 = tpu.matmul %35, %36, %cst_15 {dimension_numbers = #tpu.dot_dimension_numbers<[1], [0], [0], [1], [0, 0, 1, 1], [], []>} : vector<8x1024xbf16>, vector<1024x1024xbf16>, vector<8x1024xf32> -> vector<8x1024xf32>
    %cst_16 = arith.constant dense<0.000000e+00> : vector<1024xf32>
    %38 = vector.multi_reduction <add>, %37, %cst_16 [0] : vector<8x1024xf32> to vector<1024xf32>
    %39 = vector.shape_cast %38 : vector<1024xf32> to vector<1x1024xf32>
    %cst_17 = arith.constant 8.000000e+00 : f32
    %40 = vector.broadcast %cst_17 : f32 to vector<1x1024xf32>
    %41 = arith.divf %39, %40 : vector<1x1024xf32>
    %42 = vector.broadcast %41 : vector<1x1024xf32> to vector<8x1024xf32>
    %43 = arith.subf %37, %42 : vector<8x1024xf32>
    %44 = arith.mulf %43, %43 : vector<8x1024xf32>
    %cst_18 = arith.constant dense<0.000000e+00> : vector<1024xf32>
    %45 = vector.multi_reduction <add>, %44, %cst_18 [0] : vector<8x1024xf32> to vector<1024xf32>
    %46 = vector.shape_cast %45 : vector<1024xf32> to vector<1x1024xf32>
    %cst_19 = arith.constant 8.000000e+00 : f32
    %47 = vector.broadcast %cst_19 : f32 to vector<1x1024xf32>
    %48 = arith.divf %46, %47 : vector<1x1024xf32>
    %cst_20 = arith.constant 9.99999974E-6 : f32
    %49 = vector.broadcast %cst_20 : f32 to vector<1x1024xf32>
    %50 = arith.addf %48, %49 : vector<1x1024xf32>
    %51 = math.rsqrt %50 : vector<1x1024xf32>
    %52 = arith.mulf %3, %51 : vector<1x1024xf32>
    %53 = arith.mulf %41, %52 : vector<1x1024xf32>
    %54 = arith.subf %4, %53 : vector<1x1024xf32>
    %55 = vector.broadcast %52 : vector<1x1024xf32> to vector<8x1024xf32>
    %56 = arith.mulf %37, %55 : vector<8x1024xf32>
    %57 = vector.broadcast %54 : vector<1x1024xf32> to vector<8x1024xf32>
    %58 = arith.addf %56, %57 : vector<8x1024xf32>
    %cst_21 = arith.constant 2.000000e-01 : f32
    %59 = vector.broadcast %cst_21 : f32 to vector<8x1024xf32>
    %60 = arith.mulf %59, %58 : vector<8x1024xf32>
    %61 = arith.maximumf %58, %60 : vector<8x1024xf32>
    %62 = arith.truncf %61 : vector<8x1024xf32> to vector<8x1024xbf16>
    %c0_22 = arith.constant 0 : index
    %c0_23 = arith.constant 0 : index
    %63 = vector.load %arg3[%c0_22, %c0_23] : memref<1024x16xbf16, #tpu.memory_space<vmem>>, vector<1024x16xbf16>
    %cst_24 = arith.constant dense<0.000000e+00> : vector<8x16xf32>
    %64 = tpu.matmul %62, %63, %cst_24 {dimension_numbers = #tpu.dot_dimension_numbers<[1], [0], [0], [1], [0, 0, 1, 1], [], []>} : vector<8x1024xbf16>, vector<1024x16xbf16>, vector<8x16xf32> -> vector<8x16xf32>
    %cst_25 = arith.constant dense<0.000000e+00> : vector<16xf32>
    %65 = vector.multi_reduction <add>, %64, %cst_25 [0] : vector<8x16xf32> to vector<16xf32>
    %66 = vector.shape_cast %65 : vector<16xf32> to vector<1x16xf32>
    %cst_26 = arith.constant 8.000000e+00 : f32
    %67 = vector.broadcast %cst_26 : f32 to vector<1x16xf32>
    %68 = arith.divf %66, %67 : vector<1x16xf32>
    %69 = vector.broadcast %68 : vector<1x16xf32> to vector<8x16xf32>
    %70 = arith.subf %64, %69 : vector<8x16xf32>
    %71 = arith.mulf %70, %70 : vector<8x16xf32>
    %cst_27 = arith.constant dense<0.000000e+00> : vector<16xf32>
    %72 = vector.multi_reduction <add>, %71, %cst_27 [0] : vector<8x16xf32> to vector<16xf32>
    %73 = vector.shape_cast %72 : vector<16xf32> to vector<1x16xf32>
    %cst_28 = arith.constant 8.000000e+00 : f32
    %74 = vector.broadcast %cst_28 : f32 to vector<1x16xf32>
    %75 = arith.divf %73, %74 : vector<1x16xf32>
    %cst_29 = arith.constant 9.99999974E-6 : f32
    %76 = vector.broadcast %cst_29 : f32 to vector<1x16xf32>
    %77 = arith.addf %75, %76 : vector<1x16xf32>
    %78 = math.rsqrt %77 : vector<1x16xf32>
    %79 = arith.mulf %6, %78 : vector<1x16xf32>
    %80 = arith.mulf %68, %79 : vector<1x16xf32>
    %81 = arith.subf %7, %80 : vector<1x16xf32>
    %82 = vector.broadcast %79 : vector<1x16xf32> to vector<8x16xf32>
    %83 = arith.mulf %64, %82 : vector<8x16xf32>
    %84 = vector.broadcast %81 : vector<1x16xf32> to vector<8x16xf32>
    %85 = arith.addf %83, %84 : vector<8x16xf32>
    %cst_30 = arith.constant dense<0xFF800000> : vector<8xf32>
    %86 = vector.multi_reduction <maximumf>, %85, %cst_30 [1] : vector<8x16xf32> to vector<8xf32>
    %87 = vector.shape_cast %86 : vector<8xf32> to vector<8x1xf32>
    %88 = vector.broadcast %87 : vector<8x1xf32> to vector<8x16xf32>
    %89 = arith.subf %85, %88 : vector<8x16xf32>
    %90 = math.exp %89 : vector<8x16xf32>
    %cst_31 = arith.constant dense<0.000000e+00> : vector<8xf32>
    %91 = vector.multi_reduction <add>, %90, %cst_31 [1] : vector<8x16xf32> to vector<8xf32>
    %92 = vector.shape_cast %91 : vector<8xf32> to vector<8x1xf32>
    %93 = tpu.reciprocal %92 {approx = true} : vector<8x1xf32> -> vector<8x1xf32>
    %94 = vector.broadcast %93 : vector<8x1xf32> to vector<8x16xf32>
    %95 = arith.mulf %90, %94 : vector<8x16xf32>
    %c0_32 = arith.constant 0 : index
    %c0_33 = arith.constant 0 : index
    %96 = vector.load %arg6[%c0_32, %c0_33] : memref<8x16xf32, #tpu.memory_space<vmem>>, vector<8x16xf32>
    tpu.vector_store %arg6[%c0_32, %c0_33], %95 {strides = array<i32>} : memref<8x16xf32, #tpu.memory_space<vmem>>, vector<8x16xf32>,
    return
  }
}

</mosaic_0001>

<llo_original>
// kernel: tpu_custom_call.1
$region0: #{tpu_custom_call.1}
  #allocation0 [shape = 'u32[]', space=smem, size = 0x4, offset = 0x4, fixed_abs, tag = 'smem constant byte address 0x4 - core index']
  #allocation1 [shape = 'u32[144,128]{1,0:T(1,128)}', space=vmem, size = 0x12000, scoped, tag = 'internal scratch']
  #allocation2 [shape = 'bf16[1024,1024]{1,0:T(16,128)(2,1)}', space=vmem, size = 0x200000, scoped, tag = 'scratch operand']
  #allocation3 [shape = 's32[1]{0}', space=sflag, size = 0x4, scoped, tag = 'scratch operand']
  #allocation13 [shape = 's32[]', space=sflag, size = 0x4, offset = 0, fixed_abs, tag = 'sflag constant byte address 0x0 - dummy sync flag']
  %s0 = inlined_call_operand.hbm [shape: bf16[8,32], index: 0, kind: input, shape index: {}]
  %s1 = inlined_call_operand.hbm [shape: bf16[32,1024], index: 1, kind: input, shape index: {}]
  %s2 = inlined_call_operand.hbm [shape: bf16[1024,1024], index: 2, kind: input, shape index: {}]
  %s3 = inlined_call_operand.vmem [shape: bf16[1024,16], index: 3, kind: input, shape index: {}]
  %s4 = inlined_call_operand.hbm [shape: f32[4,1024], index: 4, kind: input, shape index: {}]
  %s5 = inlined_call_operand.hbm [shape: f32[2,16], index: 5, kind: input, shape index: {}]
  %s6 = inlined_call_operand.hbm [shape: f32[8,16], index: 6, kind: output, shape index: {}]
  %s7 = sld [smem:[#allocation0]]
  $region46: #{tpu_custom_call.1} parent=0
    _
  %s9 = ssub.s32 1, %s7
  %s10 = scalar_select 0, %s9, %s7
  $region1: #{tpu_custom_call.1} parent=0
    #allocation4 [shape = 'u8[2048]{0}', space=vmem, size = 0x800, scoped, tag = 'input window, operand 0, single buffered']
    #allocation5 [shape = 's32[1]{0}', space=sflag, size = 0x4, scoped, tag = 'scoped memory for tpu_custom_call.1']
    #allocation6 [shape = 's32[1]{0}', space=sflag, size = 0x4, scoped, tag = 'scoped memory for tpu_custom_call.1']
    #allocation7 [shape = 'u8[65536]{0}', space=vmem, size = 0x10000, scoped, tag = 'input window, operand 1, single buffered']
    #allocation8 [shape = 's32[1]{0}', space=sflag, size = 0x4, scoped, tag = 'scoped memory for tpu_custom_call.1']
    #allocation9 [shape = 'u8[16384]{0}', space=vmem, size = 0x4000, scoped, tag = 'input window, operand 4, single buffered']
    #allocation10 [shape = 'u8[1024]{0}', space=vmem, size = 0x400, scoped, tag = 'input window, operand 5, single buffered']
    #allocation11 [shape = 's32[1]{0}', space=sflag, size = 0x4, scoped, tag = 'scoped memory for tpu_custom_call.1']
    #allocation12 [shape = 'u8[4096]{0}', space=vmem, size = 0x1000, scoped, tag = 'output window, operand 0, single buffered']
    #allocation14 [shape = 'u32[9]{0}', space=smem, size = 0x24, scoped, tag = 'DMA stride descriptor']
    %11 = vsyncpa [#allocation5], 0
    %12 = vsyncpa [#allocation8], 0
    %13 = vsyncpa [#allocation11], 0
    %14 = vsyncpa [#allocation6], 0
    // Predicated region
    $region2: #{tpu_custom_call.1} parent=1 // pred_check
      _
    $region3: #{tpu_custom_call.1} parent=1 // pred_check_branch
      %16 = sbr.rel (0) target = $region5
    $region4: #{tpu_custom_call.1} parent=1 // pred_region
      %s18 = ssub.s32 64, 64
      %19 = vsyncadd [#allocation5], %s18
      %s21 = sshll.u32 [#allocation4], 4
      %s22 = int_to_ptr.vmem [resolvable:$true] %s21
      %24 = dma.hbm_to_vmem [thread:$0]  %s0, 64, %s22, [#allocation5]
    $region5: #{tpu_custom_call.1} parent=1 // pred_fallthru
      _
    // Predicated region
    $region6: #{tpu_custom_call.1} parent=1 // pred_check
      _
    $region7: #{tpu_custom_call.1} parent=1 // pred_check_branch
      %26 = sbr.rel (0) target = $region9
    $region8: #{tpu_custom_call.1} parent=1 // pred_region
      %s28 = ssub.s32 2048, 2048
      %29 = vsyncadd [#allocation8], %s28
      %s30 = sshll.u32 [#allocation7], 4
      %s31 = int_to_ptr.vmem [resolvable:$true] %s30
      %36 = dma.hbm_to_vmem [thread:$0]  %s1, 2048, %s31, [#allocation8], 512, 512, 32
    $region9: #{tpu_custom_call.1} parent=1 // pred_fallthru
      _
    // Predicated region
    $region10: #{tpu_custom_call.1} parent=1 // pred_check
      _
    $region11: #{tpu_custom_call.1} parent=1 // pred_check_branch
      %38 = sbr.rel (0) target = $region13
    $region12: #{tpu_custom_call.1} parent=1 // pred_region
      _
    $region13: #{tpu_custom_call.1} parent=1 // pred_fallthru
      _
    // Predicated region
    $region14: #{tpu_custom_call.1} parent=1 // pred_check
      _
    $region15: #{tpu_custom_call.1} parent=1 // pred_check_branch
      %40 = sbr.rel (0) target = $region17
    $region16: #{tpu_custom_call.1} parent=1 // pred_region
      %s42 = ssub.s32 512, 512
      %43 = vsyncadd [#allocation8], %s42
      %s45 = sshll.u32 [#allocation9], 4
      %s46 = int_to_ptr.vmem [resolvable:$true] %s45
      %48 = dma.hbm_to_vmem [thread:$0]  %s4, 512, %s46, [#allocation8]
    $region17: #{tpu_custom_call.1} parent=1 // pred_fallthru
      _
    // Predicated region
    $region18: #{tpu_custom_call.1} parent=1 // pred_check
      _
    $region19: #{tpu_custom_call.1} parent=1 // pred_check_branch
      %50 = sbr.rel (0) target = $region21
    $region20: #{tpu_custom_call.1} parent=1 // pred_region
      %s52 = ssub.s32 32, 32
      %53 = vsyncadd [#allocation11], %s52
      %s55 = sshll.u32 [#allocation10], 4
      %s56 = int_to_ptr.vmem [resolvable:$true] %s55
      %58 = dma.hbm_to_vmem [thread:$0]  %s5, 32, %s56, [#allocation11]
    $region21: #{tpu_custom_call.1} parent=1 // pred_fallthru
      _
    // Predicated region
    $region22: #{tpu_custom_call.1} parent=1 // pred_check
      _
    $region23: #{tpu_custom_call.1} parent=1 // pred_check_branch
      %60 = sbr.rel (0) target = $region25
    $region24: #{tpu_custom_call.1} parent=1 // pred_region
      %61 = dma.done [#allocation5], 64
    $region25: #{tpu_custom_call.1} parent=1 // pred_fallthru
      _
    // Predicated region
    $region26: #{tpu_custom_call.1} parent=1 // pred_check
      _
    $region27: #{tpu_custom_call.1} parent=1 // pred_check_branch
      %63 = sbr.rel (0) target = $region29
    $region28: #{tpu_custom_call.1} parent=1 // pred_region
      %64 = dma.done [#allocation8], 2048
    $region29: #{tpu_custom_call.1} parent=1 // pred_fallthru
      _
    // Predicated region
    $region30: #{tpu_custom_call.1} parent=1 // pred_check
      _
    $region31: #{tpu_custom_call.1} parent=1 // pred_check_branch
      %66 = sbr.rel (0) target = $region33
    $region32: #{tpu_custom_call.1} parent=1 // pred_region
      %67 = dma.done [#allocation8], 512
    $region33: #{tpu_custom_call.1} parent=1 // pred_fallthru
      _
    // Predicated region
    $region34: #{tpu_custom_call.1} parent=1 // pred_check
      _
    $region35: #{tpu_custom_call.1} parent=1 // pred_check_branch
      %69 = sbr.rel (0) target = $region37
    $region36: #{tpu_custom_call.1} parent=1 // pred_region
      %70 = dma.done [#allocation11], 32
    $region37: #{tpu_custom_call.1} parent=1 // pred_fallthru
      _
    %s73 = sshll.u32 1, 14
    %s74 = sxor.u32 4294967295, %s73
    %s76 = sld [smem:[#allocation0]]
    %s77 = sadd.s32 2, %s76
    %s79 = sshll.u32 7, 26
    %s80 = sxor.u32 4294967295, %s79
    %s81 = sand.u32 0, %s80
    %s82 = sshll.u32 %s77, 26
    %s83 = sor.u32 %s81, %s82
    %s84 = sshll.u32 [#allocation2], 4
    %s85 = int_to_ptr.vmem [resolvable:$true] %s84
    %88 = sst [smem:[#allocation14]] 1024
    %s89 = scalar_lea.smem [#allocation14], 1
    %90 = sst [smem:[%s89]] 1024
    %s91 = scalar_lea.smem [#allocation14], 2
    %92 = sst [smem:[%s91]] 8
    %s93 = scalar_lea.smem [#allocation14], 3
    %94 = sst [smem:[%s93]] 64
    %s95 = scalar_lea.smem [#allocation14], 4
    %96 = sst [smem:[%s95]] 128
    %s97 = scalar_lea.smem [#allocation14], 5
    %98 = sst [smem:[%s97]] 2
    %s99 = scalar_lea.smem [#allocation14], 6
    %100 = sst [smem:[%s99]] 512
    %s101 = scalar_lea.smem [#allocation14], 7
    %102 = sst [smem:[%s101]] 64
    %s103 = scalar_lea.smem [#allocation14], 8
    %104 = sst [smem:[%s103]] 4
    %106 = dma.general %s2, 65536, %s85, [#allocation3], [#allocation13], [#allocation14], %s83, 0
    %v107 = vld [vmem:[#allocation9] sm:$0xff]
    %v108 = vld [vmem:[#allocation9 + $0x8] sm:$0xff]
    %v109 = vld [vmem:[#allocation9 + $0x10] sm:$0xff]
    %v110 = vld [vmem:[#allocation9 + $0x18] sm:$0xff]
    %v111 = vld [vmem:[#allocation10] sm:$0x3]
    %v112 = vld [vmem:[#allocation4] sm:$0xf]
    %v113 = vld [vmem:[#allocation7] sm:$0xff]
    %v114 = vld [vmem:[#allocation7 + $0x8] sm:$0xff]
    %v115 = vld [vmem:[#allocation7 + $0x10] sm:$0xff]
    %v116 = vld [vmem:[#allocation7 + $0x18] sm:$0xff]
    %v117 = vld [vmem:[#allocation7 + $0x20] sm:$0xff]
    %v118 = vld [vmem:[#allocation7 + $0x28] sm:$0xff]
    %v119 = vld [vmem:[#allocation7 + $0x30] sm:$0xff]
    %v120 = vld [vmem:[#allocation7 + $0x38] sm:$0xff]
    %v121 = vld [vmem:[#allocation7 + $0x40] sm:$0xff]
    %v122 = vld [vmem:[#allocation7 + $0x48] sm:$0xff]
    %v123 = vld [vmem:[#allocation7 + $0x50] sm:$0xff]
    %v124 = vld [vmem:[#allocation7 + $0x58] sm:$0xff]
    %v125 = vld [vmem:[#allocation7 + $0x60] sm:$0xff]
    %v126 = vld [vmem:[#allocation7 + $0x68] sm:$0xff]
    %v127 = vld [vmem:[#allocation7 + $0x70] sm:$0xff]
    %v128 = vld [vmem:[#allocation7 + $0x78] sm:$0xff]
    %v145 = vunpack.c.l.b16 %v113
    %v146 = vunpack.c.h.b16 %v113
    %v147 = vunpack.c.l.b16 %v114
    %v148 = vunpack.c.h.b16 %v114
    %v149 = vunpack.c.l.b16 %v115
    %v150 = vunpack.c.h.b16 %v115
    %v151 = vunpack.c.l.b16 %v116
    %v152 = vunpack.c.h.b16 %v116
    %v153 = vunpack.c.l.b16 %v117
    %v154 = vunpack.c.h.b16 %v117
    %v155 = vunpack.c.l.b16 %v118
    %v156 = vunpack.c.h.b16 %v118
    %v157 = vunpack.c.l.b16 %v119
    %v158 = vunpack.c.h.b16 %v119
    %v159 = vunpack.c.l.b16 %v120
    %v160 = vunpack.c.h.b16 %v120
    %v161 = vunpack.c.l.b16 %v121
    %v162 = vunpack.c.h.b16 %v121
    %v163 = vunpack.c.l.b16 %v122
    %v164 = vunpack.c.h.b16 %v122
    %v165 = vunpack.c.l.b16 %v123
    %v166 = vunpack.c.h.b16 %v123
    %v167 = vunpack.c.l.b16 %v124
    %v168 = vunpack.c.h.b16 %v124
    %v169 = vunpack.c.l.b16 %v125
    %v170 = vunpack.c.h.b16 %v125
    %v171 = vunpack.c.l.b16 %v126
    %v172 = vunpack.c.h.b16 %v126
    %v173 = vunpack.c.l.b16 %v127
    %v174 = vunpack.c.h.b16 %v127
    %v175 = vunpack.c.l.b16 %v128
    %v176 = vunpack.c.h.b16 %v128
    %v177 = vpack.c.b16 %v153, %v145
    %v178 = vpack.c.b16 %v154, %v146
    %v179 = vpack.c.b16 %v155, %v147
    %v180 = vpack.c.b16 %v156, %v148
    %v181 = vpack.c.b16 %v157, %v149
    %v182 = vpack.c.b16 %v158, %v150
    %v183 = vpack.c.b16 %v159, %v151
    %v184 = vpack.c.b16 %v160, %v152
    %v185 = vpack.c.b16 %v169, %v161
    %v186 = vpack.c.b16 %v170, %v162
    %v187 = vpack.c.b16 %v171, %v163
    %v188 = vpack.c.b16 %v172, %v164
    %v189 = vpack.c.b16 %v173, %v165
    %v190 = vpack.c.b16 %v174, %v166
    %v191 = vpack.c.b16 %v175, %v167
    %v192 = vpack.c.b16 %v176, %v168
    %vm209 = vcmask 261120
    %v211 = vsel %vm209, %v112, 0
    %213 = vmatprep.subr.bf16.mxu0 %v178
    %214 = vmatpush1.bf16.msra.mxu0 %v177
    %215 = vmatprep.subr.bf16.mxu0 %v186
    %216 = vmatpush1.bf16.msra.mxu0 %v185
    %217 = vmatprep.subr.bf16.mxu0 0
    %218 = vmatpush1.bf16.msra.mxu0 0
    %219 = vmatprep.subr.bf16.mxu0 0
    %220 = vmatpush1.bf16.msra.mxu0 0
    %221 = vmatprep.subr.bf16.mxu0 0
    %222 = vmatpush1.bf16.msra.mxu0 0
    %223 = vmatprep.subr.bf16.mxu0 0
    %224 = vmatpush1.bf16.msra.mxu0 0
    %225 = vmatprep.subr.bf16.mxu0 0
    %226 = vmatpush1.bf16.msra.mxu0 0
    %227 = vmatprep.subr.bf16.mxu0 0
    %228 = vmatpush1.bf16.msra.mxu0 0
    %229 = vmatprep.subr.bf16.mxu0 0
    %230 = vmatpush1.bf16.msra.mxu0 0
    %231 = vmatprep.subr.bf16.mxu0 0
    %232 = vmatpush1.bf16.msra.mxu0 0
    %233 = vmatprep.subr.bf16.mxu0 0
    %234 = vmatpush1.bf16.msra.mxu0 0
    %235 = vmatprep.subr.bf16.mxu0 0
    %236 = vmatpush1.bf16.msra.mxu0 0
    %237 = vmatprep.subr.bf16.mxu0 0
    %238 = vmatpush1.bf16.msra.mxu0 0
    %239 = vmatprep.subr.bf16.mxu0 0
    %240 = vmatpush1.bf16.msra.mxu0 0
    %241 = vmatprep.subr.bf16.mxu0 0
    %242 = vmatpush1.bf16.msra.mxu0 0
    %243 = vmatprep.subr.bf16.mxu0 0
    %244 = vmatpush1.bf16.msra.mxu0 0
    %245 = vmatprep.mubr.bf16.mxu0 0
    %246 = vmatmul.mubr.bf16.gmra.mrb[0].mxu0 %v211
    %v247 = vpop.f32.mrb[0].mxu0
    %v248 = vadd.f32 0.0, %v247
    %v249 = vpop.f32.mrb[0].mxu0
    %v250 = vadd.f32 0.0, %v249
    %v251 = vpop.f32.mrb[0].mxu0
    %v252 = vpop.f32.mrb[0].mxu0
    %253 = vdwg.mxu0
    %254 = vmatprep.subr.bf16.mxu0 %v180
    %255 = vmatpush1.bf16.msra.mxu0 %v179
    %256 = vmatprep.subr.bf16.mxu0 %v188
    %257 = vmatpush1.bf16.msra.mxu0 %v187
    %258 = vmatprep.subr.bf16.mxu0 0
    %259 = vmatpush1.bf16.msra.mxu0 0
    %260 = vmatprep.subr.bf16.mxu0 0
    %261 = vmatpush1.bf16.msra.mxu0 0
    %262 = vmatprep.subr.bf16.mxu0 0
    %263 = vmatpush1.bf16.msra.mxu0 0
    %264 = vmatprep.subr.bf16.mxu0 0
    %265 = vmatpush1.bf16.msra.mxu0 0
    %266 = vmatprep.subr.bf16.mxu0 0
    %267 = vmatpush1.bf16.msra.mxu0 0
    %268 = vmatprep.subr.bf16.mxu0 0
    %269 = vmatpush1.bf16.msra.mxu0 0
    %270 = vmatprep.subr.bf16.mxu0 0
    %271 = vmatpush1.bf16.msra.mxu0 0
    %272 = vmatprep.subr.bf16.mxu0 0
    %273 = vmatpush1.bf16.msra.mxu0 0
    %274 = vmatprep.subr.bf16.mxu0 0
    %275 = vmatpush1.bf16.msra.mxu0 0
    %276 = vmatprep.subr.bf16.mxu0 0
    %277 = vmatpush1.bf16.msra.mxu0 0
    %278 = vmatprep.subr.bf16.mxu0 0
    %279 = vmatpush1.bf16.msra.mxu0 0
    %280 = vmatprep.subr.bf16.mxu0 0
    %281 = vmatpush1.bf16.msra.mxu0 0
    %282 = vmatprep.subr.bf16.mxu0 0
    %283 = vmatpush1.bf16.msra.mxu0 0
    %284 = vmatprep.subr.bf16.mxu0 0
    %285 = vmatpush1.bf16.msra.mxu0 0
    %286 = vmatprep.mubr.bf16.mxu0 0
    %287 = vmatmul.mubr.bf16.gmra.mrb[0].mxu0 %v211
    %v288 = vpop.f32.mrb[0].mxu0
    %v289 = vadd.f32 0.0, %v288
    %v290 = vpop.f32.mrb[0].mxu0
    %v291 = vadd.f32 0.0, %v290
    %v292 = vpop.f32.mrb[0].mxu0
    %v293 = vpop.f32.mrb[0].mxu0
    %294 = vdwg.mxu0
    %295 = vmatprep.subr.bf16.mxu0 %v182
    %296 = vmatpush1.bf16.msra.mxu0 %v181
    %297 = vmatprep.subr.bf16.mxu0 %v190
    %298 = vmatpush1.bf16.msra.mxu0 %v189
    %299 = vmatprep.subr.bf16.mxu0 0
    %300 = vmatpush1.bf16.msra.mxu0 0
    %301 = vmatprep.subr.bf16.mxu0 0
    %302 = vmatpush1.bf16.msra.mxu0 0
    %303 = vmatprep.subr.bf16.mxu0 0
    %304 = vmatpush1.bf16.msra.mxu0 0
    %305 = vmatprep.subr.bf16.mxu0 0
    %306 = vmatpush1.bf16.msra.mxu0 0
    %307 = vmatprep.subr.bf16.mxu0 0
    %308 = vmatpush1.bf16.msra.mxu0 0
    %309 = vmatprep.subr.bf16.mxu0 0
    %310 = vmatpush1.bf16.msra.mxu0 0
    %311 = vmatprep.subr.bf16.mxu0 0
    %312 = vmatpush1.bf16.msra.mxu0 0
    %313 = vmatprep.subr.bf16.mxu0 0
    %314 = vmatpush1.bf16.msra.mxu0 0
    %315 = vmatprep.subr.bf16.mxu0 0
    %316 = vmatpush1.bf16.msra.mxu0 0
    %317 = vmatprep.subr.bf16.mxu0 0
    %318 = vmatpush1.bf16.msra.mxu0 0
    %319 = vmatprep.subr.bf16.mxu0 0
    %320 = vmatpush1.bf16.msra.mxu0 0
    %321 = vmatprep.subr.bf16.mxu0 0
    %322 = vmatpush1.bf16.msra.mxu0 0
    %323 = vmatprep.subr.bf16.mxu0 0
    %324 = vmatpush1.bf16.msra.mxu0 0
    %325 = vmatprep.subr.bf16.mxu0 0
    %326 = vmatpush1.bf16.msra.mxu0 0
    %327 = vmatprep.mubr.bf16.mxu0 0
    %328 = vmatmul.mubr.bf16.gmra.mrb[0].mxu0 %v211
    %v329 = vpop.f32.mrb[0].mxu0
    %v330 = vadd.f32 0.0, %v329
    %v331 = vpop.f32.mrb[0].mxu0
    %v332 = vadd.f32 0.0, %v331
    %v333 = vpop.f32.mrb[0].mxu0
    %v334 = vpop.f32.mrb[0].mxu0
    %335 = vdwg.mxu0
    %336 = vmatprep.subr.bf16.mxu0 %v184
    %337 = vmatpush1.bf16.msra.mxu0 %v183
    %338 = vmatprep.subr.bf16.mxu0 %v192
    %339 = vmatpush1.bf16.msra.mxu0 %v191
    %340 = vmatprep.subr.bf16.mxu0 0
    %341 = vmatpush1.bf16.msra.mxu0 0
    %342 = vmatprep.subr.bf16.mxu0 0
    %343 = vmatpush1.bf16.msra.mxu0 0
    %344 = vmatprep.subr.bf16.mxu0 0
    %345 = vmatpush1.bf16.msra.mxu0 0
    %346 = vmatprep.subr.bf16.mxu0 0
    %347 = vmatpush1.bf16.msra.mxu0 0
    %348 = vmatprep.subr.bf16.mxu0 0
    %349 = vmatpush1.bf16.msra.mxu0 0
    %350 = vmatprep.subr.bf16.mxu0 0
    %351 = vmatpush1.bf16.msra.mxu0 0
    %352 = vmatprep.subr.bf16.mxu0 0
    %353 = vmatpush1.bf16.msra.mxu0 0
    %354 = vmatprep.subr.bf16.mxu0 0
    %355 = vmatpush1.bf16.msra.mxu0 0
    %356 = vmatprep.subr.bf16.mxu0 0
    %357 = vmatpush1.bf16.msra.mxu0 0
    %358 = vmatprep.subr.bf16.mxu0 0
    %359 = vmatpush1.bf16.msra.mxu0 0
    %360 = vmatprep.subr.bf16.mxu0 0
    %361 = vmatpush1.bf16.msra.mxu0 0
    %362 = vmatprep.subr.bf16.mxu0 0
    %363 = vmatpush1.bf16.msra.mxu0 0
    %364 = vmatprep.subr.bf16.mxu0 0
    %365 = vmatpush1.bf16.msra.mxu0 0
    %366 = vmatprep.subr.bf16.mxu0 0
    %367 = vmatpush1.bf16.msra.mxu0 0
    %368 = vmatprep.mubr.bf16.mxu0 0
    %369 = vmatmul.mubr.bf16.gmra.mrb[0].mxu0 %v211
    %v370 = vpop.f32.mrb[0].mxu0
    %v371 = vadd.f32 0.0, %v370
    %v372 = vpop.f32.mrb[0].mxu0
    %v373 = vadd.f32 0.0, %v372
    %v374 = vpop.f32.mrb[0].mxu0
    %v375 = vpop.f32.mrb[0].mxu0
    %376 = vdwg.mxu0
    %v377 = vrot.slane %v248, 4
    %v378 = vadd.f32 %v248, %v377
    %v379 = vrot.slane %v378, 2
    %v380 = vadd.f32 %v378, %v379
    %v381 = vrot.slane %v380, 1
    %v382 = vadd.f32 %v380, %v381
    %v383 = vrot.slane %v250, 4
    %v384 = vadd.f32 %v250, %v383
    %v385 = vrot.slane %v384, 2
    %v386 = vadd.f32 %v384, %v385
    %v387 = vrot.slane %v386, 1
    %v388 = vadd.f32 %v386, %v387
    %v389 = vrot.slane %v289, 4
    %v390 = vadd.f32 %v289, %v389
    %v391 = vrot.slane %v390, 2
    %v392 = vadd.f32 %v390, %v391
    %v393 = vrot.slane %v392, 1
    %v394 = vadd.f32 %v392, %v393
    %v395 = vrot.slane %v291, 4
    %v396 = vadd.f32 %v291, %v395
    %v397 = vrot.slane %v396, 2
    %v398 = vadd.f32 %v396, %v397
    %v399 = vrot.slane %v398, 1
    %v400 = vadd.f32 %v398, %v399
    %v401 = vrot.slane %v330, 4
    %v402 = vadd.f32 %v330, %v401
    %v403 = vrot.slane %v402, 2
    %v404 = vadd.f32 %v402, %v403
    %v405 = vrot.slane %v404, 1
    %v406 = vadd.f32 %v404, %v405
    %v407 = vrot.slane %v332, 4
    %v408 = vadd.f32 %v332, %v407
    %v409 = vrot.slane %v408, 2
    %v410 = vadd.f32 %v408, %v409
    %v411 = vrot.slane %v410, 1
    %v412 = vadd.f32 %v410, %v411
    %v413 = vrot.slane %v371, 4
    %v414 = vadd.f32 %v371, %v413
    %v415 = vrot.slane %v414, 2
    %v416 = vadd.f32 %v414, %v415
    %v417 = vrot.slane %v416, 1
    %v418 = vadd.f32 %v416, %v417
    %v419 = vrot.slane %v373, 4
    %v420 = vadd.f32 %v373, %v419
    %v421 = vrot.slane %v420, 2
    %v422 = vadd.f32 %v420, %v421
    %v423 = vrot.slane %v422, 1
    %v424 = vadd.f32 %v422, %v423
    %v425 = vrcp.pop 8.0
    %v426 = vmul.f32 %v382, %v425
    %v427 = vmul.f32 %v388, %v425
    %v428 = vmul.f32 %v394, %v425
    %v429 = vmul.f32 %v400, %v425
    %v430 = vmul.f32 %v406, %v425
    %v431 = vmul.f32 %v412, %v425
    %v432 = vmul.f32 %v418, %v425
    %v433 = vmul.f32 %v424, %v425
    %v434 = vsub.f32 %v248, %v426
    %v435 = vsub.f32 %v250, %v427
    %v436 = vsub.f32 %v289, %v428
    %v437 = vsub.f32 %v291, %v429
    %v438 = vsub.f32 %v330, %v430
    %v439 = vsub.f32 %v332, %v431
    %v440 = vsub.f32 %v371, %v432
    %v441 = vsub.f32 %v373, %v433
    %v442 = vmul.f32 %v434, %v434
    %v443 = vmul.f32 %v435, %v435
    %v444 = vmul.f32 %v436, %v436
    %v445 = vmul.f32 %v437, %v437
    %v446 = vmul.f32 %v438, %v438
    %v447 = vmul.f32 %v439, %v439
    %v448 = vmul.f32 %v440, %v440
    %v449 = vmul.f32 %v441, %v441
    %v450 = vrot.slane %v442, 4
    %v451 = vadd.f32 %v442, %v450
    %v452 = vrot.slane %v451, 2
    %v453 = vadd.f32 %v451, %v452
    %v454 = vrot.slane %v453, 1
    %v455 = vadd.f32 %v453, %v454
    %v456 = vrot.slane %v443, 4
    %v457 = vadd.f32 %v443, %v456
    %v458 = vrot.slane %v457, 2
    %v459 = vadd.f32 %v457, %v458
    %v460 = vrot.slane %v459, 1
    %v461 = vadd.f32 %v459, %v460
    %v462 = vrot.slane %v444, 4
    %v463 = vadd.f32 %v444, %v462
    %v464 = vrot.slane %v463, 2
    %v465 = vadd.f32 %v463, %v464
    %v466 = vrot.slane %v465, 1
    %v467 = vadd.f32 %v465, %v466
    %v468 = vrot.slane %v445, 4
    %v469 = vadd.f32 %v445, %v468
    %v470 = vrot.slane %v469, 2
    %v471 = vadd.f32 %v469, %v470
    %v472 = vrot.slane %v471, 1
    %v473 = vadd.f32 %v471, %v472
    %v474 = vrot.slane %v446, 4
    %v475 = vadd.f32 %v446, %v474
    %v476 = vrot.slane %v475, 2
    %v477 = vadd.f32 %v475, %v476
    %v478 = vrot.slane %v477, 1
    %v479 = vadd.f32 %v477, %v478
    %v480 = vrot.slane %v447, 4
    %v481 = vadd.f32 %v447, %v480
    %v482 = vrot.slane %v481, 2
    %v483 = vadd.f32 %v481, %v482
    %v484 = vrot.slane %v483, 1
    %v485 = vadd.f32 %v483, %v484
    %v486 = vrot.slane %v448, 4
    %v487 = vadd.f32 %v448, %v486
    %v488 = vrot.slane %v487, 2
    %v489 = vadd.f32 %v487, %v488
    %v490 = vrot.slane %v489, 1
    %v491 = vadd.f32 %v489, %v490
    %v492 = vrot.slane %v449, 4
    %v493 = vadd.f32 %v449, %v492
    %v494 = vrot.slane %v493, 2
    %v495 = vadd.f32 %v493, %v494
    %v496 = vrot.slane %v495, 1
    %v497 = vadd.f32 %v495, %v496
    %v498 = vmul.f32 %v455, %v425
    %v499 = vmul.f32 %v461, %v425
    %v500 = vmul.f32 %v467, %v425
    %v501 = vmul.f32 %v473, %v425
    %v502 = vmul.f32 %v479, %v425
    %v503 = vmul.f32 %v485, %v425
    %v504 = vmul.f32 %v491, %v425
    %v505 = vmul.f32 %v497, %v425
    %v506 = vadd.f32 %v498, 1e-05
    %v507 = vadd.f32 %v499, 1e-05
    %v508 = vadd.f32 %v500, 1e-05
    %v509 = vadd.f32 %v501, 1e-05
    %v510 = vadd.f32 %v502, 1e-05
    %v511 = vadd.f32 %v503, 1e-05
    %v512 = vadd.f32 %v504, 1e-05
    %v513 = vadd.f32 %v505, 1e-05
    %v514 = vrsqrt.pop %v506
    %v515 = vrsqrt.pop %v507
    %v516 = vrsqrt.pop %v508
    %v517 = vrsqrt.pop %v509
    %v518 = vrsqrt.pop %v510
    %v519 = vrsqrt.pop %v511
    %v520 = vrsqrt.pop %v512
    %v521 = vrsqrt.pop %v513
    %v530 = vcombine.low %v514, %v515
    %v531 = vcombine.low %v516, %v517
    %v532 = vcombine.low %v518, %v519
    %v533 = vcombine.low %v520, %v521
    %v538 = vmul.f32 %v107, %v530
    %v539 = vmul.f32 %v108, %v531
    %v540 = vmul.f32 %v109, %v532
    %v541 = vmul.f32 %v110, %v533
    %v546 = vlaneseq
    %v547 = vshrl.u32 %v546, 7
    %v548 = vsub.s32 0, %v547
    %v549 = vrot.slane %v538, %v548
    %v550 = vlaneseq
    %v551 = vshrl.u32 %v550, 7
    %v552 = vsub.s32 4, %v551
    %v553 = vrot.slane %v538, %v552
    %v554 = vlaneseq
    %v555 = vshrl.u32 %v554, 7
    %v556 = vsub.s32 0, %v555
    %v557 = vrot.slane %v539, %v556
    %v558 = vlaneseq
    %v559 = vshrl.u32 %v558, 7
    %v560 = vsub.s32 4, %v559
    %v561 = vrot.slane %v539, %v560
    %v562 = vlaneseq
    %v563 = vshrl.u32 %v562, 7
    %v564 = vsub.s32 0, %v563
    %v565 = vrot.slane %v540, %v564
    %v566 = vlaneseq
    %v567 = vshrl.u32 %v566, 7
    %v568 = vsub.s32 4, %v567
    %v569 = vrot.slane %v540, %v568
    %v570 = vlaneseq
    %v571 = vshrl.u32 %v570, 7
    %v572 = vsub.s32 0, %v571
    %v573 = vrot.slane %v541, %v572
    %v574 = vlaneseq
    %v575 = vshrl.u32 %v574, 7
    %v576 = vsub.s32 4, %v575
    %v577 = vrot.slane %v541, %v576
    %v586 = vmul.f32 %v426, %v549
    %v587 = vmul.f32 %v427, %v553
    %v588 = vmul.f32 %v428, %v557
    %v589 = vmul.f32 %v429, %v561
    %v590 = vmul.f32 %v430, %v565
    %v591 = vmul.f32 %v431, %v569
    %v592 = vmul.f32 %v432, %v573
    %v593 = vmul.f32 %v433, %v577
    %v602 = vcombine.low %v586, %v587
    %v603 = vcombine.low %v588, %v589
    %v604 = vcombine.low %v590, %v591
    %v605 = vcombine.low %v592, %v593
    %v606 = vrot.slane %v602, 7
    %v607 = vrot.slane %v603, 7
    %v608 = vrot.slane %v604, 7
    %v609 = vrot.slane %v605, 7
    %v614 = vsub.f32 %v107, %v606
    %v615 = vsub.f32 %v108, %v607
    %v616 = vsub.f32 %v109, %v608
    %v617 = vsub.f32 %v110, %v609
    %v618 = vlaneseq
    %v619 = vshrl.u32 %v618, 7
    %v620 = vsub.s32 0, %v619
    %v621 = vrot.slane %v549, %v620
    %v622 = vlaneseq
    %v623 = vshrl.u32 %v622, 7
    %v624 = vsub.s32 0, %v623
    %v625 = vrot.slane %v553, %v624
    %v626 = vlaneseq
    %v627 = vshrl.u32 %v626, 7
    %v628 = vsub.s32 0, %v627
    %v629 = vrot.slane %v557, %v628
    %v630 = vlaneseq
    %v631 = vshrl.u32 %v630, 7
    %v632 = vsub.s32 0, %v631
    %v633 = vrot.slane %v561, %v632
    %v634 = vlaneseq
    %v635 = vshrl.u32 %v634, 7
    %v636 = vsub.s32 0, %v635
    %v637 = vrot.slane %v565, %v636
    %v638 = vlaneseq
    %v639 = vshrl.u32 %v638, 7
    %v640 = vsub.s32 0, %v639
    %v641 = vrot.slane %v569, %v640
    %v642 = vlaneseq
    %v643 = vshrl.u32 %v642, 7
    %v644 = vsub.s32 0, %v643
    %v645 = vrot.slane %v573, %v644
    %v646 = vlaneseq
    %v647 = vshrl.u32 %v646, 7
    %v648 = vsub.s32 0, %v647
    %v649 = vrot.slane %v577, %v648
    %v650 = vmul.f32 %v248, %v621
    %v651 = vmul.f32 %v250, %v625
    %v652 = vmul.f32 %v289, %v629
    %v653 = vmul.f32 %v291, %v633
    %v654 = vmul.f32 %v330, %v637
    %v655 = vmul.f32 %v332, %v641
    %v656 = vmul.f32 %v371, %v645
    %v657 = vmul.f32 %v373, %v649
    %v662 = vlaneseq
    %v663 = vshrl.u32 %v662, 7
    %v664 = vsub.s32 1, %v663
    %v665 = vrot.slane %v614, %v664
    %v666 = vlaneseq
    %v667 = vshrl.u32 %v666, 7
    %v668 = vsub.s32 5, %v667
    %v669 = vrot.slane %v614, %v668
    %v670 = vlaneseq
    %v671 = vshrl.u32 %v670, 7
    %v672 = vsub.s32 1, %v671
    %v673 = vrot.slane %v615, %v672
    %v674 = vlaneseq
    %v675 = vshrl.u32 %v674, 7
    %v676 = vsub.s32 5, %v675
    %v677 = vrot.slane %v615, %v676
    %v678 = vlaneseq
    %v679 = vshrl.u32 %v678, 7
    %v680 = vsub.s32 1, %v679
    %v681 = vrot.slane %v616, %v680
    %v682 = vlaneseq
    %v683 = vshrl.u32 %v682, 7
    %v684 = vsub.s32 5, %v683
    %v685 = vrot.slane %v616, %v684
    %v686 = vlaneseq
    %v687 = vshrl.u32 %v686, 7
    %v688 = vsub.s32 1, %v687
    %v689 = vrot.slane %v617, %v688
    %v690 = vlaneseq
    %v691 = vshrl.u32 %v690, 7
    %v692 = vsub.s32 5, %v691
    %v693 = vrot.slane %v617, %v692
    %v702 = vlaneseq
    %v703 = vshrl.u32 %v702, 7
    %v704 = vsub.s32 1, %v703
    %v705 = vrot.slane %v665, %v704
    %v706 = vlaneseq
    %v707 = vshrl.u32 %v706, 7
    %v708 = vsub.s32 1, %v707
    %v709 = vrot.slane %v669, %v708
    %v710 = vlaneseq
    %v711 = vshrl.u32 %v710, 7
    %v712 = vsub.s32 1, %v711
    %v713 = vrot.slane %v673, %v712
    %v714 = vlaneseq
    %v715 = vshrl.u32 %v714, 7
    %v716 = vsub.s32 1, %v715
    %v717 = vrot.slane %v677, %v716
    %v718 = vlaneseq
    %v719 = vshrl.u32 %v718, 7
    %v720 = vsub.s32 1, %v719
    %v721 = vrot.slane %v681, %v720
    %v722 = vlaneseq
    %v723 = vshrl.u32 %v722, 7
    %v724 = vsub.s32 1, %v723
    %v725 = vrot.slane %v685, %v724
    %v726 = vlaneseq
    %v727 = vshrl.u32 %v726, 7
    %v728 = vsub.s32 1, %v727
    %v729 = vrot.slane %v689, %v728
    %v730 = vlaneseq
    %v731 = vshrl.u32 %v730, 7
    %v732 = vsub.s32 1, %v731
    %v733 = vrot.slane %v693, %v732
    %v734 = vadd.f32 %v650, %v705
    %v735 = vadd.f32 %v651, %v709
    %v736 = vadd.f32 %v652, %v713
    %v737 = vadd.f32 %v653, %v717
    %v738 = vadd.f32 %v654, %v721
    %v739 = vadd.f32 %v655, %v725
    %v740 = vadd.f32 %v656, %v729
    %v741 = vadd.f32 %v657, %v733
    %v742 = vmul.f32 %v734, 0.2
    %v743 = vmul.f32 %v735, 0.2
    %v744 = vmul.f32 %v736, 0.2
    %v745 = vmul.f32 %v737, 0.2
    %v746 = vmul.f32 %v738, 0.2
    %v747 = vmul.f32 %v739, 0.2
    %v748 = vmul.f32 %v740, 0.2
    %v749 = vmul.f32 %v741, 0.2
    %v750 = vmax.f32 %v734, %v742
    %v751 = vmax.f32 %v735, %v743
    %v752 = vmax.f32 %v736, %v744
    %v753 = vmax.f32 %v737, %v745
    %v754 = vmax.f32 %v738, %v746
    %v755 = vmax.f32 %v739, %v747
    %v756 = vmax.f32 %v740, %v748
    %v757 = vmax.f32 %v741, %v749
    %s758 = smul.u32 4, 128
    %s759 = smul.u32 %s758, 8
    %s760 = sshll.u32 %s759, 4
    %761 = dma.done [#allocation3], %s760
    %v762 = vpack.c.bf16 %v750, %v750
    %v763 = vpack.c.bf16 %v751, %v751
    %v764 = vpack.c.bf16 %v752, %v752
    %v765 = vpack.c.bf16 %v753, %v753
    %v766 = vpack.c.bf16 %v754, %v754
    %v767 = vpack.c.bf16 %v755, %v755
    %v768 = vpack.c.bf16 %v756, %v756
    %v769 = vpack.c.bf16 %v757, %v757
    %v770 = vld [vmem:[#allocation2] sm:$0xff]
    %v771 = vld [vmem:[#allocation2 + $0x8] sm:$0xff]
    %v772 = vld [vmem:[#allocation2 + $0x10] sm:$0xff]
    %v773 = vld [vmem:[#allocation2 + $0x18] sm:$0xff]
    %v774 = vld [vmem:[#allocation2 + $0x20] sm:$0xff]
    %v775 = vld [vmem:[#allocation2 + $0x28] sm:$0xff]
    %v776 = vld [vmem:[#allocation2 + $0x30] sm:$0xff]
    %v777 = vld [vmem:[#allocation2 + $0x38] sm:$0xff]
    %v778 = vld [vmem:[#allocation2 + $0x40] sm:$0xff]
    %v779 = vld [vmem:[#allocation2 + $0x48] sm:$0xff]
    %v780 = vld [vmem:[#allocation2 + $0x50] sm:$0xff]
    %v781 = vld [vmem:[#allocation2 + $0x58] sm:$0xff]
    %v782 = vld [vmem:[#allocation2 + $0x60] sm:$0xff]
    %v783 = vld [vmem:[#allocation2 + $0x68] sm:$0xff]
    %v784 = vld [vmem:[#allocation2 + $0x70] sm:$0xff]
    %v785 = vld [vmem:[#allocation2 + $0x78] sm:$0xff]
    %v786 = vld [vmem:[#allocation2 + $0x80] sm:$0xff]
    %v787 = vld [vmem:[#allocation2 + $0x88] sm:$0xff]
    %v788 = vld [vmem:[#allocation2 + $0x90] sm:$0xff]
    %v789 = vld [vmem:[#allocation2 + $0x98] sm:$0xff]
    %v790 = vld [vmem:[#allocation2 + $0xa0] sm:$0xff]
    %v791 = vld [vmem:[#allocation2 + $0xa8] sm:$0xff]
    %v792 = vld [vmem:[#allocation2 + $0xb0] sm:$0xff]
    %v793 = vld [vmem:[#allocation2 + $0xb8] sm:$0xff]
    %v794 = vld [vmem:[#allocation2 + $0xc0] sm:$0xff]
    %v795 = vld [vmem:[#allocation2 + $0xc8] sm:$0xff]
    %v796 = vld [vmem:[#allocation2 + $0xd0] sm:$0xff]
    %v797 = vld [vmem:[#allocation2 + $0xd8] sm:$0xff]
    %v798 = vld [vmem:[#allocation2 + $0xe0] sm:$0xff]
    %v799 = vld [vmem:[#allocation2 + $0xe8] sm:$0xff]
    %v800 = vld [vmem:[#allocation2 + $0xf0] sm:$0xff]
    %v801 = vld [vmem:[#allocation2 + $0xf8] sm:$0xff]
    %v802 = vld [vmem:[#allocation2 + $0x100] sm:$0xff]
    %v803 = vld [vmem:[#allocation2 + $0x108] sm:$0xff]
    %v804 = vld [vmem:[#allocation2 + $0x110] sm:$0xff]
    %v805 = vld [vmem:[#allocation2 + $0x118] sm:$0xff]
    %v806 = vld [vmem:[#allocation2 + $0x120] sm:$0xff]
    %v807 = vld [vmem:[#allocation2 + $0x128] sm:$0xff]
    %v808 = vld [vmem:[#allocation2 + $0x130] sm:$0xff]
    %v809 = vld [vmem:[#allocation2 + $0x138] sm:$0xff]
    %v810 = vld [vmem:[#allocation2 + $0x140] sm:$0xff]
    %v811 = vld [vmem:[#allocation2 + $0x148] sm:$0xff]
    %v812 = vld [vmem:[#allocation2 + $0x150] sm:$0xff]
    %v813 = vld [vmem:[#allocation2 + $0x158] sm:$0xff]
    %v814 = vld [vmem:[#allocation2 + $0x160] sm:$0xff]
    %v815 = vld [vmem:[#allocation2 + $0x168] sm:$0xff]
    %v816 = vld [vmem:[#allocation2 + $0x170] sm:$0xff]
    %v817 = vld [vmem:[#allocation2 + $0x178] sm:$0xff]
    %v818 = vld [vmem:[#allocation2 + $0x180] sm:$0xff]
    %v819 = vld [vmem:[#allocation2 + $0x188] sm:$0xff]
    %v820 = vld [vmem:[#allocation2 + $0x190] sm:$0xff]
    %v821 = vld [vmem:[#allocation2 + $0x198] sm:$0xff]
    %v822 = vld [vmem:[#allocation2 + $0x1a0] sm:$0xff]
    %v823 = vld [vmem:[#allocation2 + $0x1a8] sm:$0xff]
    %v824 = vld [vmem:[#allocation2 + $0x1b0] sm:$0xff]
    %v825 = vld [vmem:[#allocation2 + $0x1b8] sm:$0xff]
    %v826 = vld [vmem:[#allocation2 + $0x1c0] sm:$0xff]
    %v827 = vld [vmem:[#allocation2 + $0x1c8] sm:$0xff]
    %v828 = vld [vmem:[#allocation2 + $0x1d0] sm:$0xff]
    %v829 = vld [vmem:[#allocation2 + $0x1d8] sm:$0xff]
    %v830 = vld [vmem:[#allocation2 + $0x1e0] sm:$0xff]
    %v831 = vld [vmem:[#allocation2 + $0x1e8] sm:$0xff]
    %v832 = vld [vmem:[#allocation2 + $0x1f0] sm:$0xff]
    %v833 = vld [vmem:[#allocation2 + $0x1f8] sm:$0xff]
    %v834 = vld [vmem:[#allocation2 + $0x200] sm:$0xff]
    %v835 = vld [vmem:[#allocation2 + $0x208] sm:$0xff]
    %v836 = vld [vmem:[#allocation2 + $0x210] sm:$0xff]
    %v837 = vld [vmem:[#allocation2 + $0x218] sm:$0xff]
    %v838 = vld [vmem:[#allocation2 + $0x220] sm:$0xff]
    %v839 = vld [vmem:[#allocation2 + $0x228] sm:$0xff]
    %v840 = vld [vmem:[#allocation2 + $0x230] sm:$0xff]
    %v841 = vld [vmem:[#allocation2 + $0x238] sm:$0xff]
    %v842 = vld [vmem:[#allocation2 + $0x240] sm:$0xff]
    %v843 = vld [vmem:[#allocation2 + $0x248] sm:$0xff]
    %v844 = vld [vmem:[#allocation2 + $0x250] sm:$0xff]
    %v845 = vld [vmem:[#allocation2 + $0x258] sm:$0xff]
    %v846 = vld [vmem:[#allocation2 + $0x260] sm:$0xff]
    %v847 = vld [vmem:[#allocation2 + $0x268] sm:$0xff]
    %v848 = vld [vmem:[#allocation2 + $0x270] sm:$0xff]
    %v849 = vld [vmem:[#allocation2 + $0x278] sm:$0xff]
    %v850 = vld [vmem:[#allocation2 + $0x280] sm:$0xff]
    %v851 = vld [vmem:[#allocation2 + $0x288] sm:$0xff]
    %v852 = vld [vmem:[#allocation2 + $0x290] sm:$0xff]
    %v853 = vld [vmem:[#allocation2 + $0x298] sm:$0xff]
    %v854 = vld [vmem:[#allocation2 + $0x2a0] sm:$0xff]
    %v855 = vld [vmem:[#allocation2 + $0x2a8] sm:$0xff]
    %v856 = vld [vmem:[#allocation2 + $0x2b0] sm:$0xff]
    %v857 = vld [vmem:[#allocation2 + $0x2b8] sm:$0xff]
    %v858 = vld [vmem:[#allocation2 + $0x2c0] sm:$0xff]
    %v859 = vld [vmem:[#allocation2 + $0x2c8] sm:$0xff]
    %v860 = vld [vmem:[#allocation2 + $0x2d0] sm:$0xff]
    %v861 = vld [vmem:[#allocation2 + $0x2d8] sm:$0xff]
    %v862 = vld [vmem:[#allocation2 + $0x2e0] sm:$0xff]
    %v863 = vld [vmem:[#allocation2 + $0x2e8] sm:$0xff]
    %v864 = vld [vmem:[#allocation2 + $0x2f0] sm:$0xff]
    %v865 = vld [vmem:[#allocation2 + $0x2f8] sm:$0xff]
    %v866 = vld [vmem:[#allocation2 + $0x300] sm:$0xff]
    %v867 = vld [vmem:[#allocation2 + $0x308] sm:$0xff]
    %v868 = vld [vmem:[#allocation2 + $0x310] sm:$0xff]
    %v869 = vld [vmem:[#allocation2 + $0x318] sm:$0xff]
    %v870 = vld [vmem:[#allocation2 + $0x320] sm:$0xff]
    %v871 = vld [vmem:[#allocation2 + $0x328] sm:$0xff]
    %v872 = vld [vmem:[#allocation2 + $0x330] sm:$0xff]
    %v873 = vld [vmem:[#allocation2 + $0x338] sm:$0xff]
    %v874 = vld [vmem:[#allocation2 + $0x340] sm:$0xff]
    %v875 = vld [vmem:[#allocation2 + $0x348] sm:$0xff]
    %v876 = vld [vmem:[#allocation2 + $0x350] sm:$0xff]
    %v877 = vld [vmem:[#allocation2 + $0x358] sm:$0xff]
    %v878 = vld [vmem:[#allocation2 + $0x360] sm:$0xff]
    %v879 = vld [vmem:[#allocation2 + $0x368] sm:$0xff]
    %v880 = vld [vmem:[#allocation2 + $0x370] sm:$0xff]
    %v881 = vld [vmem:[#allocation2 + $0x378] sm:$0xff]
    %v882 = vld [vmem:[#allocation2 + $0x380] sm:$0xff]
    %v883 = vld [vmem:[#allocation2 + $0x388] sm:$0xff]
    %v884 = vld [vmem:[#allocation2 + $0x390] sm:$0xff]
    %v885 = vld [vmem:[#allocation2 + $0x398] sm:$0xff]
    %v886 = vld [vmem:[#allocation2 + $0x3a0] sm:$0xff]
    %v887 = vld [vmem:[#allocation2 + $0x3a8] sm:$0xff]
    %v888 = vld [vmem:[#allocation2 + $0x3b0] sm:$0xff]
    %v889 = vld [vmem:[#allocation2 + $0x3b8] sm:$0xff]
    %v890 = vld [vmem:[#allocation2 + $0x3c0] sm:$0xff]
    %v891 = vld [vmem:[#allocation2 + $0x3c8] sm:$0xff]
    %v892 = vld [vmem:[#allocation2 + $0x3d0] sm:$0xff]
    %v893 = vld [vmem:[#allocation2 + $0x3d8] sm:$0xff]
    %v894 = vld [vmem:[#allocation2 + $0x3e0] sm:$0xff]
    %v895 = vld [vmem:[#allocation2 + $0x3e8] sm:$0xff]
    %v896 = vld [vmem:[#allocation2 + $0x3f0] sm:$0xff]
    %v897 = vld [vmem:[#allocation2 + $0x3f8] sm:$0xff]
    %v898 = vld [vmem:[#allocation2 + $0x400] sm:$0xff]
    %v899 = vld [vmem:[#allocation2 + $0x408] sm:$0xff]
    %v900 = vld [vmem:[#allocation2 + $0x410] sm:$0xff]
    %v901 = vld [vmem:[#allocation2 + $0x418] sm:$0xff]
    %v902 = vld [vmem:[#allocation2 + $0x420] sm:$0xff]
    %v903 = vld [vmem:[#allocation2 + $0x428] sm:$0xff]
    %v904 = vld [vmem:[#allocation2 + $0x430] sm:$0xff]
    %v905 = vld [vmem:[#allocation2 + $0x438] sm:$0xff]
    %v906 = vld [vmem:[#allocation2 + $0x440] sm:$0xff]
    %v907 = vld [vmem:[#allocation2 + $0x448] sm:$0xff]
    %v908 = vld [vmem:[#allocation2 + $0x450] sm:$0xff]
    %v909 = vld [vmem:[#allocation2 + $0x458] sm:$0xff]
    %v910 = vld [vmem:[#allocation2 + $0x460] sm:$0xff]
    %v911 = vld [vmem:[#allocation2 + $0x468] sm:$0xff]
    %v912 = vld [vmem:[#allocation2 + $0x470] sm:$0xff]
    %v913 = vld [vmem:[#allocation2 + $0x478] sm:$0xff]
    %v914 = vld [vmem:[#allocation2 + $0x480] sm:$0xff]
    %v915 = vld [vmem:[#allocation2 + $0x488] sm:$0xff]
    %v916 = vld [vmem:[#allocation2 + $0x490] sm:$0xff]
    %v917 = vld [vmem:[#allocation2 + $0x498] sm:$0xff]
    %v918 = vld [vmem:[#allocation2 + $0x4a0] sm:$0xff]
    %v919 = vld [vmem:[#allocation2 + $0x4a8] sm:$0xff]
    %v920 = vld [vmem:[#allocation2 + $0x4b0] sm:$0xff]
    %v921 = vld [vmem:[#allocation2 + $0x4b8] sm:$0xff]
    %v922 = vld [vmem:[#allocation2 + $0x4c0] sm:$0xff]
    %v923 = vld [vmem:[#allocation2 + $0x4c8] sm:$0xff]
    %v924 = vld [vmem:[#allocation2 + $0x4d0] sm:$0xff]
    %v925 = vld [vmem:[#allocation2 + $0x4d8] sm:$0xff]
    %v926 = vld [vmem:[#allocation2 + $0x4e0] sm:$0xff]
    %v927 = vld [vmem:[#allocation2 + $0x4e8] sm:$0xff]
    %v928 = vld [vmem:[#allocation2 + $0x4f0] sm:$0xff]
    %v929 = vld [vmem:[#allocation2 + $0x4f8] sm:$0xff]
    %v930 = vld [vmem:[#allocation2 + $0x500] sm:$0xff]
    %v931 = vld [vmem:[#allocation2 + $0x508] sm:$0xff]
    %v932 = vld [vmem:[#allocation2 + $0x510] sm:$0xff]
    %v933 = vld [vmem:[#allocation2 + $0x518] sm:$0xff]
    %v934 = vld [vmem:[#allocation2 + $0x520] sm:$0xff]
    %v935 = vld [vmem:[#allocation2 + $0x528] sm:$0xff]
    %v936 = vld [vmem:[#allocation2 + $0x530] sm:$0xff]
    %v937 = vld [vmem:[#allocation2 + $0x538] sm:$0xff]
    %v938 = vld [vmem:[#allocation2 + $0x540] sm:$0xff]
    %v939 = vld [vmem:[#allocation2 + $0x548] sm:$0xff]
    %v940 = vld [vmem:[#allocation2 + $0x550] sm:$0xff]
    %v941 = vld [vmem:[#allocation2 + $0x558] sm:$0xff]
    %v942 = vld [vmem:[#allocation2 + $0x560] sm:$0xff]
    %v943 = vld [vmem:[#allocation2 + $0x568] sm:$0xff]
    %v944 = vld [vmem:[#allocation2 + $0x570] sm:$0xff]
    %v945 = vld [vmem:[#allocation2 + $0x578] sm:$0xff]
    %v946 = vld [vmem:[#allocation2 + $0x580] sm:$0xff]
    %v947 = vld [vmem:[#allocation2 + $0x588] sm:$0xff]
    %v948 = vld [vmem:[#allocation2 + $0x590] sm:$0xff]
    %v949 = vld [vmem:[#allocation2 + $0x598] sm:$0xff]
    %v950 = vld [vmem:[#allocation2 + $0x5a0] sm:$0xff]
    %v951 = vld [vmem:[#allocation2 + $0x5a8] sm:$0xff]
    %v952 = vld [vmem:[#allocation2 + $0x5b0] sm:$0xff]
    %v953 = vld [vmem:[#allocation2 + $0x5b8] sm:$0xff]
    %v954 = vld [vmem:[#allocation2 + $0x5c0] sm:$0xff]
    %v955 = vld [vmem:[#allocation2 + $0x5c8] sm:$0xff]
    %v956 = vld [vmem:[#allocation2 + $0x5d0] sm:$0xff]
    %v957 = vld [vmem:[#allocation2 + $0x5d8] sm:$0xff]
    %v958 = vld [vmem:[#allocation2 + $0x5e0] sm:$0xff]
    %v959 = vld [vmem:[#allocation2 + $0x5e8] sm:$0xff]
    %v960 = vld [vmem:[#allocation2 + $0x5f0] sm:$0xff]
    %v961 = vld [vmem:[#allocation2 + $0x5f8] sm:$0xff]
    %v962 = vld [vmem:[#allocation2 + $0x600] sm:$0xff]
    %v963 = vld [vmem:[#allocation2 + $0x608] sm:$0xff]
    %v964 = vld [vmem:[#allocation2 + $0x610] sm:$0xff]
    %v965 = vld [vmem:[#allocation2 + $0x618] sm:$0xff]
    %v966 = vld [vmem:[#allocation2 + $0x620] sm:$0xff]
    %v967 = vld [vmem:[#allocation2 + $0x628] sm:$0xff]
    %v968 = vld [vmem:[#allocation2 + $0x630] sm:$0xff]
    %v969 = vld [vmem:[#allocation2 + $0x638] sm:$0xff]
    %v970 = vld [vmem:[#allocation2 + $0x640] sm:$0xff]
    %v971 = vld [vmem:[#allocation2 + $0x648] sm:$0xff]
    %v972 = vld [vmem:[#allocation2 + $0x650] sm:$0xff]
    %v973 = vld [vmem:[#allocation2 + $0x658] sm:$0xff]
    %v974 = vld [vmem:[#allocation2 + $0x660] sm:$0xff]
    %v975 = vld [vmem:[#allocation2 + $0x668] sm:$0xff]
    %v976 = vld [vmem:[#allocation2 + $0x670] sm:$0xff]
    %v977 = vld [vmem:[#allocation2 + $0x678] sm:$0xff]
    %v978 = vld [vmem:[#allocation2 + $0x680] sm:$0xff]
    %v979 = vld [vmem:[#allocation2 + $0x688] sm:$0xff]
    %v980 = vld [vmem:[#allocation2 + $0x690] sm:$0xff]
    %v981 = vld [vmem:[#allocation2 + $0x698] sm:$0xff]
    %v982 = vld [vmem:[#allocation2 + $0x6a0] sm:$0xff]
    %v983 = vld [vmem:[#allocation2 + $0x6a8] sm:$0xff]
    %v984 = vld [vmem:[#allocation2 + $0x6b0] sm:$0xff]
    %v985 = vld [vmem:[#allocation2 + $0x6b8] sm:$0xff]
    %v986 = vld [vmem:[#allocation2 + $0x6c0] sm:$0xff]
    %v987 = vld [vmem:[#allocation2 + $0x6c8] sm:$0xff]
    %v988 = vld [vmem:[#allocation2 + $0x6d0] sm:$0xff]
    %v989 = vld [vmem:[#allocation2 + $0x6d8] sm:$0xff]
    %v990 = vld [vmem:[#allocation2 + $0x6e0] sm:$0xff]
    %v991 = vld [vmem:[#allocation2 + $0x6e8] sm:$0xff]
    %v992 = vld [vmem:[#allocation2 + $0x6f0] sm:$0xff]
    %v993 = vld [vmem:[#allocation2 + $0x6f8] sm:$0xff]
    %v994 = vld [vmem:[#allocation2 + $0x700] sm:$0xff]
    %v995 = vld [vmem:[#allocation2 + $0x708] sm:$0xff]
    %v996 = vld [vmem:[#allocation2 + $0x710] sm:$0xff]
    %v997 = vld [vmem:[#allocation2 + $0x718] sm:$0xff]
    %v998 = vld [vmem:[#allocation2 + $0x720] sm:$0xff]
    %v999 = vld [vmem:[#allocation2 + $0x728] sm:$0xff]
    %v1000 = vld [vmem:[#allocation2 + $0x730] sm:$0xff]
    %v1001 = vld [vmem:[#allocation2 + $0x738] sm:$0xff]
    %v1002 = vld [vmem:[#allocation2 + $0x740] sm:$0xff]
    %v1003 = vld [vmem:[#allocation2 + $0x748] sm:$0xff]
    %v1004 = vld [vmem:[#allocation2 + $0x750] sm:$0xff]
    %v1005 = vld [vmem:[#allocation2 + $0x758] sm:$0xff]
    %v1006 = vld [vmem:[#allocation2 + $0x760] sm:$0xff]
    %v1007 = vld [vmem:[#allocation2 + $0x768] sm:$0xff]
    %v1008 = vld [vmem:[#allocation2 + $0x770] sm:$0xff]
    %v1009 = vld [vmem:[#allocation2 + $0x778] sm:$0xff]
    %v1010 = vld [vmem:[#allocation2 + $0x780] sm:$0xff]
    %v1011 = vld [vmem:[#allocation2 + $0x788] sm:$0xff]
    %v1012 = vld [vmem:[#allocation2 + $0x790] sm:$0xff]
    %v1013 = vld [vmem:[#allocation2 + $0x798] sm:$0xff]
    %v1014 = vld [vmem:[#allocation2 + $0x7a0] sm:$0xff]
    %v1015 = vld [vmem:[#allocation2 + $0x7a8] sm:$0xff]
    %v1016 = vld [vmem:[#allocation2 + $0x7b0] sm:$0xff]
    %v1017 = vld [vmem:[#allocation2 + $0x7b8] sm:$0xff]
    %v1018 = vld [vmem:[#allocation2 + $0x7c0] sm:$0xff]
    %v1019 = vld [vmem:[#allocation2 + $0x7c8] sm:$0xff]
    %v1020 = vld [vmem:[#allocation2 + $0x7d0] sm:$0xff]
    %v1021 = vld [vmem:[#allocation2 + $0x7d8] sm:$0xff]
    %v1022 = vld [vmem:[#allocation2 + $0x7e0] sm:$0xff]
    %v1023 = vld [vmem:[#allocation2 + $0x7e8] sm:$0xff]
    %v1024 = vld [vmem:[#allocation2 + $0x7f0] sm:$0xff]
    %v1025 = vld [vmem:[#allocation2 + $0x7f8] sm:$0xff]
    %v1026 = vld [vmem:[#allocation2 + $0x800] sm:$0xff]
    %v1027 = vld [vmem:[#allocation2 + $0x808] sm:$0xff]
    %v1028 = vld [vmem:[#allocation2 + $0x810] sm:$0xff]
    %v1029 = vld [vmem:[#allocation2 + $0x818] sm:$0xff]
    %v1030 = vld [vmem:[#allocation2 + $0x820] sm:$0xff]
    %v1031 = vld [vmem:[#allocation2 + $0x828] sm:$0xff]
    %v1032 = vld [vmem:[#allocation2 + $0x830] sm:$0xff]
    %v1033 = vld [vmem:[#allocation2 + $0x838] sm:$0xff]
    %v1034 = vld [vmem:[#allocation2 + $0x840] sm:$0xff]
    %v1035 = vld [vmem:[#allocation2 + $0x848] sm:$0xff]
    %v1036 = vld [vmem:[#allocation2 + $0x850] sm:$0xff]
    %v1037 = vld [vmem:[#allocation2 + $0x858] sm:$0xff]
    %v1038 = vld [vmem:[#allocation2 + $0x860] sm:$0xff]
    %v1039 = vld [vmem:[#allocation2 + $0x868] sm:$0xff]
    %v1040 = vld [vmem:[#allocation2 + $0x870] sm:$0xff]
    %v1041 = vld [vmem:[#allocation2 + $0x878] sm:$0xff]
    %v1042 = vld [vmem:[#allocation2 + $0x880] sm:$0xff]
    %v1043 = vld [vmem:[#allocation2 + $0x888] sm:$0xff]
    %v1044 = vld [vmem:[#allocation2 + $0x890] sm:$0xff]
    %v1045 = vld [vmem:[#allocation2 + $0x898] sm:$0xff]
    %v1046 = vld [vmem:[#allocation2 + $0x8a0] sm:$0xff]
    %v1047 = vld [vmem:[#allocation2 + $0x8a8] sm:$0xff]
    %v1048 = vld [vmem:[#allocation2 + $0x8b0] sm:$0xff]
    %v1049 = vld [vmem:[#allocation2 + $0x8b8] sm:$0xff]
    %v1050 = vld [vmem:[#allocation2 + $0x8c0] sm:$0xff]
    %v1051 = vld [vmem:[#allocation2 + $0x8c8] sm:$0xff]
    %v1052 = vld [vmem:[#allocation2 + $0x8d0] sm:$0xff]
    %v1053 = vld [vmem:[#allocation2 + $0x8d8] sm:$0xff]
    %v1054 = vld [vmem:[#allocation2 + $0x8e0] sm:$0xff]
    %v1055 = vld [vmem:[#allocation2 + $0x8e8] sm:$0xff]
    %v1056 = vld [vmem:[#allocation2 + $0x8f0] sm:$0xff]
    %v1057 = vld [vmem:[#allocation2 + $0x8f8] sm:$0xff]
    %v1058 = vld [vmem:[#allocation2 + $0x900] sm:$0xff]
    %v1059 = vld [vmem:[#allocation2 + $0x908] sm:$0xff]
    %v1060 = vld [vmem:[#allocation2 + $0x910] sm:$0xff]
    %v1061 = vld [vmem:[#allocation2 + $0x918] sm:$0xff]
    %v1062 = vld [vmem:[#allocation2 + $0x920] sm:$0xff]
    %v1063 = vld [vmem:[#allocation2 + $0x928] sm:$0xff]
    %v1064 = vld [vmem:[#allocation2 + $0x930] sm:$0xff]
    %v1065 = vld [vmem:[#allocation2 + $0x938] sm:$0xff]
    %v1066 = vld [vmem:[#allocation2 + $0x940] sm:$0xff]
    %v1067 = vld [vmem:[#allocation2 + $0x948] sm:$0xff]
    %v1068 = vld [vmem:[#allocation2 + $0x950] sm:$0xff]
    %v1069 = vld [vmem:[#allocation2 + $0x958] sm:$0xff]
    %v1070 = vld [vmem:[#allocation2 + $0x960] sm:$0xff]
    %v1071 = vld [vmem:[#allocation2 + $0x968] sm:$0xff]
    %v1072 = vld [vmem:[#allocation2 + $0x970] sm:$0xff]
    %v1073 = vld [vmem:[#allocation2 + $0x978] sm:$0xff]
    %v1074 = vld [vmem:[#allocation2 + $0x980] sm:$0xff]
    %v1075 = vld [vmem:[#allocation2 + $0x988] sm:$0xff]
    %v1076 = vld [vmem:[#allocation2 + $0x990] sm:$0xff]
    %v1077 = vld [vmem:[#allocation2 + $0x998] sm:$0xff]
    %v1078 = vld [vmem:[#allocation2 + $0x9a0] sm:$0xff]
    %v1079 = vld [vmem:[#allocation2 + $0x9a8] sm:$0xff]
    %v1080 = vld [vmem:[#allocation2 + $0x9b0] sm:$0xff]
    %v1081 = vld [vmem:[#allocation2 + $0x9b8] sm:$0xff]
    %v1082 = vld [vmem:[#allocation2 + $0x9c0] sm:$0xff]
    %v1083 = vld [vmem:[#allocation2 + $0x9c8] sm:$0xff]
    %v1084 = vld [vmem:[#allocation2 + $0x9d0] sm:$0xff]
    %v1085 = vld [vmem:[#allocation2 + $0x9d8] sm:$0xff]
    %v1086 = vld [vmem:[#allocation2 + $0x9e0] sm:$0xff]
    %v1087 = vld [vmem:[#allocation2 + $0x9e8] sm:$0xff]
    %v1088 = vld [vmem:[#allocation2 + $0x9f0] sm:$0xff]
    %v1089 = vld [vmem:[#allocation2 + $0x9f8] sm:$0xff]
    %v1090 = vld [vmem:[#allocation2 + $0xa00] sm:$0xff]
    %v1091 = vld [vmem:[#allocation2 + $0xa08] sm:$0xff]
    %v1092 = vld [vmem:[#allocation2 + $0xa10] sm:$0xff]
    %v1093 = vld [vmem:[#allocation2 + $0xa18] sm:$0xff]
    %v1094 = vld [vmem:[#allocation2 + $0xa20] sm:$0xff]
    %v1095 = vld [vmem:[#allocation2 + $0xa28] sm:$0xff]
    %v1096 = vld [vmem:[#allocation2 + $0xa30] sm:$0xff]
    %v1097 = vld [vmem:[#allocation2 + $0xa38] sm:$0xff]
    %v1098 = vld [vmem:[#allocation2 + $0xa40] sm:$0xff]
    %v1099 = vld [vmem:[#allocation2 + $0xa48] sm:$0xff]
    %v1100 = vld [vmem:[#allocation2 + $0xa50] sm:$0xff]
    %v1101 = vld [vmem:[#allocation2 + $0xa58] sm:$0xff]
    %v1102 = vld [vmem:[#allocation2 + $0xa60] sm:$0xff]
    %v1103 = vld [vmem:[#allocation2 + $0xa68] sm:$0xff]
    %v1104 = vld [vmem:[#allocation2 + $0xa70] sm:$0xff]
    %v1105 = vld [vmem:[#allocation2 + $0xa78] sm:$0xff]
    %v1106 = vld [vmem:[#allocation2 + $0xa80] sm:$0xff]
    %v1107 = vld [vmem:[#allocation2 + $0xa88] sm:$0xff]
    %v1108 = vld [vmem:[#allocation2 + $0xa90] sm:$0xff]
    %v1109 = vld [vmem:[#allocation2 + $0xa98] sm:$0xff]
    %v1110 = vld [vmem:[#allocation2 + $0xaa0] sm:$0xff]
    %v1111 = vld [vmem:[#allocation2 + $0xaa8] sm:$0xff]
    %v1112 = vld [vmem:[#allocation2 + $0xab0] sm:$0xff]
    %v1113 = vld [vmem:[#allocation2 + $0xab8] sm:$0xff]
    %v1114 = vld [vmem:[#allocation2 + $0xac0] sm:$0xff]
    %v1115 = vld [vmem:[#allocation2 + $0xac8] sm:$0xff]
    %v1116 = vld [vmem:[#allocation2 + $0xad0] sm:$0xff]
    %v1117 = vld [vmem:[#allocation2 + $0xad8] sm:$0xff]
    %v1118 = vld [vmem:[#allocation2 + $0xae0] sm:$0xff]
    %v1119 = vld [vmem:[#allocation2 + $0xae8] sm:$0xff]
    %v1120 = vld [vmem:[#allocation2 + $0xaf0] sm:$0xff]
    %v1121 = vld [vmem:[#allocation2 + $0xaf8] sm:$0xff]
    %v1122 = vld [vmem:[#allocation2 + $0xb00] sm:$0xff]
    %v1123 = vld [vmem:[#allocation2 + $0xb08] sm:$0xff]
    %v1124 = vld [vmem:[#allocation2 + $0xb10] sm:$0xff]
    %v1125 = vld [vmem:[#allocation2 + $0xb18] sm:$0xff]
    %v1126 = vld [vmem:[#allocation2 + $0xb20] sm:$0xff]
    %v1127 = vld [vmem:[#allocation2 + $0xb28] sm:$0xff]
    %v1128 = vld [vmem:[#allocation2 + $0xb30] sm:$0xff]
    %v1129 = vld [vmem:[#allocation2 + $0xb38] sm:$0xff]
    %v1130 = vld [vmem:[#allocation2 + $0xb40] sm:$0xff]
    %v1131 = vld [vmem:[#allocation2 + $0xb48] sm:$0xff]
    %v1132 = vld [vmem:[#allocation2 + $0xb50] sm:$0xff]
    %v1133 = vld [vmem:[#allocation2 + $0xb58] sm:$0xff]
    %v1134 = vld [vmem:[#allocation2 + $0xb60] sm:$0xff]
    %v1135 = vld [vmem:[#allocation2 + $0xb68] sm:$0xff]
    %v1136 = vld [vmem:[#allocation2 + $0xb70] sm:$0xff]
    %v1137 = vld [vmem:[#allocation2 + $0xb78] sm:$0xff]
    %v1138 = vld [vmem:[#allocation2 + $0xb80] sm:$0xff]
    %v1139 = vld [vmem:[#allocation2 + $0xb88] sm:$0xff]
    %v1140 = vld [vmem:[#allocation2 + $0xb90] sm:$0xff]
    %v1141 = vld [vmem:[#allocation2 + $0xb98] sm:$0xff]
    %v1142 = vld [vmem:[#allocation2 + $0xba0] sm:$0xff]
    %v1143 = vld [vmem:[#allocation2 + $0xba8] sm:$0xff]
    %v1144 = vld [vmem:[#allocation2 + $0xbb0] sm:$0xff]
    %v1145 = vld [vmem:[#allocation2 + $0xbb8] sm:$0xff]
    %v1146 = vld [vmem:[#allocation2 + $0xbc0] sm:$0xff]
    %v1147 = vld [vmem:[#allocation2 + $0xbc8] sm:$0xff]
    %v1148 = vld [vmem:[#allocation2 + $0xbd0] sm:$0xff]
    %v1149 = vld [vmem:[#allocation2 + $0xbd8] sm:$0xff]
    %v1150 = vld [vmem:[#allocation2 + $0xbe0] sm:$0xff]
    %v1151 = vld [vmem:[#allocation2 + $0xbe8] sm:$0xff]
    %v1152 = vld [vmem:[#allocation2 + $0xbf0] sm:$0xff]
    %v1153 = vld [vmem:[#allocation2 + $0xbf8] sm:$0xff]
    %v1154 = vld [vmem:[#allocation2 + $0xc00] sm:$0xff]
    %v1155 = vld [vmem:[#allocation2 + $0xc08] sm:$0xff]
    %v1156 = vld [vmem:[#allocation2 + $0xc10] sm:$0xff]
    %v1157 = vld [vmem:[#allocation2 + $0xc18] sm:$0xff]
    %v1158 = vld [vmem:[#allocation2 + $0xc20] sm:$0xff]
    %v1159 = vld [vmem:[#allocation2 + $0xc28] sm:$0xff]
    %v1160 = vld [vmem:[#allocation2 + $0xc30] sm:$0xff]
    %v1161 = vld [vmem:[#allocation2 + $0xc38] sm:$0xff]
    %v1162 = vld [vmem:[#allocation2 + $0xc40] sm:$0xff]
    %v1163 = vld [vmem:[#allocation2 + $0xc48] sm:$0xff]
    %v1164 = vld [vmem:[#allocation2 + $0xc50] sm:$0xff]
    %v1165 = vld [vmem:[#allocation2 + $0xc58] sm:$0xff]
    %v1166 = vld [vmem:[#allocation2 + $0xc60] sm:$0xff]
    %v1167 = vld [vmem:[#allocation2 + $0xc68] sm:$0xff]
    %v1168 = vld [vmem:[#allocation2 + $0xc70] sm:$0xff]
    %v1169 = vld [vmem:[#allocation2 + $0xc78] sm:$0xff]
    %v1170 = vld [vmem:[#allocation2 + $0xc80] sm:$0xff]
    %v1171 = vld [vmem:[#allocation2 + $0xc88] sm:$0xff]
    %v1172 = vld [vmem:[#allocation2 + $0xc90] sm:$0xff]
    %v1173 = vld [vmem:[#allocation2 + $0xc98] sm:$0xff]
    %v1174 = vld [vmem:[#allocation2 + $0xca0] sm:$0xff]
    %v1175 = vld [vmem:[#allocation2 + $0xca8] sm:$0xff]
    %v1176 = vld [vmem:[#allocation2 + $0xcb0] sm:$0xff]
    %v1177 = vld [vmem:[#allocation2 + $0xcb8] sm:$0xff]
    %v1178 = vld [vmem:[#allocation2 + $0xcc0] sm:$0xff]
    %v1179 = vld [vmem:[#allocation2 + $0xcc8] sm:$0xff]
    %v1180 = vld [vmem:[#allocation2 + $0xcd0] sm:$0xff]
    %v1181 = vld [vmem:[#allocation2 + $0xcd8] sm:$0xff]
    %v1182 = vld [vmem:[#allocation2 + $0xce0] sm:$0xff]
    %v1183 = vld [vmem:[#allocation2 + $0xce8] sm:$0xff]
    %v1184 = vld [vmem:[#allocation2 + $0xcf0] sm:$0xff]
    %v1185 = vld [vmem:[#allocation2 + $0xcf8] sm:$0xff]
    %v1186 = vld [vmem:[#allocation2 + $0xd00] sm:$0xff]
    %v1187 = vld [vmem:[#allocation2 + $0xd08] sm:$0xff]
    %v1188 = vld [vmem:[#allocation2 + $0xd10] sm:$0xff]
    %v1189 = vld [vmem:[#allocation2 + $0xd18] sm:$0xff]
    %v1190 = vld [vmem:[#allocation2 + $0xd20] sm:$0xff]
    %v1191 = vld [vmem:[#allocation2 + $0xd28] sm:$0xff]
    %v1192 = vld [vmem:[#allocation2 + $0xd30] sm:$0xff]
    %v1193 = vld [vmem:[#allocation2 + $0xd38] sm:$0xff]
    %v1194 = vld [vmem:[#allocation2 + $0xd40] sm:$0xff]
    %v1195 = vld [vmem:[#allocation2 + $0xd48] sm:$0xff]
    %v1196 = vld [vmem:[#allocation2 + $0xd50] sm:$0xff]
    %v1197 = vld [vmem:[#allocation2 + $0xd58] sm:$0xff]
    %v1198 = vld [vmem:[#allocation2 + $0xd60] sm:$0xff]
    %v1199 = vld [vmem:[#allocation2 + $0xd68] sm:$0xff]
    %v1200 = vld [vmem:[#allocation2 + $0xd70] sm:$0xff]
    %v1201 = vld [vmem:[#allocation2 + $0xd78] sm:$0xff]
    %v1202 = vld [vmem:[#allocation2 + $0xd80] sm:$0xff]
    %v1203 = vld [vmem:[#allocation2 + $0xd88] sm:$0xff]
    %v1204 = vld [vmem:[#allocation2 + $0xd90] sm:$0xff]
    %v1205 = vld [vmem:[#allocation2 + $0xd98] sm:$0xff]
    %v1206 = vld [vmem:[#allocation2 + $0xda0] sm:$0xff]
    %v1207 = vld [vmem:[#allocation2 + $0xda8] sm:$0xff]
    %v1208 = vld [vmem:[#allocation2 + $0xdb0] sm:$0xff]
    %v1209 = vld [vmem:[#allocation2 + $0xdb8] sm:$0xff]
    %v1210 = vld [vmem:[#allocation2 + $0xdc0] sm:$0xff]
    %v1211 = vld [vmem:[#allocation2 + $0xdc8] sm:$0xff]
    %v1212 = vld [vmem:[#allocation2 + $0xdd0] sm:$0xff]
    %v1213 = vld [vmem:[#allocation2 + $0xdd8] sm:$0xff]
    %v1214 = vld [vmem:[#allocation2 + $0xde0] sm:$0xff]
    %v1215 = vld [vmem:[#allocation2 + $0xde8] sm:$0xff]
    %v1216 = vld [vmem:[#allocation2 + $0xdf0] sm:$0xff]
    %v1217 = vld [vmem:[#allocation2 + $0xdf8] sm:$0xff]
    %v1218 = vld [vmem:[#allocation2 + $0xe00] sm:$0xff]
    %v1219 = vld [vmem:[#allocation2 + $0xe08] sm:$0xff]
    %v1220 = vld [vmem:[#allocation2 + $0xe10] sm:$0xff]
    %v1221 = vld [vmem:[#allocation2 + $0xe18] sm:$0xff]
    %v1222 = vld [vmem:[#allocation2 + $0xe20] sm:$0xff]
    %v1223 = vld [vmem:[#allocation2 + $0xe28] sm:$0xff]
    %v1224 = vld [vmem:[#allocation2 + $0xe30] sm:$0xff]
    %v1225 = vld [vmem:[#allocation2 + $0xe38] sm:$0xff]
    %v1226 = vld [vmem:[#allocation2 + $0xe40] sm:$0xff]
    %v1227 = vld [vmem:[#allocation2 + $0xe48] sm:$0xff]
    %v1228 = vld [vmem:[#allocation2 + $0xe50] sm:$0xff]
    %v1229 = vld [vmem:[#allocation2 + $0xe58] sm:$0xff]
    %v1230 = vld [vmem:[#allocation2 + $0xe60] sm:$0xff]
    %v1231 = vld [vmem:[#allocation2 + $0xe68] sm:$0xff]
    %v1232 = vld [vmem:[#allocation2 + $0xe70] sm:$0xff]
    %v1233 = vld [vmem:[#allocation2 + $0xe78] sm:$0xff]
    %v1234 = vld [vmem:[#allocation2 + $0xe80] sm:$0xff]
    %v1235 = vld [vmem:[#allocation2 + $0xe88] sm:$0xff]
    %v1236 = vld [vmem:[#allocation2 + $0xe90] sm:$0xff]
    %v1237 = vld [vmem:[#allocation2 + $0xe98] sm:$0xff]
    %v1238 = vld [vmem:[#allocation2 + $0xea0] sm:$0xff]
    %v1239 = vld [vmem:[#allocation2 + $0xea8] sm:$0xff]
    %v1240 = vld [vmem:[#allocation2 + $0xeb0] sm:$0xff]
    %v1241 = vld [vmem:[#allocation2 + $0xeb8] sm:$0xff]
    %v1242 = vld [vmem:[#allocation2 + $0xec0] sm:$0xff]
    %v1243 = vld [vmem:[#allocation2 + $0xec8] sm:$0xff]
    %v1244 = vld [vmem:[#allocation2 + $0xed0] sm:$0xff]
    %v1245 = vld [vmem:[#allocation2 + $0xed8] sm:$0xff]
    %v1246 = vld [vmem:[#allocation2 + $0xee0] sm:$0xff]
    %v1247 = vld [vmem:[#allocation2 + $0xee8] sm:$0xff]
    %v1248 = vld [vmem:[#allocation2 + $0xef0] sm:$0xff]
    %v1249 = vld [vmem:[#allocation2 + $0xef8] sm:$0xff]
    %v1250 = vld [vmem:[#allocation2 + $0xf00] sm:$0xff]
    %v1251 = vld [vmem:[#allocation2 + $0xf08] sm:$0xff]
    %v1252 = vld [vmem:[#allocation2 + $0xf10] sm:$0xff]
    %v1253 = vld [vmem:[#allocation2 + $0xf18] sm:$0xff]
    %v1254 = vld [vmem:[#allocation2 + $0xf20] sm:$0xff]
    %v1255 = vld [vmem:[#allocation2 + $0xf28] sm:$0xff]
    %v1256 = vld [vmem:[#allocation2 + $0xf30] sm:$0xff]
    %v1257 = vld [vmem:[#allocation2 + $0xf38] sm:$0xff]
    %v1258 = vld [vmem:[#allocation2 + $0xf40] sm:$0xff]
    %v1259 = vld [vmem:[#allocation2 + $0xf48] sm:$0xff]
    %v1260 = vld [vmem:[#allocation2 + $0xf50] sm:$0xff]
    %v1261 = vld [vmem:[#allocation2 + $0xf58] sm:$0xff]
    %v1262 = vld [vmem:[#allocation2 + $0xf60] sm:$0xff]
    %v1263 = vld [vmem:[#allocation2 + $0xf68] sm:$0xff]
    %v1264 = vld [vmem:[#allocation2 + $0xf70] sm:$0xff]
    %v1265 = vld [vmem:[#allocation2 + $0xf78] sm:$0xff]
    %v1266 = vld [vmem:[#allocation2 + $0xf80] sm:$0xff]
    %v1267 = vld [vmem:[#allocation2 + $0xf88] sm:$0xff]
    %v1268 = vld [vmem:[#allocation2 + $0xf90] sm:$0xff]
    %v1269 = vld [vmem:[#allocation2 + $0xf98] sm:$0xff]
    %v1270 = vld [vmem:[#allocation2 + $0xfa0] sm:$0xff]
    %v1271 = vld [vmem:[#allocation2 + $0xfa8] sm:$0xff]
    %v1272 = vld [vmem:[#allocation2 + $0xfb0] sm:$0xff]
    %v1273 = vld [vmem:[#allocation2 + $0xfb8] sm:$0xff]
    %v1274 = vld [vmem:[#allocation2 + $0xfc0] sm:$0xff]
    %v1275 = vld [vmem:[#allocation2 + $0xfc8] sm:$0xff]
    %v1276 = vld [vmem:[#allocation2 + $0xfd0] sm:$0xff]
    %v1277 = vld [vmem:[#allocation2 + $0xfd8] sm:$0xff]
    %v1278 = vld [vmem:[#allocation2 + $0xfe0] sm:$0xff]
    %v1279 = vld [vmem:[#allocation2 + $0xfe8] sm:$0xff]
    %v1280 = vld [vmem:[#allocation2 + $0xff0] sm:$0xff]
    %v1281 = vld [vmem:[#allocation2 + $0xff8] sm:$0xff]
    %1282 = vmatprep.subr.bf16.mxu0 %v771
    %1283 = vmatpush1.bf16.msra.mxu0 %v770
    %1284 = vmatprep.subr.bf16.mxu0 %v779
    %1285 = vmatpush1.bf16.msra.mxu0 %v778
    %1286 = vmatprep.subr.bf16.mxu0 %v787
    %1287 = vmatpush1.bf16.msra.mxu0 %v786
    %1288 = vmatprep.subr.bf16.mxu0 %v795
    %1289 = vmatpush1.bf16.msra.mxu0 %v794
    %1290 = vmatprep.subr.bf16.mxu0 %v803
    %1291 = vmatpush1.bf16.msra.mxu0 %v802
    %1292 = vmatprep.subr.bf16.mxu0 %v811
    %1293 = vmatpush1.bf16.msra.mxu0 %v810
    %1294 = vmatprep.subr.bf16.mxu0 %v819
    %1295 = vmatpush1.bf16.msra.mxu0 %v818
    %1296 = vmatprep.subr.bf16.mxu0 %v827
    %1297 = vmatpush1.bf16.msra.mxu0 %v826
    %1298 = vmatprep.subr.bf16.mxu0 %v835
    %1299 = vmatpush1.bf16.msra.mxu0 %v834
    %1300 = vmatprep.subr.bf16.mxu0 %v843
    %1301 = vmatpush1.bf16.msra.mxu0 %v842
    %1302 = vmatprep.subr.bf16.mxu0 %v851
    %1303 = vmatpush1.bf16.msra.mxu0 %v850
    %1304 = vmatprep.subr.bf16.mxu0 %v859
    %1305 = vmatpush1.bf16.msra.mxu0 %v858
    %1306 = vmatprep.subr.bf16.mxu0 %v867
    %1307 = vmatpush1.bf16.msra.mxu0 %v866
    %1308 = vmatprep.subr.bf16.mxu0 %v875
    %1309 = vmatpush1.bf16.msra.mxu0 %v874
    %1310 = vmatprep.subr.bf16.mxu0 %v883
    %1311 = vmatpush1.bf16.msra.mxu0 %v882
    %1312 = vmatprep.subr.bf16.mxu0 %v891
    %1313 = vmatpush1.bf16.msra.mxu0 %v890
    %1314 = vmatprep.mubr.bf16.mxu0 %v763
    %1315 = vmatmul.mubr.bf16.gmra.mrb[0].mxu0 %v762
    %v1316 = vpop.f32.mrb[0].mxu0
    %v1317 = vadd.f32 0.0, %v1316
    %v1318 = vpop.f32.mrb[0].mxu0
    %v1319 = vadd.f32 0.0, %v1318
    %v1320 = vpop.f32.mrb[0].mxu0
    %v1321 = vpop.f32.mrb[0].mxu0
    %1322 = vdwg.mxu0
    %1323 = vmatprep.subr.bf16.mxu0 %v899
    %1324 = vmatpush1.bf16.msra.mxu0 %v898
    %1325 = vmatprep.subr.bf16.mxu0 %v907
    %1326 = vmatpush1.bf16.msra.mxu0 %v906
    %1327 = vmatprep.subr.bf16.mxu0 %v915
    %1328 = vmatpush1.bf16.msra.mxu0 %v914
    %1329 = vmatprep.subr.bf16.mxu0 %v923
    %1330 = vmatpush1.bf16.msra.mxu0 %v922
    %1331 = vmatprep.subr.bf16.mxu0 %v931
    %1332 = vmatpush1.bf16.msra.mxu0 %v930
    %1333 = vmatprep.subr.bf16.mxu0 %v939
    %1334 = vmatpush1.bf16.msra.mxu0 %v938
    %1335 = vmatprep.subr.bf16.mxu0 %v947
    %1336 = vmatpush1.bf16.msra.mxu0 %v946
    %1337 = vmatprep.subr.bf16.mxu0 %v955
    %1338 = vmatpush1.bf16.msra.mxu0 %v954
    %1339 = vmatprep.subr.bf16.mxu0 %v963
    %1340 = vmatpush1.bf16.msra.mxu0 %v962
    %1341 = vmatprep.subr.bf16.mxu0 %v971
    %1342 = vmatpush1.bf16.msra.mxu0 %v970
    %1343 = vmatprep.subr.bf16.mxu0 %v979
    %1344 = vmatpush1.bf16.msra.mxu0 %v978
    %1345 = vmatprep.subr.bf16.mxu0 %v987
    %1346 = vmatpush1.bf16.msra.mxu0 %v986
    %1347 = vmatprep.subr.bf16.mxu0 %v995
    %1348 = vmatpush1.bf16.msra.mxu0 %v994
    %1349 = vmatprep.subr.bf16.mxu0 %v1003
    %1350 = vmatpush1.bf16.msra.mxu0 %v1002
    %1351 = vmatprep.subr.bf16.mxu0 %v1011
    %1352 = vmatpush1.bf16.msra.mxu0 %v1010
    %1353 = vmatprep.subr.bf16.mxu0 %v1019
    %1354 = vmatpush1.bf16.msra.mxu0 %v1018
    %1355 = vmatprep.mubr.bf16.mxu0 %v765
    %1356 = vmatmul.mubr.bf16.gmra.mrb[0].mxu0 %v764
    %v1357 = vpop.f32.mrb[0].mxu0
    %v1358 = vadd.f32 %v1317, %v1357
    %v1359 = vpop.f32.mrb[0].mxu0
    %v1360 = vadd.f32 %v1319, %v1359
    %v1361 = vpop.f32.mrb[0].mxu0
    %v1362 = vpop.f32.mrb[0].mxu0
    %1363 = vdwg.mxu0
    %1364 = vmatprep.subr.bf16.mxu0 %v1027
    %1365 = vmatpush1.bf16.msra.mxu0 %v1026
    %1366 = vmatprep.subr.bf16.mxu0 %v1035
    %1367 = vmatpush1.bf16.msra.mxu0 %v1034
    %1368 = vmatprep.subr.bf16.mxu0 %v1043
    %1369 = vmatpush1.bf16.msra.mxu0 %v1042
    %1370 = vmatprep.subr.bf16.mxu0 %v1051
    %1371 = vmatpush1.bf16.msra.mxu0 %v1050
    %1372 = vmatprep.subr.bf16.mxu0 %v1059
    %1373 = vmatpush1.bf16.msra.mxu0 %v1058
    %1374 = vmatprep.subr.bf16.mxu0 %v1067
    %1375 = vmatpush1.bf16.msra.mxu0 %v1066
    %1376 = vmatprep.subr.bf16.mxu0 %v1075
    %1377 = vmatpush1.bf16.msra.mxu0 %v1074
    %1378 = vmatprep.subr.bf16.mxu0 %v1083
    %1379 = vmatpush1.bf16.msra.mxu0 %v1082
    %1380 = vmatprep.subr.bf16.mxu0 %v1091
    %1381 = vmatpush1.bf16.msra.mxu0 %v1090
    %1382 = vmatprep.subr.bf16.mxu0 %v1099
    %1383 = vmatpush1.bf16.msra.mxu0 %v1098
    %1384 = vmatprep.subr.bf16.mxu0 %v1107
    %1385 = vmatpush1.bf16.msra.mxu0 %v1106
    %1386 = vmatprep.subr.bf16.mxu0 %v1115
    %1387 = vmatpush1.bf16.msra.mxu0 %v1114
    %1388 = vmatprep.subr.bf16.mxu0 %v1123
    %1389 = vmatpush1.bf16.msra.mxu0 %v1122
    %1390 = vmatprep.subr.bf16.mxu0 %v1131
    %1391 = vmatpush1.bf16.msra.mxu0 %v1130
    %1392 = vmatprep.subr.bf16.mxu0 %v1139
    %1393 = vmatpush1.bf16.msra.mxu0 %v1138
    %1394 = vmatprep.subr.bf16.mxu0 %v1147
    %1395 = vmatpush1.bf16.msra.mxu0 %v1146
    %1396 = vmatprep.mubr.bf16.mxu0 %v767
    %1397 = vmatmul.mubr.bf16.gmra.mrb[0].mxu0 %v766
    %v1398 = vpop.f32.mrb[0].mxu0
    %v1399 = vadd.f32 %v1358, %v1398
    %v1400 = vpop.f32.mrb[0].mxu0
    %v1401 = vadd.f32 %v1360, %v1400
    %v1402 = vpop.f32.mrb[0].mxu0
    %v1403 = vpop.f32.mrb[0].mxu0
    %1404 = vdwg.mxu0
    %1405 = vmatprep.subr.bf16.mxu0 %v1155
    %1406 = vmatpush1.bf16.msra.mxu0 %v1154
    %1407 = vmatprep.subr.bf16.mxu0 %v1163
    %1408 = vmatpush1.bf16.msra.mxu0 %v1162
    %1409 = vmatprep.subr.bf16.mxu0 %v1171
    %1410 = vmatpush1.bf16.msra.mxu0 %v1170
    %1411 = vmatprep.subr.bf16.mxu0 %v1179
    %1412 = vmatpush1.bf16.msra.mxu0 %v1178
    %1413 = vmatprep.subr.bf16.mxu0 %v1187
    %1414 = vmatpush1.bf16.msra.mxu0 %v1186
    %1415 = vmatprep.subr.bf16.mxu0 %v1195
    %1416 = vmatpush1.bf16.msra.mxu0 %v1194
    %1417 = vmatprep.subr.bf16.mxu0 %v1203
    %1418 = vmatpush1.bf16.msra.mxu0 %v1202
    %1419 = vmatprep.subr.bf16.mxu0 %v1211
    %1420 = vmatpush1.bf16.msra.mxu0 %v1210
    %1421 = vmatprep.subr.bf16.mxu0 %v1219
    %1422 = vmatpush1.bf16.msra.mxu0 %v1218
    %1423 = vmatprep.subr.bf16.mxu0 %v1227
    %1424 = vmatpush1.bf16.msra.mxu0 %v1226
    %1425 = vmatprep.subr.bf16.mxu0 %v1235
    %1426 = vmatpush1.bf16.msra.mxu0 %v1234
    %1427 = vmatprep.subr.bf16.mxu0 %v1243
    %1428 = vmatpush1.bf16.msra.mxu0 %v1242
    %1429 = vmatprep.subr.bf16.mxu0 %v1251
    %1430 = vmatpush1.bf16.msra.mxu0 %v1250
    %1431 = vmatprep.subr.bf16.mxu0 %v1259
    %1432 = vmatpush1.bf16.msra.mxu0 %v1258
    %1433 = vmatprep.subr.bf16.mxu0 %v1267
    %1434 = vmatpush1.bf16.msra.mxu0 %v1266
    %1435 = vmatprep.subr.bf16.mxu0 %v1275
    %1436 = vmatpush1.bf16.msra.mxu0 %v1274
    %1437 = vmatprep.mubr.bf16.mxu0 %v769
    %1438 = vmatmul.mubr.bf16.gmra.mrb[0].mxu0 %v768
    %v1439 = vpop.f32.mrb[0].mxu0
    %v1440 = vadd.f32 %v1399, %v1439
    %v1441 = vpop.f32.mrb[0].mxu0
    %v1442 = vadd.f32 %v1401, %v1441
    %v1443 = vpop.f32.mrb[0].mxu0
    %v1444 = vpop.f32.mrb[0].mxu0
    %1445 = vdwg.mxu0
    %1446 = vmatprep.subr.bf16.mxu0 %v773
    %1447 = vmatpush1.bf16.msra.mxu0 %v772
    %1448 = vmatprep.subr.bf16.mxu0 %v781
    %1449 = vmatpush1.bf16.msra.mxu0 %v780
    %1450 = vmatprep.subr.bf16.mxu0 %v789
    %1451 = vmatpush1.bf16.msra.mxu0 %v788
    %1452 = vmatprep.subr.bf16.mxu0 %v797
    %1453 = vmatpush1.bf16.msra.mxu0 %v796
    %1454 = vmatprep.subr.bf16.mxu0 %v805
    %1455 = vmatpush1.bf16.msra.mxu0 %v804
    %1456 = vmatprep.subr.bf16.mxu0 %v813
    %1457 = vmatpush1.bf16.msra.mxu0 %v812
    %1458 = vmatprep.subr.bf16.mxu0 %v821
    %1459 = vmatpush1.bf16.msra.mxu0 %v820
    %1460 = vmatprep.subr.bf16.mxu0 %v829
    %1461 = vmatpush1.bf16.msra.mxu0 %v828
    %1462 = vmatprep.subr.bf16.mxu0 %v837
    %1463 = vmatpush1.bf16.msra.mxu0 %v836
    %1464 = vmatprep.subr.bf16.mxu0 %v845
    %1465 = vmatpush1.bf16.msra.mxu0 %v844
    %1466 = vmatprep.subr.bf16.mxu0 %v853
    %1467 = vmatpush1.bf16.msra.mxu0 %v852
    %1468 = vmatprep.subr.bf16.mxu0 %v861
    %1469 = vmatpush1.bf16.msra.mxu0 %v860
    %1470 = vmatprep.subr.bf16.mxu0 %v869
    %1471 = vmatpush1.bf16.msra.mxu0 %v868
    %1472 = vmatprep.subr.bf16.mxu0 %v877
    %1473 = vmatpush1.bf16.msra.mxu0 %v876
    %1474 = vmatprep.subr.bf16.mxu0 %v885
    %1475 = vmatpush1.bf16.msra.mxu0 %v884
    %1476 = vmatprep.subr.bf16.mxu0 %v893
    %1477 = vmatpush1.bf16.msra.mxu0 %v892
    %1478 = vmatprep.mubr.bf16.mxu0 %v763
    %1479 = vmatmul.mubr.bf16.gmra.mrb[0].mxu0 %v762
    %v1480 = vpop.f32.mrb[0].mxu0
    %v1481 = vadd.f32 0.0, %v1480
    %v1482 = vpop.f32.mrb[0].mxu0
    %v1483 = vadd.f32 0.0, %v1482
    %v1484 = vpop.f32.mrb[0].mxu0
    %v1485 = vpop.f32.mrb[0].mxu0
    %1486 = vdwg.mxu0
    %1487 = vmatprep.subr.bf16.mxu0 %v901
    %1488 = vmatpush1.bf16.msra.mxu0 %v900
    %1489 = vmatprep.subr.bf16.mxu0 %v909
    %1490 = vmatpush1.bf16.msra.mxu0 %v908
    %1491 = vmatprep.subr.bf16.mxu0 %v917
    %1492 = vmatpush1.bf16.msra.mxu0 %v916
    %1493 = vmatprep.subr.bf16.mxu0 %v925
    %1494 = vmatpush1.bf16.msra.mxu0 %v924
    %1495 = vmatprep.subr.bf16.mxu0 %v933
    %1496 = vmatpush1.bf16.msra.mxu0 %v932
    %1497 = vmatprep.subr.bf16.mxu0 %v941
    %1498 = vmatpush1.bf16.msra.mxu0 %v940
    %1499 = vmatprep.subr.bf16.mxu0 %v949
    %1500 = vmatpush1.bf16.msra.mxu0 %v948
    %1501 = vmatprep.subr.bf16.mxu0 %v957
    %1502 = vmatpush1.bf16.msra.mxu0 %v956
    %1503 = vmatprep.subr.bf16.mxu0 %v965
    %1504 = vmatpush1.bf16.msra.mxu0 %v964
    %1505 = vmatprep.subr.bf16.mxu0 %v973
    %1506 = vmatpush1.bf16.msra.mxu0 %v972
    %1507 = vmatprep.subr.bf16.mxu0 %v981
    %1508 = vmatpush1.bf16.msra.mxu0 %v980
    %1509 = vmatprep.subr.bf16.mxu0 %v989
    %1510 = vmatpush1.bf16.msra.mxu0 %v988
    %1511 = vmatprep.subr.bf16.mxu0 %v997
    %1512 = vmatpush1.bf16.msra.mxu0 %v996
    %1513 = vmatprep.subr.bf16.mxu0 %v1005
    %1514 = vmatpush1.bf16.msra.mxu0 %v1004
    %1515 = vmatprep.subr.bf16.mxu0 %v1013
    %1516 = vmatpush1.bf16.msra.mxu0 %v1012
    %1517 = vmatprep.subr.bf16.mxu0 %v1021
    %1518 = vmatpush1.bf16.msra.mxu0 %v1020
    %1519 = vmatprep.mubr.bf16.mxu0 %v765
    %1520 = vmatmul.mubr.bf16.gmra.mrb[0].mxu0 %v764
    %v1521 = vpop.f32.mrb[0].mxu0
    %v1522 = vadd.f32 %v1481, %v1521
    %v1523 = vpop.f32.mrb[0].mxu0
    %v1524 = vadd.f32 %v1483, %v1523
    %v1525 = vpop.f32.mrb[0].mxu0
    %v1526 = vpop.f32.mrb[0].mxu0
    %1527 = vdwg.mxu0
    %1528 = vmatprep.subr.bf16.mxu0 %v1029
    %1529 = vmatpush1.bf16.msra.mxu0 %v1028
    %1530 = vmatprep.subr.bf16.mxu0 %v1037
    %1531 = vmatpush1.bf16.msra.mxu0 %v1036
    %1532 = vmatprep.subr.bf16.mxu0 %v1045
    %1533 = vmatpush1.bf16.msra.mxu0 %v1044
    %1534 = vmatprep.subr.bf16.mxu0 %v1053
    %1535 = vmatpush1.bf16.msra.mxu0 %v1052
    %1536 = vmatprep.subr.bf16.mxu0 %v1061
    %1537 = vmatpush1.bf16.msra.mxu0 %v1060
    %1538 = vmatprep.subr.bf16.mxu0 %v1069
    %1539 = vmatpush1.bf16.msra.mxu0 %v1068
    %1540 = vmatprep.subr.bf16.mxu0 %v1077
    %1541 = vmatpush1.bf16.msra.mxu0 %v1076
    %1542 = vmatprep.subr.bf16.mxu0 %v1085
    %1543 = vmatpush1.bf16.msra.mxu0 %v1084
    %1544 = vmatprep.subr.bf16.mxu0 %v1093
    %1545 = vmatpush1.bf16.msra.mxu0 %v1092
    %1546 = vmatprep.subr.bf16.mxu0 %v1101
    %1547 = vmatpush1.bf16.msra.mxu0 %v1100
    %1548 = vmatprep.subr.bf16.mxu0 %v1109
    %1549 = vmatpush1.bf16.msra.mxu0 %v1108
    %1550 = vmatprep.subr.bf16.mxu0 %v1117
    %1551 = vmatpush1.bf16.msra.mxu0 %v1116
    %1552 = vmatprep.subr.bf16.mxu0 %v1125
    %1553 = vmatpush1.bf16.msra.mxu0 %v1124
    %1554 = vmatprep.subr.bf16.mxu0 %v1133
    %1555 = vmatpush1.bf16.msra.mxu0 %v1132
    %1556 = vmatprep.subr.bf16.mxu0 %v1141
    %1557 = vmatpush1.bf16.msra.mxu0 %v1140
    %1558 = vmatprep.subr.bf16.mxu0 %v1149
    %1559 = vmatpush1.bf16.msra.mxu0 %v1148
    %1560 = vmatprep.mubr.bf16.mxu0 %v767
    %1561 = vmatmul.mubr.bf16.gmra.mrb[0].mxu0 %v766
    %v1562 = vpop.f32.mrb[0].mxu0
    %v1563 = vadd.f32 %v1522, %v1562
    %v1564 = vpop.f32.mrb[0].mxu0
    %v1565 = vadd.f32 %v1524, %v1564
    %v1566 = vpop.f32.mrb[0].mxu0
    %v1567 = vpop.f32.mrb[0].mxu0
    %1568 = vdwg.mxu0
    %1569 = vmatprep.subr.bf16.mxu0 %v1157
    %1570 = vmatpush1.bf16.msra.mxu0 %v1156
    %1571 = vmatprep.subr.bf16.mxu0 %v1165
    %1572 = vmatpush1.bf16.msra.mxu0 %v1164
    %1573 = vmatprep.subr.bf16.mxu0 %v1173
    %1574 = vmatpush1.bf16.msra.mxu0 %v1172
    %1575 = vmatprep.subr.bf16.mxu0 %v1181
    %1576 = vmatpush1.bf16.msra.mxu0 %v1180
    %1577 = vmatprep.subr.bf16.mxu0 %v1189
    %1578 = vmatpush1.bf16.msra.mxu0 %v1188
    %1579 = vmatprep.subr.bf16.mxu0 %v1197
    %1580 = vmatpush1.bf16.msra.mxu0 %v1196
    %1581 = vmatprep.subr.bf16.mxu0 %v1205
    %1582 = vmatpush1.bf16.msra.mxu0 %v1204
    %1583 = vmatprep.subr.bf16.mxu0 %v1213
    %1584 = vmatpush1.bf16.msra.mxu0 %v1212
    %1585 = vmatprep.subr.bf16.mxu0 %v1221
    %1586 = vmatpush1.bf16.msra.mxu0 %v1220
    %1587 = vmatprep.subr.bf16.mxu0 %v1229
    %1588 = vmatpush1.bf16.msra.mxu0 %v1228
    %1589 = vmatprep.subr.bf16.mxu0 %v1237
    %1590 = vmatpush1.bf16.msra.mxu0 %v1236
    %1591 = vmatprep.subr.bf16.mxu0 %v1245
    %1592 = vmatpush1.bf16.msra.mxu0 %v1244
    %1593 = vmatprep.subr.bf16.mxu0 %v1253
    %1594 = vmatpush1.bf16.msra.mxu0 %v1252
    %1595 = vmatprep.subr.bf16.mxu0 %v1261
    %1596 = vmatpush1.bf16.msra.mxu0 %v1260
    %1597 = vmatprep.subr.bf16.mxu0 %v1269
    %1598 = vmatpush1.bf16.msra.mxu0 %v1268
    %1599 = vmatprep.subr.bf16.mxu0 %v1277
    %1600 = vmatpush1.bf16.msra.mxu0 %v1276
    %1601 = vmatprep.mubr.bf16.mxu0 %v769
    %1602 = vmatmul.mubr.bf16.gmra.mrb[0].mxu0 %v768
    %v1603 = vpop.f32.mrb[0].mxu0
    %v1604 = vadd.f32 %v1563, %v1603
    %v1605 = vpop.f32.mrb[0].mxu0
    %v1606 = vadd.f32 %v1565, %v1605
    %v1607 = vpop.f32.mrb[0].mxu0
    %v1608 = vpop.f32.mrb[0].mxu0
    %1609 = vdwg.mxu0
    %1610 = vmatprep.subr.bf16.mxu0 %v775
    %1611 = vmatpush1.bf16.msra.mxu0 %v774
    %1612 = vmatprep.subr.bf16.mxu0 %v783
    %1613 = vmatpush1.bf16.msra.mxu0 %v782
    %1614 = vmatprep.subr.bf16.mxu0 %v791
    %1615 = vmatpush1.bf16.msra.mxu0 %v790
    %1616 = vmatprep.subr.bf16.mxu0 %v799
    %1617 = vmatpush1.bf16.msra.mxu0 %v798
    %1618 = vmatprep.subr.bf16.mxu0 %v807
    %1619 = vmatpush1.bf16.msra.mxu0 %v806
    %1620 = vmatprep.subr.bf16.mxu0 %v815
    %1621 = vmatpush1.bf16.msra.mxu0 %v814
    %1622 = vmatprep.subr.bf16.mxu0 %v823
    %1623 = vmatpush1.bf16.msra.mxu0 %v822
    %1624 = vmatprep.subr.bf16.mxu0 %v831
    %1625 = vmatpush1.bf16.msra.mxu0 %v830
    %1626 = vmatprep.subr.bf16.mxu0 %v839
    %1627 = vmatpush1.bf16.msra.mxu0 %v838
    %1628 = vmatprep.subr.bf16.mxu0 %v847
    %1629 = vmatpush1.bf16.msra.mxu0 %v846
    %1630 = vmatprep.subr.bf16.mxu0 %v855
    %1631 = vmatpush1.bf16.msra.mxu0 %v854
    %1632 = vmatprep.subr.bf16.mxu0 %v863
    %1633 = vmatpush1.bf16.msra.mxu0 %v862
    %1634 = vmatprep.subr.bf16.mxu0 %v871
    %1635 = vmatpush1.bf16.msra.mxu0 %v870
    %1636 = vmatprep.subr.bf16.mxu0 %v879
    %1637 = vmatpush1.bf16.msra.mxu0 %v878
    %1638 = vmatprep.subr.bf16.mxu0 %v887
    %1639 = vmatpush1.bf16.msra.mxu0 %v886
    %1640 = vmatprep.subr.bf16.mxu0 %v895
    %1641 = vmatpush1.bf16.msra.mxu0 %v894
    %1642 = vmatprep.mubr.bf16.mxu0 %v763
    %1643 = vmatmul.mubr.bf16.gmra.mrb[0].mxu0 %v762
    %v1644 = vpop.f32.mrb[0].mxu0
    %v1645 = vadd.f32 0.0, %v1644
    %v1646 = vpop.f32.mrb[0].mxu0
    %v1647 = vadd.f32 0.0, %v1646
    %v1648 = vpop.f32.mrb[0].mxu0
    %v1649 = vpop.f32.mrb[0].mxu0
    %1650 = vdwg.mxu0
    %1651 = vmatprep.subr.bf16.mxu0 %v903
    %1652 = vmatpush1.bf16.msra.mxu0 %v902
    %1653 = vmatprep.subr.bf16.mxu0 %v911
    %1654 = vmatpush1.bf16.msra.mxu0 %v910
    %1655 = vmatprep.subr.bf16.mxu0 %v919
    %1656 = vmatpush1.bf16.msra.mxu0 %v918
    %1657 = vmatprep.subr.bf16.mxu0 %v927
    %1658 = vmatpush1.bf16.msra.mxu0 %v926
    %1659 = vmatprep.subr.bf16.mxu0 %v935
    %1660 = vmatpush1.bf16.msra.mxu0 %v934
    %1661 = vmatprep.subr.bf16.mxu0 %v943
    %1662 = vmatpush1.bf16.msra.mxu0 %v942
    %1663 = vmatprep.subr.bf16.mxu0 %v951
    %1664 = vmatpush1.bf16.msra.mxu0 %v950
    %1665 = vmatprep.subr.bf16.mxu0 %v959
    %1666 = vmatpush1.bf16.msra.mxu0 %v958
    %1667 = vmatprep.subr.bf16.mxu0 %v967
    %1668 = vmatpush1.bf16.msra.mxu0 %v966
    %1669 = vmatprep.subr.bf16.mxu0 %v975
    %1670 = vmatpush1.bf16.msra.mxu0 %v974
    %1671 = vmatprep.subr.bf16.mxu0 %v983
    %1672 = vmatpush1.bf16.msra.mxu0 %v982
    %1673 = vmatprep.subr.bf16.mxu0 %v991
    %1674 = vmatpush1.bf16.msra.mxu0 %v990
    %1675 = vmatprep.subr.bf16.mxu0 %v999
    %1676 = vmatpush1.bf16.msra.mxu0 %v998
    %1677 = vmatprep.subr.bf16.mxu0 %v1007
    %1678 = vmatpush1.bf16.msra.mxu0 %v1006
    %1679 = vmatprep.subr.bf16.mxu0 %v1015
    %1680 = vmatpush1.bf16.msra.mxu0 %v1014
    %1681 = vmatprep.subr.bf16.mxu0 %v1023
    %1682 = vmatpush1.bf16.msra.mxu0 %v1022
    %1683 = vmatprep.mubr.bf16.mxu0 %v765
    %1684 = vmatmul.mubr.bf16.gmra.mrb[0].mxu0 %v764
    %v1685 = vpop.f32.mrb[0].mxu0
    %v1686 = vadd.f32 %v1645, %v1685
    %v1687 = vpop.f32.mrb[0].mxu0
    %v1688 = vadd.f32 %v1647, %v1687
    %v1689 = vpop.f32.mrb[0].mxu0
    %v1690 = vpop.f32.mrb[0].mxu0
    %1691 = vdwg.mxu0
    %1692 = vmatprep.subr.bf16.mxu0 %v1031
    %1693 = vmatpush1.bf16.msra.mxu0 %v1030
    %1694 = vmatprep.subr.bf16.mxu0 %v1039
    %1695 = vmatpush1.bf16.msra.mxu0 %v1038
    %1696 = vmatprep.subr.bf16.mxu0 %v1047
    %1697 = vmatpush1.bf16.msra.mxu0 %v1046
    %1698 = vmatprep.subr.bf16.mxu0 %v1055
    %1699 = vmatpush1.bf16.msra.mxu0 %v1054
    %1700 = vmatprep.subr.bf16.mxu0 %v1063
    %1701 = vmatpush1.bf16.msra.mxu0 %v1062
    %1702 = vmatprep.subr.bf16.mxu0 %v1071
    %1703 = vmatpush1.bf16.msra.mxu0 %v1070
    %1704 = vmatprep.subr.bf16.mxu0 %v1079
    %1705 = vmatpush1.bf16.msra.mxu0 %v1078
    %1706 = vmatprep.subr.bf16.mxu0 %v1087
    %1707 = vmatpush1.bf16.msra.mxu0 %v1086
    %1708 = vmatprep.subr.bf16.mxu0 %v1095
    %1709 = vmatpush1.bf16.msra.mxu0 %v1094
    %1710 = vmatprep.subr.bf16.mxu0 %v1103
    %1711 = vmatpush1.bf16.msra.mxu0 %v1102
    %1712 = vmatprep.subr.bf16.mxu0 %v1111
    %1713 = vmatpush1.bf16.msra.mxu0 %v1110
    %1714 = vmatprep.subr.bf16.mxu0 %v1119
    %1715 = vmatpush1.bf16.msra.mxu0 %v1118
    %1716 = vmatprep.subr.bf16.mxu0 %v1127
    %1717 = vmatpush1.bf16.msra.mxu0 %v1126
    %1718 = vmatprep.subr.bf16.mxu0 %v1135
    %1719 = vmatpush1.bf16.msra.mxu0 %v1134
    %1720 = vmatprep.subr.bf16.mxu0 %v1143
    %1721 = vmatpush1.bf16.msra.mxu0 %v1142
    %1722 = vmatprep.subr.bf16.mxu0 %v1151
    %1723 = vmatpush1.bf16.msra.mxu0 %v1150
    %1724 = vmatprep.mubr.bf16.mxu0 %v767
    %1725 = vmatmul.mubr.bf16.gmra.mrb[0].mxu0 %v766
    %v1726 = vpop.f32.mrb[0].mxu0
    %v1727 = vadd.f32 %v1686, %v1726
    %v1728 = vpop.f32.mrb[0].mxu0
    %v1729 = vadd.f32 %v1688, %v1728
    %v1730 = vpop.f32.mrb[0].mxu0
    %v1731 = vpop.f32.mrb[0].mxu0
    %1732 = vdwg.mxu0
    %1733 = vmatprep.subr.bf16.mxu0 %v1159
    %1734 = vmatpush1.bf16.msra.mxu0 %v1158
    %1735 = vmatprep.subr.bf16.mxu0 %v1167
    %1736 = vmatpush1.bf16.msra.mxu0 %v1166
    %1737 = vmatprep.subr.bf16.mxu0 %v1175
    %1738 = vmatpush1.bf16.msra.mxu0 %v1174
    %1739 = vmatprep.subr.bf16.mxu0 %v1183
    %1740 = vmatpush1.bf16.msra.mxu0 %v1182
    %1741 = vmatprep.subr.bf16.mxu0 %v1191
    %1742 = vmatpush1.bf16.msra.mxu0 %v1190
    %1743 = vmatprep.subr.bf16.mxu0 %v1199
    %1744 = vmatpush1.bf16.msra.mxu0 %v1198
    %1745 = vmatprep.subr.bf16.mxu0 %v1207
    %1746 = vmatpush1.bf16.msra.mxu0 %v1206
    %1747 = vmatprep.subr.bf16.mxu0 %v1215
    %1748 = vmatpush1.bf16.msra.mxu0 %v1214
    %1749 = vmatprep.subr.bf16.mxu0 %v1223
    %1750 = vmatpush1.bf16.msra.mxu0 %v1222
    %1751 = vmatprep.subr.bf16.mxu0 %v1231
    %1752 = vmatpush1.bf16.msra.mxu0 %v1230
    %1753 = vmatprep.subr.bf16.mxu0 %v1239
    %1754 = vmatpush1.bf16.msra.mxu0 %v1238
    %1755 = vmatprep.subr.bf16.mxu0 %v1247
    %1756 = vmatpush1.bf16.msra.mxu0 %v1246
    %1757 = vmatprep.subr.bf16.mxu0 %v1255
    %1758 = vmatpush1.bf16.msra.mxu0 %v1254
    %1759 = vmatprep.subr.bf16.mxu0 %v1263
    %1760 = vmatpush1.bf16.msra.mxu0 %v1262
    %1761 = vmatprep.subr.bf16.mxu0 %v1271
    %1762 = vmatpush1.bf16.msra.mxu0 %v1270
    %1763 = vmatprep.subr.bf16.mxu0 %v1279
    %1764 = vmatpush1.bf16.msra.mxu0 %v1278
    %1765 = vmatprep.mubr.bf16.mxu0 %v769
    %1766 = vmatmul.mubr.bf16.gmra.mrb[0].mxu0 %v768
    %v1767 = vpop.f32.mrb[0].mxu0
    %v1768 = vadd.f32 %v1727, %v1767
    %v1769 = vpop.f32.mrb[0].mxu0
    %v1770 = vadd.f32 %v1729, %v1769
    %v1771 = vpop.f32.mrb[0].mxu0
    %v1772 = vpop.f32.mrb[0].mxu0
    %1773 = vdwg.mxu0
    %1774 = vmatprep.subr.bf16.mxu0 %v777
    %1775 = vmatpush1.bf16.msra.mxu0 %v776
    %1776 = vmatprep.subr.bf16.mxu0 %v785
    %1777 = vmatpush1.bf16.msra.mxu0 %v784
    %1778 = vmatprep.subr.bf16.mxu0 %v793
    %1779 = vmatpush1.bf16.msra.mxu0 %v792
    %1780 = vmatprep.subr.bf16.mxu0 %v801
    %1781 = vmatpush1.bf16.msra.mxu0 %v800
    %1782 = vmatprep.subr.bf16.mxu0 %v809
    %1783 = vmatpush1.bf16.msra.mxu0 %v808
    %1784 = vmatprep.subr.bf16.mxu0 %v817
    %1785 = vmatpush1.bf16.msra.mxu0 %v816
    %1786 = vmatprep.subr.bf16.mxu0 %v825
    %1787 = vmatpush1.bf16.msra.mxu0 %v824
    %1788 = vmatprep.subr.bf16.mxu0 %v833
    %1789 = vmatpush1.bf16.msra.mxu0 %v832
    %1790 = vmatprep.subr.bf16.mxu0 %v841
    %1791 = vmatpush1.bf16.msra.mxu0 %v840
    %1792 = vmatprep.subr.bf16.mxu0 %v849
    %1793 = vmatpush1.bf16.msra.mxu0 %v848
    %1794 = vmatprep.subr.bf16.mxu0 %v857
    %1795 = vmatpush1.bf16.msra.mxu0 %v856
    %1796 = vmatprep.subr.bf16.mxu0 %v865
    %1797 = vmatpush1.bf16.msra.mxu0 %v864
    %1798 = vmatprep.subr.bf16.mxu0 %v873
    %1799 = vmatpush1.bf16.msra.mxu0 %v872
    %1800 = vmatprep.subr.bf16.mxu0 %v881
    %1801 = vmatpush1.bf16.msra.mxu0 %v880
    %1802 = vmatprep.subr.bf16.mxu0 %v889
    %1803 = vmatpush1.bf16.msra.mxu0 %v888
    %1804 = vmatprep.subr.bf16.mxu0 %v897
    %1805 = vmatpush1.bf16.msra.mxu0 %v896
    %1806 = vmatprep.mubr.bf16.mxu0 %v763
    %1807 = vmatmul.mubr.bf16.gmra.mrb[0].mxu0 %v762
    %v1808 = vpop.f32.mrb[0].mxu0
    %v1809 = vadd.f32 0.0, %v1808
    %v1810 = vpop.f32.mrb[0].mxu0
    %v1811 = vadd.f32 0.0, %v1810
    %v1812 = vpop.f32.mrb[0].mxu0
    %v1813 = vpop.f32.mrb[0].mxu0
    %1814 = vdwg.mxu0
    %1815 = vmatprep.subr.bf16.mxu0 %v905
    %1816 = vmatpush1.bf16.msra.mxu0 %v904
    %1817 = vmatprep.subr.bf16.mxu0 %v913
    %1818 = vmatpush1.bf16.msra.mxu0 %v912
    %1819 = vmatprep.subr.bf16.mxu0 %v921
    %1820 = vmatpush1.bf16.msra.mxu0 %v920
    %1821 = vmatprep.subr.bf16.mxu0 %v929
    %1822 = vmatpush1.bf16.msra.mxu0 %v928
    %1823 = vmatprep.subr.bf16.mxu0 %v937
    %1824 = vmatpush1.bf16.msra.mxu0 %v936
    %1825 = vmatprep.subr.bf16.mxu0 %v945
    %1826 = vmatpush1.bf16.msra.mxu0 %v944
    %1827 = vmatprep.subr.bf16.mxu0 %v953
    %1828 = vmatpush1.bf16.msra.mxu0 %v952
    %1829 = vmatprep.subr.bf16.mxu0 %v961
    %1830 = vmatpush1.bf16.msra.mxu0 %v960
    %1831 = vmatprep.subr.bf16.mxu0 %v969
    %1832 = vmatpush1.bf16.msra.mxu0 %v968
    %1833 = vmatprep.subr.bf16.mxu0 %v977
    %1834 = vmatpush1.bf16.msra.mxu0 %v976
    %1835 = vmatprep.subr.bf16.mxu0 %v985
    %1836 = vmatpush1.bf16.msra.mxu0 %v984
    %1837 = vmatprep.subr.bf16.mxu0 %v993
    %1838 = vmatpush1.bf16.msra.mxu0 %v992
    %1839 = vmatprep.subr.bf16.mxu0 %v1001
    %1840 = vmatpush1.bf16.msra.mxu0 %v1000
    %1841 = vmatprep.subr.bf16.mxu0 %v1009
    %1842 = vmatpush1.bf16.msra.mxu0 %v1008
    %1843 = vmatprep.subr.bf16.mxu0 %v1017
    %1844 = vmatpush1.bf16.msra.mxu0 %v1016
    %1845 = vmatprep.subr.bf16.mxu0 %v1025
    %1846 = vmatpush1.bf16.msra.mxu0 %v1024
    %1847 = vmatprep.mubr.bf16.mxu0 %v765
    %1848 = vmatmul.mubr.bf16.gmra.mrb[0].mxu0 %v764
    %v1849 = vpop.f32.mrb[0].mxu0
    %v1850 = vadd.f32 %v1809, %v1849
    %v1851 = vpop.f32.mrb[0].mxu0
    %v1852 = vadd.f32 %v1811, %v1851
    %v1853 = vpop.f32.mrb[0].mxu0
    %v1854 = vpop.f32.mrb[0].mxu0
    %1855 = vdwg.mxu0
    %1856 = vmatprep.subr.bf16.mxu0 %v1033
    %1857 = vmatpush1.bf16.msra.mxu0 %v1032
    %1858 = vmatprep.subr.bf16.mxu0 %v1041
    %1859 = vmatpush1.bf16.msra.mxu0 %v1040
    %1860 = vmatprep.subr.bf16.mxu0 %v1049
    %1861 = vmatpush1.bf16.msra.mxu0 %v1048
    %1862 = vmatprep.subr.bf16.mxu0 %v1057
    %1863 = vmatpush1.bf16.msra.mxu0 %v1056
    %1864 = vmatprep.subr.bf16.mxu0 %v1065
    %1865 = vmatpush1.bf16.msra.mxu0 %v1064
    %1866 = vmatprep.subr.bf16.mxu0 %v1073
    %1867 = vmatpush1.bf16.msra.mxu0 %v1072
    %1868 = vmatprep.subr.bf16.mxu0 %v1081
    %1869 = vmatpush1.bf16.msra.mxu0 %v1080
    %1870 = vmatprep.subr.bf16.mxu0 %v1089
    %1871 = vmatpush1.bf16.msra.mxu0 %v1088
    %1872 = vmatprep.subr.bf16.mxu0 %v1097
    %1873 = vmatpush1.bf16.msra.mxu0 %v1096
    %1874 = vmatprep.subr.bf16.mxu0 %v1105
    %1875 = vmatpush1.bf16.msra.mxu0 %v1104
    %1876 = vmatprep.subr.bf16.mxu0 %v1113
    %1877 = vmatpush1.bf16.msra.mxu0 %v1112
    %1878 = vmatprep.subr.bf16.mxu0 %v1121
    %1879 = vmatpush1.bf16.msra.mxu0 %v1120
    %1880 = vmatprep.subr.bf16.mxu0 %v1129
    %1881 = vmatpush1.bf16.msra.mxu0 %v1128
    %1882 = vmatprep.subr.bf16.mxu0 %v1137
    %1883 = vmatpush1.bf16.msra.mxu0 %v1136
    %1884 = vmatprep.subr.bf16.mxu0 %v1145
    %1885 = vmatpush1.bf16.msra.mxu0 %v1144
    %1886 = vmatprep.subr.bf16.mxu0 %v1153
    %1887 = vmatpush1.bf16.msra.mxu0 %v1152
    %1888 = vmatprep.mubr.bf16.mxu0 %v767
    %1889 = vmatmul.mubr.bf16.gmra.mrb[0].mxu0 %v766
    %v1890 = vpop.f32.mrb[0].mxu0
    %v1891 = vadd.f32 %v1850, %v1890
    %v1892 = vpop.f32.mrb[0].mxu0
    %v1893 = vadd.f32 %v1852, %v1892
    %v1894 = vpop.f32.mrb[0].mxu0
    %v1895 = vpop.f32.mrb[0].mxu0
    %1896 = vdwg.mxu0
    %1897 = vmatprep.subr.bf16.mxu0 %v1161
    %1898 = vmatpush1.bf16.msra.mxu0 %v1160
    %1899 = vmatprep.subr.bf16.mxu0 %v1169
    %1900 = vmatpush1.bf16.msra.mxu0 %v1168
    %1901 = vmatprep.subr.bf16.mxu0 %v1177
    %1902 = vmatpush1.bf16.msra.mxu0 %v1176
    %1903 = vmatprep.subr.bf16.mxu0 %v1185
    %1904 = vmatpush1.bf16.msra.mxu0 %v1184
    %1905 = vmatprep.subr.bf16.mxu0 %v1193
    %1906 = vmatpush1.bf16.msra.mxu0 %v1192
    %1907 = vmatprep.subr.bf16.mxu0 %v1201
    %1908 = vmatpush1.bf16.msra.mxu0 %v1200
    %1909 = vmatprep.subr.bf16.mxu0 %v1209
    %1910 = vmatpush1.bf16.msra.mxu0 %v1208
    %1911 = vmatprep.subr.bf16.mxu0 %v1217
    %1912 = vmatpush1.bf16.msra.mxu0 %v1216
    %1913 = vmatprep.subr.bf16.mxu0 %v1225
    %1914 = vmatpush1.bf16.msra.mxu0 %v1224
    %1915 = vmatprep.subr.bf16.mxu0 %v1233
    %1916 = vmatpush1.bf16.msra.mxu0 %v1232
    %1917 = vmatprep.subr.bf16.mxu0 %v1241
    %1918 = vmatpush1.bf16.msra.mxu0 %v1240
    %1919 = vmatprep.subr.bf16.mxu0 %v1249
    %1920 = vmatpush1.bf16.msra.mxu0 %v1248
    %1921 = vmatprep.subr.bf16.mxu0 %v1257
    %1922 = vmatpush1.bf16.msra.mxu0 %v1256
    %1923 = vmatprep.subr.bf16.mxu0 %v1265
    %1924 = vmatpush1.bf16.msra.mxu0 %v1264
    %1925 = vmatprep.subr.bf16.mxu0 %v1273
    %1926 = vmatpush1.bf16.msra.mxu0 %v1272
    %1927 = vmatprep.subr.bf16.mxu0 %v1281
    %1928 = vmatpush1.bf16.msra.mxu0 %v1280
    %1929 = vmatprep.mubr.bf16.mxu0 %v769
    %1930 = vmatmul.mubr.bf16.gmra.mrb[0].mxu0 %v768
    %v1931 = vpop.f32.mrb[0].mxu0
    %v1932 = vadd.f32 %v1891, %v1931
    %v1933 = vpop.f32.mrb[0].mxu0
    %v1934 = vadd.f32 %v1893, %v1933
    %v1935 = vpop.f32.mrb[0].mxu0
    %v1936 = vpop.f32.mrb[0].mxu0
    %1937 = vdwg.mxu0
    %v1938 = vrot.slane %v1440, 4
    %v1939 = vadd.f32 %v1440, %v1938
    %v1940 = vrot.slane %v1939, 2
    %v1941 = vadd.f32 %v1939, %v1940
    %v1942 = vrot.slane %v1941, 1
    %v1943 = vadd.f32 %v1941, %v1942
    %v1944 = vrot.slane %v1442, 4
    %v1945 = vadd.f32 %v1442, %v1944
    %v1946 = vrot.slane %v1945, 2
    %v1947 = vadd.f32 %v1945, %v1946
    %v1948 = vrot.slane %v1947, 1
    %v1949 = vadd.f32 %v1947, %v1948
    %v1950 = vrot.slane %v1604, 4
    %v1951 = vadd.f32 %v1604, %v1950
    %v1952 = vrot.slane %v1951, 2
    %v1953 = vadd.f32 %v1951, %v1952
    %v1954 = vrot.slane %v1953, 1
    %v1955 = vadd.f32 %v1953, %v1954
    %v1956 = vrot.slane %v1606, 4
    %v1957 = vadd.f32 %v1606, %v1956
    %v1958 = vrot.slane %v1957, 2
    %v1959 = vadd.f32 %v1957, %v1958
    %v1960 = vrot.slane %v1959, 1
    %v1961 = vadd.f32 %v1959, %v1960
    %v1962 = vrot.slane %v1768, 4
    %v1963 = vadd.f32 %v1768, %v1962
    %v1964 = vrot.slane %v1963, 2
    %v1965 = vadd.f32 %v1963, %v1964
    %v1966 = vrot.slane %v1965, 1
    %v1967 = vadd.f32 %v1965, %v1966
    %v1968 = vrot.slane %v1770, 4
    %v1969 = vadd.f32 %v1770, %v1968
    %v1970 = vrot.slane %v1969, 2
    %v1971 = vadd.f32 %v1969, %v1970
    %v1972 = vrot.slane %v1971, 1
    %v1973 = vadd.f32 %v1971, %v1972
    %v1974 = vrot.slane %v1932, 4
    %v1975 = vadd.f32 %v1932, %v1974
    %v1976 = vrot.slane %v1975, 2
    %v1977 = vadd.f32 %v1975, %v1976
    %v1978 = vrot.slane %v1977, 1
    %v1979 = vadd.f32 %v1977, %v1978
    %v1980 = vrot.slane %v1934, 4
    %v1981 = vadd.f32 %v1934, %v1980
    %v1982 = vrot.slane %v1981, 2
    %v1983 = vadd.f32 %v1981, %v1982
    %v1984 = vrot.slane %v1983, 1
    %v1985 = vadd.f32 %v1983, %v1984
    %v1986 = vmul.f32 %v1943, %v425
    %v1987 = vmul.f32 %v1949, %v425
    %v1988 = vmul.f32 %v1955, %v425
    %v1989 = vmul.f32 %v1961, %v425
    %v1990 = vmul.f32 %v1967, %v425
    %v1991 = vmul.f32 %v1973, %v425
    %v1992 = vmul.f32 %v1979, %v425
    %v1993 = vmul.f32 %v1985, %v425
    %v1994 = vsub.f32 %v1440, %v1986
    %v1995 = vsub.f32 %v1442, %v1987
    %v1996 = vsub.f32 %v1604, %v1988
    %v1997 = vsub.f32 %v1606, %v1989
    %v1998 = vsub.f32 %v1768, %v1990
    %v1999 = vsub.f32 %v1770, %v1991
    %v2000 = vsub.f32 %v1932, %v1992
    %v2001 = vsub.f32 %v1934, %v1993
    %v2002 = vmul.f32 %v1994, %v1994
    %v2003 = vmul.f32 %v1995, %v1995
    %v2004 = vmul.f32 %v1996, %v1996
    %v2005 = vmul.f32 %v1997, %v1997
    %v2006 = vmul.f32 %v1998, %v1998
    %v2007 = vmul.f32 %v1999, %v1999
    %v2008 = vmul.f32 %v2000, %v2000
    %v2009 = vmul.f32 %v2001, %v2001
    %v2010 = vrot.slane %v2002, 4
    %v2011 = vadd.f32 %v2002, %v2010
    %v2012 = vrot.slane %v2011, 2
    %v2013 = vadd.f32 %v2011, %v2012
    %v2014 = vrot.slane %v2013, 1
    %v2015 = vadd.f32 %v2013, %v2014
    %v2016 = vrot.slane %v2003, 4
    %v2017 = vadd.f32 %v2003, %v2016
    %v2018 = vrot.slane %v2017, 2
    %v2019 = vadd.f32 %v2017, %v2018
    %v2020 = vrot.slane %v2019, 1
    %v2021 = vadd.f32 %v2019, %v2020
    %v2022 = vrot.slane %v2004, 4
    %v2023 = vadd.f32 %v2004, %v2022
    %v2024 = vrot.slane %v2023, 2
    %v2025 = vadd.f32 %v2023, %v2024
    %v2026 = vrot.slane %v2025, 1
    %v2027 = vadd.f32 %v2025, %v2026
    %v2028 = vrot.slane %v2005, 4
    %v2029 = vadd.f32 %v2005, %v2028
    %v2030 = vrot.slane %v2029, 2
    %v2031 = vadd.f32 %v2029, %v2030
    %v2032 = vrot.slane %v2031, 1
    %v2033 = vadd.f32 %v2031, %v2032
    %v2034 = vrot.slane %v2006, 4
    %v2035 = vadd.f32 %v2006, %v2034
    %v2036 = vrot.slane %v2035, 2
    %v2037 = vadd.f32 %v2035, %v2036
    %v2038 = vrot.slane %v2037, 1
    %v2039 = vadd.f32 %v2037, %v2038
    %v2040 = vrot.slane %v2007, 4
    %v2041 = vadd.f32 %v2007, %v2040
    %v2042 = vrot.slane %v2041, 2
    %v2043 = vadd.f32 %v2041, %v2042
    %v2044 = vrot.slane %v2043, 1
    %v2045 = vadd.f32 %v2043, %v2044
    %v2046 = vrot.slane %v2008, 4
    %v2047 = vadd.f32 %v2008, %v2046
    %v2048 = vrot.slane %v2047, 2
    %v2049 = vadd.f32 %v2047, %v2048
    %v2050 = vrot.slane %v2049, 1
    %v2051 = vadd.f32 %v2049, %v2050
    %v2052 = vrot.slane %v2009, 4
    %v2053 = vadd.f32 %v2009, %v2052
    %v2054 = vrot.slane %v2053, 2
    %v2055 = vadd.f32 %v2053, %v2054
    %v2056 = vrot.slane %v2055, 1
    %v2057 = vadd.f32 %v2055, %v2056
    %v2058 = vmul.f32 %v2015, %v425
    %v2059 = vmul.f32 %v2021, %v425
    %v2060 = vmul.f32 %v2027, %v425
    %v2061 = vmul.f32 %v2033, %v425
    %v2062 = vmul.f32 %v2039, %v425
    %v2063 = vmul.f32 %v2045, %v425
    %v2064 = vmul.f32 %v2051, %v425
    %v2065 = vmul.f32 %v2057, %v425
    %v2066 = vadd.f32 %v2058, 1e-05
    %v2067 = vadd.f32 %v2059, 1e-05
    %v2068 = vadd.f32 %v2060, 1e-05
    %v2069 = vadd.f32 %v2061, 1e-05
    %v2070 = vadd.f32 %v2062, 1e-05
    %v2071 = vadd.f32 %v2063, 1e-05
    %v2072 = vadd.f32 %v2064, 1e-05
    %v2073 = vadd.f32 %v2065, 1e-05
    %v2074 = vrsqrt.pop %v2066
    %v2075 = vrsqrt.pop %v2067
    %v2076 = vrsqrt.pop %v2068
    %v2077 = vrsqrt.pop %v2069
    %v2078 = vrsqrt.pop %v2070
    %v2079 = vrsqrt.pop %v2071
    %v2080 = vrsqrt.pop %v2072
    %v2081 = vrsqrt.pop %v2073
    %v2090 = vcombine.low %v2074, %v2075
    %v2091 = vcombine.low %v2076, %v2077
    %v2092 = vcombine.low %v2078, %v2079
    %v2093 = vcombine.low %v2080, %v2081
    %v2094 = vrot.slane %v2090, 6
    %v2095 = vrot.slane %v2091, 6
    %v2096 = vrot.slane %v2092, 6
    %v2097 = vrot.slane %v2093, 6
    %v2102 = vmul.f32 %v107, %v2094
    %v2103 = vmul.f32 %v108, %v2095
    %v2104 = vmul.f32 %v109, %v2096
    %v2105 = vmul.f32 %v110, %v2097
    %v2110 = vlaneseq
    %v2111 = vshrl.u32 %v2110, 7
    %v2112 = vsub.s32 2, %v2111
    %v2113 = vrot.slane %v2102, %v2112
    %v2114 = vlaneseq
    %v2115 = vshrl.u32 %v2114, 7
    %v2116 = vsub.s32 6, %v2115
    %v2117 = vrot.slane %v2102, %v2116
    %v2118 = vlaneseq
    %v2119 = vshrl.u32 %v2118, 7
    %v2120 = vsub.s32 2, %v2119
    %v2121 = vrot.slane %v2103, %v2120
    %v2122 = vlaneseq
    %v2123 = vshrl.u32 %v2122, 7
    %v2124 = vsub.s32 6, %v2123
    %v2125 = vrot.slane %v2103, %v2124
    %v2126 = vlaneseq
    %v2127 = vshrl.u32 %v2126, 7
    %v2128 = vsub.s32 2, %v2127
    %v2129 = vrot.slane %v2104, %v2128
    %v2130 = vlaneseq
    %v2131 = vshrl.u32 %v2130, 7
    %v2132 = vsub.s32 6, %v2131
    %v2133 = vrot.slane %v2104, %v2132
    %v2134 = vlaneseq
    %v2135 = vshrl.u32 %v2134, 7
    %v2136 = vsub.s32 2, %v2135
    %v2137 = vrot.slane %v2105, %v2136
    %v2138 = vlaneseq
    %v2139 = vshrl.u32 %v2138, 7
    %v2140 = vsub.s32 6, %v2139
    %v2141 = vrot.slane %v2105, %v2140
    %v2150 = vmul.f32 %v1986, %v2113
    %v2151 = vmul.f32 %v1987, %v2117
    %v2152 = vmul.f32 %v1988, %v2121
    %v2153 = vmul.f32 %v1989, %v2125
    %v2154 = vmul.f32 %v1990, %v2129
    %v2155 = vmul.f32 %v1991, %v2133
    %v2156 = vmul.f32 %v1992, %v2137
    %v2157 = vmul.f32 %v1993, %v2141
    %v2166 = vcombine.low %v2150, %v2151
    %v2167 = vcombine.low %v2152, %v2153
    %v2168 = vcombine.low %v2154, %v2155
    %v2169 = vcombine.low %v2156, %v2157
    %v2170 = vrot.slane %v2166, 5
    %v2171 = vrot.slane %v2167, 5
    %v2172 = vrot.slane %v2168, 5
    %v2173 = vrot.slane %v2169, 5
    %v2178 = vsub.f32 %v107, %v2170
    %v2179 = vsub.f32 %v108, %v2171
    %v2180 = vsub.f32 %v109, %v2172
    %v2181 = vsub.f32 %v110, %v2173
    %v2182 = vlaneseq
    %v2183 = vshrl.u32 %v2182, 7
    %v2184 = vsub.s32 2, %v2183
    %v2185 = vrot.slane %v2113, %v2184
    %v2186 = vlaneseq
    %v2187 = vshrl.u32 %v2186, 7
    %v2188 = vsub.s32 2, %v2187
    %v2189 = vrot.slane %v2117, %v2188
    %v2190 = vlaneseq
    %v2191 = vshrl.u32 %v2190, 7
    %v2192 = vsub.s32 2, %v2191
    %v2193 = vrot.slane %v2121, %v2192
    %v2194 = vlaneseq
    %v2195 = vshrl.u32 %v2194, 7
    %v2196 = vsub.s32 2, %v2195
    %v2197 = vrot.slane %v2125, %v2196
    %v2198 = vlaneseq
    %v2199 = vshrl.u32 %v2198, 7
    %v2200 = vsub.s32 2, %v2199
    %v2201 = vrot.slane %v2129, %v2200
    %v2202 = vlaneseq
    %v2203 = vshrl.u32 %v2202, 7
    %v2204 = vsub.s32 2, %v2203
    %v2205 = vrot.slane %v2133, %v2204
    %v2206 = vlaneseq
    %v2207 = vshrl.u32 %v2206, 7
    %v2208 = vsub.s32 2, %v2207
    %v2209 = vrot.slane %v2137, %v2208
    %v2210 = vlaneseq
    %v2211 = vshrl.u32 %v2210, 7
    %v2212 = vsub.s32 2, %v2211
    %v2213 = vrot.slane %v2141, %v2212
    %v2214 = vmul.f32 %v1440, %v2185
    %v2215 = vmul.f32 %v1442, %v2189
    %v2216 = vmul.f32 %v1604, %v2193
    %v2217 = vmul.f32 %v1606, %v2197
    %v2218 = vmul.f32 %v1768, %v2201
    %v2219 = vmul.f32 %v1770, %v2205
    %v2220 = vmul.f32 %v1932, %v2209
    %v2221 = vmul.f32 %v1934, %v2213
    %v2226 = vlaneseq
    %v2227 = vshrl.u32 %v2226, 7
    %v2228 = vsub.s32 3, %v2227
    %v2229 = vrot.slane %v2178, %v2228
    %v2230 = vlaneseq
    %v2231 = vshrl.u32 %v2230, 7
    %v2232 = vsub.s32 7, %v2231
    %v2233 = vrot.slane %v2178, %v2232
    %v2234 = vlaneseq
    %v2235 = vshrl.u32 %v2234, 7
    %v2236 = vsub.s32 3, %v2235
    %v2237 = vrot.slane %v2179, %v2236
    %v2238 = vlaneseq
    %v2239 = vshrl.u32 %v2238, 7
    %v2240 = vsub.s32 7, %v2239
    %v2241 = vrot.slane %v2179, %v2240
    %v2242 = vlaneseq
    %v2243 = vshrl.u32 %v2242, 7
    %v2244 = vsub.s32 3, %v2243
    %v2245 = vrot.slane %v2180, %v2244
    %v2246 = vlaneseq
    %v2247 = vshrl.u32 %v2246, 7
    %v2248 = vsub.s32 7, %v2247
    %v2249 = vrot.slane %v2180, %v2248
    %v2250 = vlaneseq
    %v2251 = vshrl.u32 %v2250, 7
    %v2252 = vsub.s32 3, %v2251
    %v2253 = vrot.slane %v2181, %v2252
    %v2254 = vlaneseq
    %v2255 = vshrl.u32 %v2254, 7
    %v2256 = vsub.s32 7, %v2255
    %v2257 = vrot.slane %v2181, %v2256
    %v2266 = vlaneseq
    %v2267 = vshrl.u32 %v2266, 7
    %v2268 = vsub.s32 3, %v2267
    %v2269 = vrot.slane %v2229, %v2268
    %v2270 = vlaneseq
    %v2271 = vshrl.u32 %v2270, 7
    %v2272 = vsub.s32 3, %v2271
    %v2273 = vrot.slane %v2233, %v2272
    %v2274 = vlaneseq
    %v2275 = vshrl.u32 %v2274, 7
    %v2276 = vsub.s32 3, %v2275
    %v2277 = vrot.slane %v2237, %v2276
    %v2278 = vlaneseq
    %v2279 = vshrl.u32 %v2278, 7
    %v2280 = vsub.s32 3, %v2279
    %v2281 = vrot.slane %v2241, %v2280
    %v2282 = vlaneseq
    %v2283 = vshrl.u32 %v2282, 7
    %v2284 = vsub.s32 3, %v2283
    %v2285 = vrot.slane %v2245, %v2284
    %v2286 = vlaneseq
    %v2287 = vshrl.u32 %v2286, 7
    %v2288 = vsub.s32 3, %v2287
    %v2289 = vrot.slane %v2249, %v2288
    %v2290 = vlaneseq
    %v2291 = vshrl.u32 %v2290, 7
    %v2292 = vsub.s32 3, %v2291
    %v2293 = vrot.slane %v2253, %v2292
    %v2294 = vlaneseq
    %v2295 = vshrl.u32 %v2294, 7
    %v2296 = vsub.s32 3, %v2295
    %v2297 = vrot.slane %v2257, %v2296
    %v2298 = vadd.f32 %v2214, %v2269
    %v2299 = vadd.f32 %v2215, %v2273
    %v2300 = vadd.f32 %v2216, %v2277
    %v2301 = vadd.f32 %v2217, %v2281
    %v2302 = vadd.f32 %v2218, %v2285
    %v2303 = vadd.f32 %v2219, %v2289
    %v2304 = vadd.f32 %v2220, %v2293
    %v2305 = vadd.f32 %v2221, %v2297
    %v2306 = vmul.f32 %v2298, 0.2
    %v2307 = vmul.f32 %v2299, 0.2
    %v2308 = vmul.f32 %v2300, 0.2
    %v2309 = vmul.f32 %v2301, 0.2
    %v2310 = vmul.f32 %v2302, 0.2
    %v2311 = vmul.f32 %v2303, 0.2
    %v2312 = vmul.f32 %v2304, 0.2
    %v2313 = vmul.f32 %v2305, 0.2
    %v2314 = vmax.f32 %v2298, %v2306
    %v2315 = vmax.f32 %v2299, %v2307
    %v2316 = vmax.f32 %v2300, %v2308
    %v2317 = vmax.f32 %v2301, %v2309
    %v2318 = vmax.f32 %v2302, %v2310
    %v2319 = vmax.f32 %v2303, %v2311
    %v2320 = vmax.f32 %v2304, %v2312
    %v2321 = vmax.f32 %v2305, %v2313
    %v2322 = vpack.c.bf16 %v2314, %v2314
    %v2323 = vpack.c.bf16 %v2315, %v2315
    %v2324 = vpack.c.bf16 %v2316, %v2316
    %v2325 = vpack.c.bf16 %v2317, %v2317
    %v2326 = vpack.c.bf16 %v2318, %v2318
    %v2327 = vpack.c.bf16 %v2319, %v2319
    %v2328 = vpack.c.bf16 %v2320, %v2320
    %v2329 = vpack.c.bf16 %v2321, %v2321
    %v2330 = vld [vmem:[%s3] sm:$0xf]
    %v2331 = vld [vmem:[%s3 + $0x4] sm:$0xf]
    %v2332 = vld [vmem:[%s3 + $0x8] sm:$0xf]
    %v2333 = vld [vmem:[%s3 + $0xc] sm:$0xf]
    %v2334 = vld [vmem:[%s3 + $0x10] sm:$0xf]
    %v2335 = vld [vmem:[%s3 + $0x14] sm:$0xf]
    %v2336 = vld [vmem:[%s3 + $0x18] sm:$0xf]
    %v2337 = vld [vmem:[%s3 + $0x1c] sm:$0xf]
    %v2338 = vld [vmem:[%s3 + $0x20] sm:$0xf]
    %v2339 = vld [vmem:[%s3 + $0x24] sm:$0xf]
    %v2340 = vld [vmem:[%s3 + $0x28] sm:$0xf]
    %v2341 = vld [vmem:[%s3 + $0x2c] sm:$0xf]
    %v2342 = vld [vmem:[%s3 + $0x30] sm:$0xf]
    %v2343 = vld [vmem:[%s3 + $0x34] sm:$0xf]
    %v2344 = vld [vmem:[%s3 + $0x38] sm:$0xf]
    %v2345 = vld [vmem:[%s3 + $0x3c] sm:$0xf]
    %v2346 = vld [vmem:[%s3 + $0x40] sm:$0xf]
    %v2347 = vld [vmem:[%s3 + $0x44] sm:$0xf]
    %v2348 = vld [vmem:[%s3 + $0x48] sm:$0xf]
    %v2349 = vld [vmem:[%s3 + $0x4c] sm:$0xf]
    %v2350 = vld [vmem:[%s3 + $0x50] sm:$0xf]
    %v2351 = vld [vmem:[%s3 + $0x54] sm:$0xf]
    %v2352 = vld [vmem:[%s3 + $0x58] sm:$0xf]
    %v2353 = vld [vmem:[%s3 + $0x5c] sm:$0xf]
    %v2354 = vld [vmem:[%s3 + $0x60] sm:$0xf]
    %v2355 = vld [vmem:[%s3 + $0x64] sm:$0xf]
    %v2356 = vld [vmem:[%s3 + $0x68] sm:$0xf]
    %v2357 = vld [vmem:[%s3 + $0x6c] sm:$0xf]
    %v2358 = vld [vmem:[%s3 + $0x70] sm:$0xf]
    %v2359 = vld [vmem:[%s3 + $0x74] sm:$0xf]
    %v2360 = vld [vmem:[%s3 + $0x78] sm:$0xf]
    %v2361 = vld [vmem:[%s3 + $0x7c] sm:$0xf]
    %v2362 = vld [vmem:[%s3 + $0x80] sm:$0xf]
    %v2363 = vld [vmem:[%s3 + $0x84] sm:$0xf]
    %v2364 = vld [vmem:[%s3 + $0x88] sm:$0xf]
    %v2365 = vld [vmem:[%s3 + $0x8c] sm:$0xf]
    %v2366 = vld [vmem:[%s3 + $0x90] sm:$0xf]
    %v2367 = vld [vmem:[%s3 + $0x94] sm:$0xf]
    %v2368 = vld [vmem:[%s3 + $0x98] sm:$0xf]
    %v2369 = vld [vmem:[%s3 + $0x9c] sm:$0xf]
    %v2370 = vld [vmem:[%s3 + $0xa0] sm:$0xf]
    %v2371 = vld [vmem:[%s3 + $0xa4] sm:$0xf]
    %v2372 = vld [vmem:[%s3 + $0xa8] sm:$0xf]
    %v2373 = vld [vmem:[%s3 + $0xac] sm:$0xf]
    %v2374 = vld [vmem:[%s3 + $0xb0] sm:$0xf]
    %v2375 = vld [vmem:[%s3 + $0xb4] sm:$0xf]
    %v2376 = vld [vmem:[%s3 + $0xb8] sm:$0xf]
    %v2377 = vld [vmem:[%s3 + $0xbc] sm:$0xf]
    %v2378 = vld [vmem:[%s3 + $0xc0] sm:$0xf]
    %v2379 = vld [vmem:[%s3 + $0xc4] sm:$0xf]
    %v2380 = vld [vmem:[%s3 + $0xc8] sm:$0xf]
    %v2381 = vld [vmem:[%s3 + $0xcc] sm:$0xf]
    %v2382 = vld [vmem:[%s3 + $0xd0] sm:$0xf]
    %v2383 = vld [vmem:[%s3 + $0xd4] sm:$0xf]
    %v2384 = vld [vmem:[%s3 + $0xd8] sm:$0xf]
    %v2385 = vld [vmem:[%s3 + $0xdc] sm:$0xf]
    %v2386 = vld [vmem:[%s3 + $0xe0] sm:$0xf]
    %v2387 = vld [vmem:[%s3 + $0xe4] sm:$0xf]
    %v2388 = vld [vmem:[%s3 + $0xe8] sm:$0xf]
    %v2389 = vld [vmem:[%s3 + $0xec] sm:$0xf]
    %v2390 = vld [vmem:[%s3 + $0xf0] sm:$0xf]
    %v2391 = vld [vmem:[%s3 + $0xf4] sm:$0xf]
    %v2392 = vld [vmem:[%s3 + $0xf8] sm:$0xf]
    %v2393 = vld [vmem:[%s3 + $0xfc] sm:$0xf]
    %v2394 = vld [vmem:[%s3 + $0x100] sm:$0xf]
    %v2395 = vld [vmem:[%s3 + $0x104] sm:$0xf]
    %v2396 = vld [vmem:[%s3 + $0x108] sm:$0xf]
    %v2397 = vld [vmem:[%s3 + $0x10c] sm:$0xf]
    %v2398 = vld [vmem:[%s3 + $0x110] sm:$0xf]
    %v2399 = vld [vmem:[%s3 + $0x114] sm:$0xf]
    %v2400 = vld [vmem:[%s3 + $0x118] sm:$0xf]
    %v2401 = vld [vmem:[%s3 + $0x11c] sm:$0xf]
    %v2402 = vld [vmem:[%s3 + $0x120] sm:$0xf]
    %v2403 = vld [vmem:[%s3 + $0x124] sm:$0xf]
    %v2404 = vld [vmem:[%s3 + $0x128] sm:$0xf]
    %v2405 = vld [vmem:[%s3 + $0x12c] sm:$0xf]
    %v2406 = vld [vmem:[%s3 + $0x130] sm:$0xf]
    %v2407 = vld [vmem:[%s3 + $0x134] sm:$0xf]
    %v2408 = vld [vmem:[%s3 + $0x138] sm:$0xf]
    %v2409 = vld [vmem:[%s3 + $0x13c] sm:$0xf]
    %v2410 = vld [vmem:[%s3 + $0x140] sm:$0xf]
    %v2411 = vld [vmem:[%s3 + $0x144] sm:$0xf]
    %v2412 = vld [vmem:[%s3 + $0x148] sm:$0xf]
    %v2413 = vld [vmem:[%s3 + $0x14c] sm:$0xf]
    %v2414 = vld [vmem:[%s3 + $0x150] sm:$0xf]
    %v2415 = vld [vmem:[%s3 + $0x154] sm:$0xf]
    %v2416 = vld [vmem:[%s3 + $0x158] sm:$0xf]
    %v2417 = vld [vmem:[%s3 + $0x15c] sm:$0xf]
    %v2418 = vld [vmem:[%s3 + $0x160] sm:$0xf]
    %v2419 = vld [vmem:[%s3 + $0x164] sm:$0xf]
    %v2420 = vld [vmem:[%s3 + $0x168] sm:$0xf]
    %v2421 = vld [vmem:[%s3 + $0x16c] sm:$0xf]
    %v2422 = vld [vmem:[%s3 + $0x170] sm:$0xf]
    %v2423 = vld [vmem:[%s3 + $0x174] sm:$0xf]
    %v2424 = vld [vmem:[%s3 + $0x178] sm:$0xf]
    %v2425 = vld [vmem:[%s3 + $0x17c] sm:$0xf]
    %v2426 = vld [vmem:[%s3 + $0x180] sm:$0xf]
    %v2427 = vld [vmem:[%s3 + $0x184] sm:$0xf]
    %v2428 = vld [vmem:[%s3 + $0x188] sm:$0xf]
    %v2429 = vld [vmem:[%s3 + $0x18c] sm:$0xf]
    %v2430 = vld [vmem:[%s3 + $0x190] sm:$0xf]
    %v2431 = vld [vmem:[%s3 + $0x194] sm:$0xf]
    %v2432 = vld [vmem:[%s3 + $0x198] sm:$0xf]
    %v2433 = vld [vmem:[%s3 + $0x19c] sm:$0xf]
    %v2434 = vld [vmem:[%s3 + $0x1a0] sm:$0xf]
    %v2435 = vld [vmem:[%s3 + $0x1a4] sm:$0xf]
    %v2436 = vld [vmem:[%s3 + $0x1a8] sm:$0xf]
    %v2437 = vld [vmem:[%s3 + $0x1ac] sm:$0xf]
    %v2438 = vld [vmem:[%s3 + $0x1b0] sm:$0xf]
    %v2439 = vld [vmem:[%s3 + $0x1b4] sm:$0xf]
    %v2440 = vld [vmem:[%s3 + $0x1b8] sm:$0xf]
    %v2441 = vld [vmem:[%s3 + $0x1bc] sm:$0xf]
    %v2442 = vld [vmem:[%s3 + $0x1c0] sm:$0xf]
    %v2443 = vld [vmem:[%s3 + $0x1c4] sm:$0xf]
    %v2444 = vld [vmem:[%s3 + $0x1c8] sm:$0xf]
    %v2445 = vld [vmem:[%s3 + $0x1cc] sm:$0xf]
    %v2446 = vld [vmem:[%s3 + $0x1d0] sm:$0xf]
    %v2447 = vld [vmem:[%s3 + $0x1d4] sm:$0xf]
    %v2448 = vld [vmem:[%s3 + $0x1d8] sm:$0xf]
    %v2449 = vld [vmem:[%s3 + $0x1dc] sm:$0xf]
    %v2450 = vld [vmem:[%s3 + $0x1e0] sm:$0xf]
    %v2451 = vld [vmem:[%s3 + $0x1e4] sm:$0xf]
    %v2452 = vld [vmem:[%s3 + $0x1e8] sm:$0xf]
    %v2453 = vld [vmem:[%s3 + $0x1ec] sm:$0xf]
    %v2454 = vld [vmem:[%s3 + $0x1f0] sm:$0xf]
    %v2455 = vld [vmem:[%s3 + $0x1f4] sm:$0xf]
    %v2456 = vld [vmem:[%s3 + $0x1f8] sm:$0xf]
    %v2457 = vld [vmem:[%s3 + $0x1fc] sm:$0xf]
    %v2586 = vunpack.c.l.b16 %v2330
    %v2587 = vunpack.c.l.b16 %v2331
    %v2588 = vunpack.c.l.b16 %v2332
    %v2589 = vunpack.c.l.b16 %v2333
    %v2590 = vunpack.c.l.b16 %v2334
    %v2591 = vunpack.c.l.b16 %v2335
    %v2592 = vunpack.c.l.b16 %v2336
    %v2593 = vunpack.c.l.b16 %v2337
    %v2594 = vunpack.c.l.b16 %v2338
    %v2595 = vunpack.c.l.b16 %v2339
    %v2596 = vunpack.c.l.b16 %v2340
    %v2597 = vunpack.c.l.b16 %v2341
    %v2598 = vunpack.c.l.b16 %v2342
    %v2599 = vunpack.c.l.b16 %v2343
    %v2600 = vunpack.c.l.b16 %v2344
    %v2601 = vunpack.c.l.b16 %v2345
    %v2602 = vunpack.c.l.b16 %v2346
    %v2603 = vunpack.c.l.b16 %v2347
    %v2604 = vunpack.c.l.b16 %v2348
    %v2605 = vunpack.c.l.b16 %v2349
    %v2606 = vunpack.c.l.b16 %v2350
    %v2607 = vunpack.c.l.b16 %v2351
    %v2608 = vunpack.c.l.b16 %v2352
    %v2609 = vunpack.c.l.b16 %v2353
    %v2610 = vunpack.c.l.b16 %v2354
    %v2611 = vunpack.c.l.b16 %v2355
    %v2612 = vunpack.c.l.b16 %v2356
    %v2613 = vunpack.c.l.b16 %v2357
    %v2614 = vunpack.c.l.b16 %v2358
    %v2615 = vunpack.c.l.b16 %v2359
    %v2616 = vunpack.c.l.b16 %v2360
    %v2617 = vunpack.c.l.b16 %v2361
    %v2618 = vunpack.c.l.b16 %v2362
    %v2619 = vunpack.c.l.b16 %v2363
    %v2620 = vunpack.c.l.b16 %v2364
    %v2621 = vunpack.c.l.b16 %v2365
    %v2622 = vunpack.c.l.b16 %v2366
    %v2623 = vunpack.c.l.b16 %v2367
    %v2624 = vunpack.c.l.b16 %v2368
    %v2625 = vunpack.c.l.b16 %v2369
    %v2626 = vunpack.c.l.b16 %v2370
    %v2627 = vunpack.c.l.b16 %v2371
    %v2628 = vunpack.c.l.b16 %v2372
    %v2629 = vunpack.c.l.b16 %v2373
    %v2630 = vunpack.c.l.b16 %v2374
    %v2631 = vunpack.c.l.b16 %v2375
    %v2632 = vunpack.c.l.b16 %v2376
    %v2633 = vunpack.c.l.b16 %v2377
    %v2634 = vunpack.c.l.b16 %v2378
    %v2635 = vunpack.c.l.b16 %v2379
    %v2636 = vunpack.c.l.b16 %v2380
    %v2637 = vunpack.c.l.b16 %v2381
    %v2638 = vunpack.c.l.b16 %v2382
    %v2639 = vunpack.c.l.b16 %v2383
    %v2640 = vunpack.c.l.b16 %v2384
    %v2641 = vunpack.c.l.b16 %v2385
    %v2642 = vunpack.c.l.b16 %v2386
    %v2643 = vunpack.c.l.b16 %v2387
    %v2644 = vunpack.c.l.b16 %v2388
    %v2645 = vunpack.c.l.b16 %v2389
    %v2646 = vunpack.c.l.b16 %v2390
    %v2647 = vunpack.c.l.b16 %v2391
    %v2648 = vunpack.c.l.b16 %v2392
    %v2649 = vunpack.c.l.b16 %v2393
    %v2650 = vunpack.c.l.b16 %v2394
    %v2651 = vunpack.c.l.b16 %v2395
    %v2652 = vunpack.c.l.b16 %v2396
    %v2653 = vunpack.c.l.b16 %v2397
    %v2654 = vunpack.c.l.b16 %v2398
    %v2655 = vunpack.c.l.b16 %v2399
    %v2656 = vunpack.c.l.b16 %v2400
    %v2657 = vunpack.c.l.b16 %v2401
    %v2658 = vunpack.c.l.b16 %v2402
    %v2659 = vunpack.c.l.b16 %v2403
    %v2660 = vunpack.c.l.b16 %v2404
    %v2661 = vunpack.c.l.b16 %v2405
    %v2662 = vunpack.c.l.b16 %v2406
    %v2663 = vunpack.c.l.b16 %v2407
    %v2664 = vunpack.c.l.b16 %v2408
    %v2665 = vunpack.c.l.b16 %v2409
    %v2666 = vunpack.c.l.b16 %v2410
    %v2667 = vunpack.c.l.b16 %v2411
    %v2668 = vunpack.c.l.b16 %v2412
    %v2669 = vunpack.c.l.b16 %v2413
    %v2670 = vunpack.c.l.b16 %v2414
    %v2671 = vunpack.c.l.b16 %v2415
    %v2672 = vunpack.c.l.b16 %v2416
    %v2673 = vunpack.c.l.b16 %v2417
    %v2674 = vunpack.c.l.b16 %v2418
    %v2675 = vunpack.c.l.b16 %v2419
    %v2676 = vunpack.c.l.b16 %v2420
    %v2677 = vunpack.c.l.b16 %v2421
    %v2678 = vunpack.c.l.b16 %v2422
    %v2679 = vunpack.c.l.b16 %v2423
    %v2680 = vunpack.c.l.b16 %v2424
    %v2681 = vunpack.c.l.b16 %v2425
    %v2682 = vunpack.c.l.b16 %v2426
    %v2683 = vunpack.c.l.b16 %v2427
    %v2684 = vunpack.c.l.b16 %v2428
    %v2685 = vunpack.c.l.b16 %v2429
    %v2686 = vunpack.c.l.b16 %v2430
    %v2687 = vunpack.c.l.b16 %v2431
    %v2688 = vunpack.c.l.b16 %v2432
    %v2689 = vunpack.c.l.b16 %v2433
    %v2690 = vunpack.c.l.b16 %v2434
    %v2691 = vunpack.c.l.b16 %v2435
    %v2692 = vunpack.c.l.b16 %v2436
    %v2693 = vunpack.c.l.b16 %v2437
    %v2694 = vunpack.c.l.b16 %v2438
    %v2695 = vunpack.c.l.b16 %v2439
    %v2696 = vunpack.c.l.b16 %v2440
    %v2697 = vunpack.c.l.b16 %v2441
    %v2698 = vunpack.c.l.b16 %v2442
    %v2699 = vunpack.c.l.b16 %v2443
    %v2700 = vunpack.c.l.b16 %v2444
    %v2701 = vunpack.c.l.b16 %v2445
    %v2702 = vunpack.c.l.b16 %v2446
    %v2703 = vunpack.c.l.b16 %v2447
    %v2704 = vunpack.c.l.b16 %v2448
    %v2705 = vunpack.c.l.b16 %v2449
    %v2706 = vunpack.c.l.b16 %v2450
    %v2707 = vunpack.c.l.b16 %v2451
    %v2708 = vunpack.c.l.b16 %v2452
    %v2709 = vunpack.c.l.b16 %v2453
    %v2710 = vunpack.c.l.b16 %v2454
    %v2711 = vunpack.c.l.b16 %v2455
    %v2712 = vunpack.c.l.b16 %v2456
    %v2713 = vunpack.c.l.b16 %v2457
    %v2714 = vpack.c.b16 %v2587, %v2586
    %v2715 = vpack.c.b16 %v2589, %v2588
    %v2716 = vpack.c.b16 %v2591, %v2590
    %v2717 = vpack.c.b16 %v2593, %v2592
    %v2718 = vpack.c.b16 %v2595, %v2594
    %v2719 = vpack.c.b16 %v2597, %v2596
    %v2720 = vpack.c.b16 %v2599, %v2598
    %v2721 = vpack.c.b16 %v2601, %v2600
    %v2722 = vpack.c.b16 %v2603, %v2602
    %v2723 = vpack.c.b16 %v2605, %v2604
    %v2724 = vpack.c.b16 %v2607, %v2606
    %v2725 = vpack.c.b16 %v2609, %v2608
    %v2726 = vpack.c.b16 %v2611, %v2610
    %v2727 = vpack.c.b16 %v2613, %v2612
    %v2728 = vpack.c.b16 %v2615, %v2614
    %v2729 = vpack.c.b16 %v2617, %v2616
    %v2730 = vpack.c.b16 %v2619, %v2618
    %v2731 = vpack.c.b16 %v2621, %v2620
    %v2732 = vpack.c.b16 %v2623, %v2622
    %v2733 = vpack.c.b16 %v2625, %v2624
    %v2734 = vpack.c.b16 %v2627, %v2626
    %v2735 = vpack.c.b16 %v2629, %v2628
    %v2736 = vpack.c.b16 %v2631, %v2630
    %v2737 = vpack.c.b16 %v2633, %v2632
    %v2738 = vpack.c.b16 %v2635, %v2634
    %v2739 = vpack.c.b16 %v2637, %v2636
    %v2740 = vpack.c.b16 %v2639, %v2638
    %v2741 = vpack.c.b16 %v2641, %v2640
    %v2742 = vpack.c.b16 %v2643, %v2642
    %v2743 = vpack.c.b16 %v2645, %v2644
    %v2744 = vpack.c.b16 %v2647, %v2646
    %v2745 = vpack.c.b16 %v2649, %v2648
    %v2746 = vpack.c.b16 %v2651, %v2650
    %v2747 = vpack.c.b16 %v2653, %v2652
    %v2748 = vpack.c.b16 %v2655, %v2654
    %v2749 = vpack.c.b16 %v2657, %v2656
    %v2750 = vpack.c.b16 %v2659, %v2658
    %v2751 = vpack.c.b16 %v2661, %v2660
    %v2752 = vpack.c.b16 %v2663, %v2662
    %v2753 = vpack.c.b16 %v2665, %v2664
    %v2754 = vpack.c.b16 %v2667, %v2666
    %v2755 = vpack.c.b16 %v2669, %v2668
    %v2756 = vpack.c.b16 %v2671, %v2670
    %v2757 = vpack.c.b16 %v2673, %v2672
    %v2758 = vpack.c.b16 %v2675, %v2674
    %v2759 = vpack.c.b16 %v2677, %v2676
    %v2760 = vpack.c.b16 %v2679, %v2678
    %v2761 = vpack.c.b16 %v2681, %v2680
    %v2762 = vpack.c.b16 %v2683, %v2682
    %v2763 = vpack.c.b16 %v2685, %v2684
    %v2764 = vpack.c.b16 %v2687, %v2686
    %v2765 = vpack.c.b16 %v2689, %v2688
    %v2766 = vpack.c.b16 %v2691, %v2690
    %v2767 = vpack.c.b16 %v2693, %v2692
    %v2768 = vpack.c.b16 %v2695, %v2694
    %v2769 = vpack.c.b16 %v2697, %v2696
    %v2770 = vpack.c.b16 %v2699, %v2698
    %v2771 = vpack.c.b16 %v2701, %v2700
    %v2772 = vpack.c.b16 %v2703, %v2702
    %v2773 = vpack.c.b16 %v2705, %v2704
    %v2774 = vpack.c.b16 %v2707, %v2706
    %v2775 = vpack.c.b16 %v2709, %v2708
    %v2776 = vpack.c.b16 %v2711, %v2710
    %v2777 = vpack.c.b16 %v2713, %v2712
    %2842 = vmatprep.subr.bf16.mxu0 0
    %2843 = vmatpush1.bf16.msra.mxu0 %v2714
    %2844 = vmatprep.subr.bf16.mxu0 0
    %2845 = vmatpush1.bf16.msra.mxu0 %v2715
    %2846 = vmatprep.subr.bf16.mxu0 0
    %2847 = vmatpush1.bf16.msra.mxu0 %v2716
    %2848 = vmatprep.subr.bf16.mxu0 0
    %2849 = vmatpush1.bf16.msra.mxu0 %v2717
    %2850 = vmatprep.subr.bf16.mxu0 0
    %2851 = vmatpush1.bf16.msra.mxu0 %v2718
    %2852 = vmatprep.subr.bf16.mxu0 0
    %2853 = vmatpush1.bf16.msra.mxu0 %v2719
    %2854 = vmatprep.subr.bf16.mxu0 0
    %2855 = vmatpush1.bf16.msra.mxu0 %v2720
    %2856 = vmatprep.subr.bf16.mxu0 0
    %2857 = vmatpush1.bf16.msra.mxu0 %v2721
    %2858 = vmatprep.subr.bf16.mxu0 0
    %2859 = vmatpush1.bf16.msra.mxu0 %v2722
    %2860 = vmatprep.subr.bf16.mxu0 0
    %2861 = vmatpush1.bf16.msra.mxu0 %v2723
    %2862 = vmatprep.subr.bf16.mxu0 0
    %2863 = vmatpush1.bf16.msra.mxu0 %v2724
    %2864 = vmatprep.subr.bf16.mxu0 0
    %2865 = vmatpush1.bf16.msra.mxu0 %v2725
    %2866 = vmatprep.subr.bf16.mxu0 0
    %2867 = vmatpush1.bf16.msra.mxu0 %v2726
    %2868 = vmatprep.subr.bf16.mxu0 0
    %2869 = vmatpush1.bf16.msra.mxu0 %v2727
    %2870 = vmatprep.subr.bf16.mxu0 0
    %2871 = vmatpush1.bf16.msra.mxu0 %v2728
    %2872 = vmatprep.subr.bf16.mxu0 0
    %2873 = vmatpush1.bf16.msra.mxu0 %v2729
    %2874 = vmatprep.mubr.bf16.mxu0 %v2323
    %2875 = vmatmul.mubr.bf16.gmra.mrb[0].mxu0 %v2322
    %v2876 = vpop.f32.mrb[0].mxu0
    %v2877 = vadd.f32 0.0, %v2876
    %v2878 = vpop.f32.mrb[0].mxu0
    %v2879 = vpop.f32.mrb[0].mxu0
    %v2880 = vpop.f32.mrb[0].mxu0
    %2881 = vdwg.mxu0
    %2882 = vmatprep.subr.bf16.mxu0 0
    %2883 = vmatpush1.bf16.msra.mxu0 %v2730
    %2884 = vmatprep.subr.bf16.mxu0 0
    %2885 = vmatpush1.bf16.msra.mxu0 %v2731
    %2886 = vmatprep.subr.bf16.mxu0 0
    %2887 = vmatpush1.bf16.msra.mxu0 %v2732
    %2888 = vmatprep.subr.bf16.mxu0 0
    %2889 = vmatpush1.bf16.msra.mxu0 %v2733
    %2890 = vmatprep.subr.bf16.mxu0 0
    %2891 = vmatpush1.bf16.msra.mxu0 %v2734
    %2892 = vmatprep.subr.bf16.mxu0 0
    %2893 = vmatpush1.bf16.msra.mxu0 %v2735
    %2894 = vmatprep.subr.bf16.mxu0 0
    %2895 = vmatpush1.bf16.msra.mxu0 %v2736
    %2896 = vmatprep.subr.bf16.mxu0 0
    %2897 = vmatpush1.bf16.msra.mxu0 %v2737
    %2898 = vmatprep.subr.bf16.mxu0 0
    %2899 = vmatpush1.bf16.msra.mxu0 %v2738
    %2900 = vmatprep.subr.bf16.mxu0 0
    %2901 = vmatpush1.bf16.msra.mxu0 %v2739
    %2902 = vmatprep.subr.bf16.mxu0 0
    %2903 = vmatpush1.bf16.msra.mxu0 %v2740
    %2904 = vmatprep.subr.bf16.mxu0 0
    %2905 = vmatpush1.bf16.msra.mxu0 %v2741
    %2906 = vmatprep.subr.bf16.mxu0 0
    %2907 = vmatpush1.bf16.msra.mxu0 %v2742
    %2908 = vmatprep.subr.bf16.mxu0 0
    %2909 = vmatpush1.bf16.msra.mxu0 %v2743
    %2910 = vmatprep.subr.bf16.mxu0 0
    %2911 = vmatpush1.bf16.msra.mxu0 %v2744
    %2912 = vmatprep.subr.bf16.mxu0 0
    %2913 = vmatpush1.bf16.msra.mxu0 %v2745
    %2914 = vmatprep.mubr.bf16.mxu0 %v2325
    %2915 = vmatmul.mubr.bf16.gmra.mrb[0].mxu0 %v2324
    %v2916 = vpop.f32.mrb[0].mxu0
    %v2917 = vadd.f32 %v2877, %v2916
    %v2918 = vpop.f32.mrb[0].mxu0
    %v2919 = vpop.f32.mrb[0].mxu0
    %v2920 = vpop.f32.mrb[0].mxu0
    %2921 = vdwg.mxu0
    %2922 = vmatprep.subr.bf16.mxu0 0
    %2923 = vmatpush1.bf16.msra.mxu0 %v2746
    %2924 = vmatprep.subr.bf16.mxu0 0
    %2925 = vmatpush1.bf16.msra.mxu0 %v2747
    %2926 = vmatprep.subr.bf16.mxu0 0
    %2927 = vmatpush1.bf16.msra.mxu0 %v2748
    %2928 = vmatprep.subr.bf16.mxu0 0
    %2929 = vmatpush1.bf16.msra.mxu0 %v2749
    %2930 = vmatprep.subr.bf16.mxu0 0
    %2931 = vmatpush1.bf16.msra.mxu0 %v2750
    %2932 = vmatprep.subr.bf16.mxu0 0
    %2933 = vmatpush1.bf16.msra.mxu0 %v2751
    %2934 = vmatprep.subr.bf16.mxu0 0
    %2935 = vmatpush1.bf16.msra.mxu0 %v2752
    %2936 = vmatprep.subr.bf16.mxu0 0
    %2937 = vmatpush1.bf16.msra.mxu0 %v2753
    %2938 = vmatprep.subr.bf16.mxu0 0
    %2939 = vmatpush1.bf16.msra.mxu0 %v2754
    %2940 = vmatprep.subr.bf16.mxu0 0
    %2941 = vmatpush1.bf16.msra.mxu0 %v2755
    %2942 = vmatprep.subr.bf16.mxu0 0
    %2943 = vmatpush1.bf16.msra.mxu0 %v2756
    %2944 = vmatprep.subr.bf16.mxu0 0
    %2945 = vmatpush1.bf16.msra.mxu0 %v2757
    %2946 = vmatprep.subr.bf16.mxu0 0
    %2947 = vmatpush1.bf16.msra.mxu0 %v2758
    %2948 = vmatprep.subr.bf16.mxu0 0
    %2949 = vmatpush1.bf16.msra.mxu0 %v2759
    %2950 = vmatprep.subr.bf16.mxu0 0
    %2951 = vmatpush1.bf16.msra.mxu0 %v2760
    %2952 = vmatprep.subr.bf16.mxu0 0
    %2953 = vmatpush1.bf16.msra.mxu0 %v2761
    %2954 = vmatprep.mubr.bf16.mxu0 %v2327
    %2955 = vmatmul.mubr.bf16.gmra.mrb[0].mxu0 %v2326
    %v2956 = vpop.f32.mrb[0].mxu0
    %v2957 = vadd.f32 %v2917, %v2956
    %v2958 = vpop.f32.mrb[0].mxu0
    %v2959 = vpop.f32.mrb[0].mxu0
    %v2960 = vpop.f32.mrb[0].mxu0
    %2961 = vdwg.mxu0
    %2962 = vmatprep.subr.bf16.mxu0 0
    %2963 = vmatpush1.bf16.msra.mxu0 %v2762
    %2964 = vmatprep.subr.bf16.mxu0 0
    %2965 = vmatpush1.bf16.msra.mxu0 %v2763
    %2966 = vmatprep.subr.bf16.mxu0 0
    %2967 = vmatpush1.bf16.msra.mxu0 %v2764
    %2968 = vmatprep.subr.bf16.mxu0 0
    %2969 = vmatpush1.bf16.msra.mxu0 %v2765
    %2970 = vmatprep.subr.bf16.mxu0 0
    %2971 = vmatpush1.bf16.msra.mxu0 %v2766
    %2972 = vmatprep.subr.bf16.mxu0 0
    %2973 = vmatpush1.bf16.msra.mxu0 %v2767
    %2974 = vmatprep.subr.bf16.mxu0 0
    %2975 = vmatpush1.bf16.msra.mxu0 %v2768
    %2976 = vmatprep.subr.bf16.mxu0 0
    %2977 = vmatpush1.bf16.msra.mxu0 %v2769
    %2978 = vmatprep.subr.bf16.mxu0 0
    %2979 = vmatpush1.bf16.msra.mxu0 %v2770
    %2980 = vmatprep.subr.bf16.mxu0 0
    %2981 = vmatpush1.bf16.msra.mxu0 %v2771
    %2982 = vmatprep.subr.bf16.mxu0 0
    %2983 = vmatpush1.bf16.msra.mxu0 %v2772
    %2984 = vmatprep.subr.bf16.mxu0 0
    %2985 = vmatpush1.bf16.msra.mxu0 %v2773
    %2986 = vmatprep.subr.bf16.mxu0 0
    %2987 = vmatpush1.bf16.msra.mxu0 %v2774
    %2988 = vmatprep.subr.bf16.mxu0 0
    %2989 = vmatpush1.bf16.msra.mxu0 %v2775
    %2990 = vmatprep.subr.bf16.mxu0 0
    %2991 = vmatpush1.bf16.msra.mxu0 %v2776
    %2992 = vmatprep.subr.bf16.mxu0 0
    %2993 = vmatpush1.bf16.msra.mxu0 %v2777
    %2994 = vmatprep.mubr.bf16.mxu0 %v2329
    %2995 = vmatmul.mubr.bf16.gmra.mrb[0].mxu0 %v2328
    %v2996 = vpop.f32.mrb[0].mxu0
    %v2997 = vadd.f32 %v2957, %v2996
    %v2998 = vpop.f32.mrb[0].mxu0
    %v2999 = vpop.f32.mrb[0].mxu0
    %v3000 = vpop.f32.mrb[0].mxu0
    %3001 = vdwg.mxu0
    %vm3002 = vcmask 130048
    %v3003 = vsel %vm3002, %v2997, 0.0
    %v3004 = vrot.slane %v3003, 4
    %v3005 = vadd.f32 %v3003, %v3004
    %v3006 = vrot.slane %v3005, 2
    %v3007 = vadd.f32 %v3005, %v3006
    %v3008 = vrot.slane %v3007, 1
    %v3009 = vadd.f32 %v3007, %v3008
    %v3010 = vmul.f32 %v3009, %v425
    %v3011 = vsub.f32 %v2997, %v3010
    %v3012 = vmul.f32 %v3011, %v3011
    %v3013 = vsel %vm3002, %v3012, 0.0
    %v3014 = vrot.slane %v3013, 4
    %v3015 = vadd.f32 %v3013, %v3014
    %v3016 = vrot.slane %v3015, 2
    %v3017 = vadd.f32 %v3015, %v3016
    %v3018 = vrot.slane %v3017, 1
    %v3019 = vadd.f32 %v3017, %v3018
    %v3020 = vmul.f32 %v3019, %v425
    %v3021 = vadd.f32 %v3020, 1e-05
    %v3022 = vrsqrt.pop %v3021
    %v3023 = vmul.f32 %v111, %v3022
    %v3024 = vmul.f32 %v3010, %v3023
    %v3026 = vrot.slane %v3024, 7
    %v3028 = vsub.f32 %v111, %v3026
    %v3029 = vlaneseq
    %v3030 = vshrl.u32 %v3029, 7
    %v3031 = vsub.s32 0, %v3030
    %v3032 = vrot.slane %v3023, %v3031
    %v3033 = vmul.f32 %v2997, %v3032
    %v3034 = vlaneseq
    %v3035 = vshrl.u32 %v3034, 7
    %v3036 = vsub.s32 1, %v3035
    %v3037 = vrot.slane %v3028, %v3036
    %v3038 = vadd.f32 %v3033, %v3037
    %v3039 = vsel %vm3002, %v3038, -inf
    %3040 = vmax.xlane.f32.xlu0 %v3039
    %v3041 = vpop.xlane.xlu0 %3040
    %v3042 = vsub.f32 %v3038, %v3041
    %v3043 = vmul.f32 %v3042, 1.442695
    %v3044 = vpow.pop %v3043
    %v3045 = vsel %vm3002, %v3044, 0.0
    %3046 = vadd.xlane.f32.xlu0 %v3045
    %v3047 = vpop.xlane.xlu0 %3046
    %v3048 = vrcp.pop %v3047
    %v3049 = vmul.f32 %v3044, %v3048
    %3050 = vst.msk [vmem:[#allocation12] sm:$0xff] %vm3002, %v3049
    // Predicated region
    $region38: #{tpu_custom_call.1} parent=1 // pred_check
      _
    $region39: #{tpu_custom_call.1} parent=1 // pred_check_branch
      %3052 = sbr.rel (0) target = $region41
    $region40: #{tpu_custom_call.1} parent=1 // pred_region
      %s3054 = ssub.s32 128, 128
      %3055 = vsyncadd [#allocation6], %s3054
      %s3057 = sshll.u32 [#allocation12], 4
      %s3058 = int_to_ptr.vmem [resolvable:$true] %s3057
      %3060 = dma.vmem_to_hbm [thread:$0]  %s3058, 128, %s6, [#allocation6]
    $region41: #{tpu_custom_call.1} parent=1 // pred_fallthru
      _
    // Predicated region
    $region42: #{tpu_custom_call.1} parent=1 // pred_check
      _
    $region43: #{tpu_custom_call.1} parent=1 // pred_check_branch
      %3062 = sbr.rel (0) target = $region45
    $region44: #{tpu_custom_call.1} parent=1 // pred_region
      %3063 = dma.done [#allocation6], 128
    $region45: #{tpu_custom_call.1} parent=1 // pred_fallthru
      _
    %3064 = vsyncpa [#allocation5], 1
    %3065 = vsyncpa [#allocation8], 1
    %3066 = vsyncpa [#allocation11], 1
    %3067 = vsyncpa [#allocation6], 1
  %3068 = vsyncmov [#allocation3]
  %s3069 = vpop.sfrf %3068
  %p3070 = scmp.eq.s32.totalorder %s3069, 0
  %p3071 = pneg %p3070
  %3073 = shalt.err (%p3071)

</llo_original>
